<compile_context>
chip_gen: v6e
topology: v6e:2x2x1
jax: 0.10.0
libtpu: 0.0.40
codegen_flags: <defaults>
</compile_context>

<pallas_src>
import functools
import jax
import jax.numpy as jnp
from jax import lax
from jax.experimental import pallas as pl
from jax.experimental.pallas import tpu as pltpu


def _round_up(x, m):
    return (x + m - 1) // m * m


# ----------------------------- Pallas kernel ---------------------------------
def _lstm_decoder_kernel(emb_ref, mask_ref, wih_ref, whh_ref, b_ref,
                         wlin_ref, blin_ref, out_ref, h_all_sc, *, T, Hp):
    B_pad = emb_ref.shape[1]

    h = jnp.zeros((B_pad, Hp), jnp.float32)
    c = jnp.zeros((B_pad, Hp), jnp.float32)

    wih = wih_ref[...]        # (E, 4*Hp)   gate-aligned (each gate = one Hp lane block)
    whh = whh_ref[...]        # (Hp, 4*Hp)
    bias = b_ref[...]         # (1, 4*Hp)

    # LSTM recurrence, fully unrolled (T static & small). PyTorch gate order [i,f,g,o].
    for t in range(T):
        x = emb_ref[t]        # (B_pad, E)
        gates = (jnp.dot(x, wih, preferred_element_type=jnp.float32)
                 + jnp.dot(h, whh, preferred_element_type=jnp.float32)
                 + bias)                                   # (B_pad, 4*Hp)
        i = jax.nn.sigmoid(gates[:, 0 * Hp:1 * Hp])
        f = jax.nn.sigmoid(gates[:, 1 * Hp:2 * Hp])
        g = jnp.tanh(gates[:, 2 * Hp:3 * Hp])
        o = jax.nn.sigmoid(gates[:, 3 * Hp:4 * Hp])
        c = f * c + i * g
        h = o * jnp.tanh(c)
        # pack/pad semantics: zero the hidden output at padded timesteps
        h_all_sc[t] = h * mask_ref[t]                      # (B_pad, Hp) * (B_pad, 1)

    # Batched Linear + LogSoftmax over all T*B rows at once (single MXU matmul).
    flat = h_all_sc[...].reshape(T * B_pad, Hp)
    logits = (jnp.dot(flat, wlin_ref[...], preferred_element_type=jnp.float32)
              + blin_ref[...])                             # (T*B_pad, Vp)
    m = jnp.max(logits, axis=-1, keepdims=True)
    lse = m + jnp.log(jnp.sum(jnp.exp(logits - m), axis=-1, keepdims=True))
    out = (logits - lse).reshape(T, B_pad, logits.shape[-1])
    out_ref[...] = out.astype(out_ref.dtype)


# ------------------------------- wrapper --------------------------------------
def lstm_decoder_forward(inputs, lengths, params):
    """inputs: (T, B) int32 token ids (time-major, PyTorch nn.LSTM default);
    lengths: (B,) int32, sorted descending with max(lengths) == T.
    Returns (T, B, V) float32 log-probabilities."""
    T, B = inputs.shape
    E = params["embed"].shape[1]
    H = params["w_hh"].shape[1]        # w_hh is (4H, H)  <-- bug fix (was shape[0])
    V = params["w_lin"].shape[0]       # w_lin is (V, H)

    B_pad = _round_up(max(B, 8), 8)    # full sublane occupancy
    Hp = _round_up(max(H, 128), 128)   # each gate = full lane tile(s)
    Vp = _round_up(max(V, 128), 128)   # lane-dense output stores

    # --- plain-JAX glue: embedding gather, padding mask, weight re-layout ---
    emb = params["embed"][inputs]                                   # (T, B, E)
    emb = jnp.pad(emb, ((0, 0), (0, B_pad - B), (0, 0)))            # (T, B_pad, E)

    lengths_p = jnp.pad(lengths, (0, B_pad - B))                    # padded rows -> 0
    mask = (jnp.arange(T)[:, None] < lengths_p[None, :]
            ).astype(jnp.float32)[..., None]                        # (T, B_pad, 1)

    w_ih = params["w_ih"]              # (4H, E)
    w_hh = params["w_hh"]              # (4H, H)
    b = params["b_ih"] + params["b_hh"]                             # (4H,)

    # Gate-aligned, zero-padded layouts: gate k lives in lanes [k*Hp, k*Hp+H).
    wih_t = jnp.zeros((E, 4 * Hp), jnp.float32)
    whh_t = jnp.zeros((Hp, 4 * Hp), jnp.float32)
    bias = jnp.zeros((1, 4 * Hp), jnp.float32)
    for k in range(4):
        wih_t = wih_t.at[:, k * Hp:k * Hp + H].set(w_ih[k * H:(k + 1) * H, :].T)
        whh_t = whh_t.at[:H, k * Hp:k * Hp + H].set(w_hh[k * H:(k + 1) * H, :].T)
        bias = bias.at[0, k * Hp:k * Hp + H].set(b[k * H:(k + 1) * H])

    wlin_t = jnp.zeros((Hp, Vp), jnp.float32).at[:H, :V].set(params["w_lin"].T)
    # padded vocab columns get a huge negative bias -> excluded from log-softmax
    blin = jnp.full((1, Vp), -1e30, jnp.float32).at[0, :V].set(params["b_lin"])

    kernel = functools.partial(_lstm_decoder_kernel, T=T, Hp=Hp)
    full = lambda shape: pl.BlockSpec(shape, lambda i: (0,) * len(shape))

    grid_spec = pltpu.PrefetchScalarGridSpec(
        num_scalar_prefetch=0,
        grid=(1,),                     # whole sequence in one kernel invocation
        in_specs=[
            full((T, B_pad, E)),       # embeddings
            full((T, B_pad, 1)),       # padding mask
            full((E, 4 * Hp)),         # W_ih^T (gate-aligned)
            full((Hp, 4 * Hp)),        # W_hh^T (gate-aligned)
            full((1, 4 * Hp)),         # b_ih + b_hh
            full((Hp, Vp)),            # W_lin^T
            full((1, Vp)),             # b_lin (padded cols = -1e30)
        ],
        out_specs=full((T, B_pad, Vp)),
        scratch_shapes=[pltpu.VMEM((T, B_pad, Hp), jnp.float32)],   # masked hidden states
    )

    out = pl.pallas_call(
        kernel,
        grid_spec=grid_spec,
        out_shape=jax.ShapeDtypeStruct((T, B_pad, Vp), jnp.float32),
        compiler_params=pltpu.CompilerParams(dimension_semantics=("arbitrary",)),
    )(emb, mask, wih_t, whh_t, bias, wlin_t, blin)

    return out[:, :B, :V]


# --------------------------- pure-JAX reference -------------------------------
def lstm_decoder_reference(inputs, lengths, params):
    T, B = inputs.shape
    H = params["w_hh"].shape[1]
    emb = params["embed"][inputs]
    mask = (jnp.arange(T)[:, None] < lengths[None, :]).astype(jnp.float32)[..., None]

    def step(carry, x):
        h, c = carry
        gates = x @ params["w_ih"].T + h @ params["w_hh"].T + params["b_ih"] + params["b_hh"]
        i, f, g, o = jnp.split(gates, 4, axis=-1)
        c = jax.nn.sigmoid(f) * c + jax.nn.sigmoid(i) * jnp.tanh(g)
        h = jax.nn.sigmoid(o) * jnp.tanh(c)
        return (h, c), h

    h0 = jnp.zeros((B, H), jnp.float32)
    _, rec = lax.scan(step, (h0, h0), emb)
    rec = rec * mask                                     # pad_packed zeros
    logits = rec @ params["w_lin"].T + params["b_lin"]
    return jax.nn.log_softmax(logits, axis=-1)


# ---------------------------------- main --------------------------------------
if __name__ == "__main__":
    # small shapes consistent with the module
    VOCAB = 20      # len(vocab) -> in_dim = out_dim
    E = 16          # character_embedding_size
    H = 32          # embedding_size (LSTM hidden dim)
    T, B = 8, 2

    key = jax.random.PRNGKey(0)
    ks = jax.random.split(key, 8)

    embed = 0.1 * jax.random.normal(ks[0], (VOCAB + 1, E), jnp.float32)
    embed = embed.at[VOCAB].set(0.0)   # padding_idx = in_dim

    params = dict(
        embed=embed,
        w_ih=0.1 * jax.random.normal(ks[1], (4 * H, E), jnp.float32),
        w_hh=0.1 * jax.random.normal(ks[2], (4 * H, H), jnp.float32),
        b_ih=0.1 * jax.random.normal(ks[3], (4 * H,), jnp.float32),
        b_hh=0.1 * jax.random.normal(ks[4], (4 * H,), jnp.float32),
        w_lin=0.1 * jax.random.normal(ks[5], (VOCAB, H), jnp.float32),
        b_lin=0.1 * jax.random.normal(ks[6], (VOCAB,), jnp.float32),
    )

    lengths = jnp.array([T, 5], jnp.int32)   # sorted descending, max == T
    tok = jax.random.randint(ks[7], (T, B), 0, VOCAB, jnp.int32)
    pad_mask = jnp.arange(T)[:, None] >= lengths[None, :]
    inputs = jnp.where(pad_mask, VOCAB, tok)  # padded positions use padding_idx

    out = lstm_decoder_forward(inputs, lengths, params)
    out = jax.block_until_ready(out)

    ref = lstm_decoder_reference(inputs, lengths, params)
    assert out.shape == (T, B, VOCAB)
    assert jnp.allclose(out, ref, atol=1e-4, rtol=1e-4), "mismatch vs reference"

    # TODO(synk): persistent self.hidden carry across forward() calls (init_hidden /
    # detach_hidden) is not modeled; h0/c0 are zero-initialized per call.
    print("KERNEL_OK")
</pallas_src>

<mosaic_0001>
module attributes {stable_mosaic.version = 11 : i64} {
  func.func @_lstm_decoder_kernel(%arg0: i32, %arg1: memref<8x8x16xf32, #tpu.memory_space<vmem>>, %arg2: memref<8x8x1xf32, #tpu.memory_space<vmem>>, %arg3: memref<16x512xf32, #tpu.memory_space<vmem>>, %arg4: memref<128x512xf32, #tpu.memory_space<vmem>>, %arg5: memref<1x512xf32, #tpu.memory_space<vmem>>, %arg6: memref<128x128xf32, #tpu.memory_space<vmem>>, %arg7: memref<1x128xf32, #tpu.memory_space<vmem>>, %arg8: memref<8x8x128xf32, #tpu.memory_space<vmem>>, %arg9: memref<8x8x128xf32, #tpu.memory_space<vmem>>) attributes {dimension_semantics = [#tpu.dimension_semantics<arbitrary>], iteration_bounds = array<i64: 1>, scalar_prefetch = 0 : i64, scratch_operands = 1 : i64, tpu.core_type = #tpu.core_type<tc>, window_params = [{pipeline_mode = #tpu.pipeline_mode<synchronous>, transform_indices = @transform_0, window_bounds = array<i64: 8, 8, 16>}, {pipeline_mode = #tpu.pipeline_mode<synchronous>, transform_indices = @transform_1, window_bounds = array<i64: 8, 8, 1>}, {pipeline_mode = #tpu.pipeline_mode<synchronous>, transform_indices = @transform_2, window_bounds = array<i64: 16, 512>}, {pipeline_mode = #tpu.pipeline_mode<synchronous>, transform_indices = @transform_3, window_bounds = array<i64: 128, 512>}, {pipeline_mode = #tpu.pipeline_mode<synchronous>, transform_indices = @transform_4, window_bounds = array<i64: 1, 512>}, {pipeline_mode = #tpu.pipeline_mode<synchronous>, transform_indices = @transform_5, window_bounds = array<i64: 128, 128>}, {pipeline_mode = #tpu.pipeline_mode<synchronous>, transform_indices = @transform_6, window_bounds = array<i64: 1, 128>}, {pipeline_mode = #tpu.pipeline_mode<synchronous>, transform_indices = @transform_7, window_bounds = array<i64: 8, 8, 128>}]} {
    %cst = arith.constant 0.000000e+00 : f32
    %0 = vector.broadcast %cst : f32 to vector<8x128xf32>
    %cst_0 = arith.constant 0.000000e+00 : f32
    %1 = vector.broadcast %cst_0 : f32 to vector<8x128xf32>
    %c0 = arith.constant 0 : index
    %c0_1 = arith.constant 0 : index
    %2 = vector.load %arg3[%c0, %c0_1] : memref<16x512xf32, #tpu.memory_space<vmem>>, vector<16x512xf32>
    %c0_2 = arith.constant 0 : index
    %c0_3 = arith.constant 0 : index
    %3 = vector.load %arg4[%c0_2, %c0_3] : memref<128x512xf32, #tpu.memory_space<vmem>>, vector<128x512xf32>
    %c0_4 = arith.constant 0 : index
    %c0_5 = arith.constant 0 : index
    %4 = vector.load %arg5[%c0_4, %c0_5] : memref<1x512xf32, #tpu.memory_space<vmem>>, vector<1x512xf32>
    %c0_6 = arith.constant 0 : index
    %c0_7 = arith.constant 0 : index
    %c0_8 = arith.constant 0 : index
    %5 = vector.load %arg1[%c0_6, %c0_7, %c0_8] : memref<8x8x16xf32, #tpu.memory_space<vmem>>, vector<1x8x16xf32>
    %6 = vector.shape_cast %5 : vector<1x8x16xf32> to vector<8x16xf32>
    %cst_9 = arith.constant dense<0.000000e+00> : vector<8x512xf32>
    %7 = tpu.matmul %6, %2, %cst_9 {dimension_numbers = #tpu.dot_dimension_numbers<[1], [0], [0], [1], [0, 0, 1, 1], [], []>} : vector<8x16xf32>, vector<16x512xf32>, vector<8x512xf32> -> vector<8x512xf32>
    %cst_10 = arith.constant dense<0.000000e+00> : vector<8x512xf32>
    %8 = tpu.matmul %0, %3, %cst_10 {dimension_numbers = #tpu.dot_dimension_numbers<[1], [0], [0], [1], [0, 0, 1, 1], [], []>} : vector<8x128xf32>, vector<128x512xf32>, vector<8x512xf32> -> vector<8x512xf32>
    %9 = arith.addf %7, %8 : vector<8x512xf32>
    %10 = vector.broadcast %4 : vector<1x512xf32> to vector<8x512xf32>
    %11 = arith.addf %9, %10 : vector<8x512xf32>
    %12 = vector.extract_strided_slice %11 {offsets = [0, 0], sizes = [8, 128], strides = [1, 1]} : vector<8x512xf32> to vector<8x128xf32>
    %13 = arith.negf %12 : vector<8x128xf32>
    %14 = math.exp %13 : vector<8x128xf32>
    %cst_11 = arith.constant 1.000000e+00 : f32
    %15 = vector.broadcast %cst_11 : f32 to vector<8x128xf32>
    %16 = arith.addf %15, %14 : vector<8x128xf32>
    %17 = arith.divf %15, %16 : vector<8x128xf32>
    %18 = vector.extract_strided_slice %11 {offsets = [0, 128], sizes = [8, 128], strides = [1, 1]} : vector<8x512xf32> to vector<8x128xf32>
    %19 = arith.negf %18 : vector<8x128xf32>
    %20 = math.exp %19 : vector<8x128xf32>
    %cst_12 = arith.constant 1.000000e+00 : f32
    %21 = vector.broadcast %cst_12 : f32 to vector<8x128xf32>
    %22 = arith.addf %21, %20 : vector<8x128xf32>
    %23 = arith.divf %21, %22 : vector<8x128xf32>
    %24 = vector.extract_strided_slice %11 {offsets = [0, 256], sizes = [8, 128], strides = [1, 1]} : vector<8x512xf32> to vector<8x128xf32>
    %25 = math.tanh %24 : vector<8x128xf32>
    %26 = vector.extract_strided_slice %11 {offsets = [0, 384], sizes = [8, 128], strides = [1, 1]} : vector<8x512xf32> to vector<8x128xf32>
    %27 = arith.negf %26 : vector<8x128xf32>
    %28 = math.exp %27 : vector<8x128xf32>
    %cst_13 = arith.constant 1.000000e+00 : f32
    %29 = vector.broadcast %cst_13 : f32 to vector<8x128xf32>
    %30 = arith.addf %29, %28 : vector<8x128xf32>
    %31 = arith.divf %29, %30 : vector<8x128xf32>
    %32 = arith.mulf %23, %1 : vector<8x128xf32>
    %33 = arith.mulf %17, %25 : vector<8x128xf32>
    %34 = arith.addf %32, %33 : vector<8x128xf32>
    %35 = math.tanh %34 : vector<8x128xf32>
    %36 = arith.mulf %31, %35 : vector<8x128xf32>
    %c0_14 = arith.constant 0 : index
    %c0_15 = arith.constant 0 : index
    %c0_16 = arith.constant 0 : index
    %37 = vector.load %arg2[%c0_14, %c0_15, %c0_16] : memref<8x8x1xf32, #tpu.memory_space<vmem>>, vector<1x8x1xf32>
    %38 = vector.shape_cast %37 : vector<1x8x1xf32> to vector<8x1xf32>
    %39 = vector.broadcast %38 : vector<8x1xf32> to vector<8x128xf32>
    %40 = arith.mulf %36, %39 : vector<8x128xf32>
    %c0_17 = arith.constant 0 : index
    %c0_18 = arith.constant 0 : index
    %c0_19 = arith.constant 0 : index
    %41 = vector.load %arg9[%c0_17, %c0_18, %c0_19] : memref<8x8x128xf32, #tpu.memory_space<vmem>>, vector<1x8x128xf32>
    %42 = vector.shape_cast %41 : vector<1x8x128xf32> to vector<8x128xf32>
    %43 = vector.shape_cast %40 : vector<8x128xf32> to vector<1x8x128xf32>
    tpu.vector_store %arg9[%c0_17, %c0_18, %c0_19], %43 {strides = array<i32>} : memref<8x8x128xf32, #tpu.memory_space<vmem>>, vector<1x8x128xf32>,
    %c1 = arith.constant 1 : index
    %c0_20 = arith.constant 0 : index
    %c0_21 = arith.constant 0 : index
    %44 = vector.load %arg1[%c1, %c0_20, %c0_21] : memref<8x8x16xf32, #tpu.memory_space<vmem>>, vector<1x8x16xf32>
    %45 = vector.shape_cast %44 : vector<1x8x16xf32> to vector<8x16xf32>
    %cst_22 = arith.constant dense<0.000000e+00> : vector<8x512xf32>
    %46 = tpu.matmul %45, %2, %cst_22 {dimension_numbers = #tpu.dot_dimension_numbers<[1], [0], [0], [1], [0, 0, 1, 1], [], []>} : vector<8x16xf32>, vector<16x512xf32>, vector<8x512xf32> -> vector<8x512xf32>
    %cst_23 = arith.constant dense<0.000000e+00> : vector<8x512xf32>
    %47 = tpu.matmul %36, %3, %cst_23 {dimension_numbers = #tpu.dot_dimension_numbers<[1], [0], [0], [1], [0, 0, 1, 1], [], []>} : vector<8x128xf32>, vector<128x512xf32>, vector<8x512xf32> -> vector<8x512xf32>
    %48 = arith.addf %46, %47 : vector<8x512xf32>
    %49 = vector.broadcast %4 : vector<1x512xf32> to vector<8x512xf32>
    %50 = arith.addf %48, %49 : vector<8x512xf32>
    %51 = vector.extract_strided_slice %50 {offsets = [0, 0], sizes = [8, 128], strides = [1, 1]} : vector<8x512xf32> to vector<8x128xf32>
    %52 = arith.negf %51 : vector<8x128xf32>
    %53 = math.exp %52 : vector<8x128xf32>
    %cst_24 = arith.constant 1.000000e+00 : f32
    %54 = vector.broadcast %cst_24 : f32 to vector<8x128xf32>
    %55 = arith.addf %54, %53 : vector<8x128xf32>
    %56 = arith.divf %54, %55 : vector<8x128xf32>
    %57 = vector.extract_strided_slice %50 {offsets = [0, 128], sizes = [8, 128], strides = [1, 1]} : vector<8x512xf32> to vector<8x128xf32>
    %58 = arith.negf %57 : vector<8x128xf32>
    %59 = math.exp %58 : vector<8x128xf32>
    %cst_25 = arith.constant 1.000000e+00 : f32
    %60 = vector.broadcast %cst_25 : f32 to vector<8x128xf32>
    %61 = arith.addf %60, %59 : vector<8x128xf32>
    %62 = arith.divf %60, %61 : vector<8x128xf32>
    %63 = vector.extract_strided_slice %50 {offsets = [0, 256], sizes = [8, 128], strides = [1, 1]} : vector<8x512xf32> to vector<8x128xf32>
    %64 = math.tanh %63 : vector<8x128xf32>
    %65 = vector.extract_strided_slice %50 {offsets = [0, 384], sizes = [8, 128], strides = [1, 1]} : vector<8x512xf32> to vector<8x128xf32>
    %66 = arith.negf %65 : vector<8x128xf32>
    %67 = math.exp %66 : vector<8x128xf32>
    %cst_26 = arith.constant 1.000000e+00 : f32
    %68 = vector.broadcast %cst_26 : f32 to vector<8x128xf32>
    %69 = arith.addf %68, %67 : vector<8x128xf32>
    %70 = arith.divf %68, %69 : vector<8x128xf32>
    %71 = arith.mulf %62, %34 : vector<8x128xf32>
    %72 = arith.mulf %56, %64 : vector<8x128xf32>
    %73 = arith.addf %71, %72 : vector<8x128xf32>
    %74 = math.tanh %73 : vector<8x128xf32>
    %75 = arith.mulf %70, %74 : vector<8x128xf32>
    %c1_27 = arith.constant 1 : index
    %c0_28 = arith.constant 0 : index
    %c0_29 = arith.constant 0 : index
    %76 = vector.load %arg2[%c1_27, %c0_28, %c0_29] : memref<8x8x1xf32, #tpu.memory_space<vmem>>, vector<1x8x1xf32>
    %77 = vector.shape_cast %76 : vector<1x8x1xf32> to vector<8x1xf32>
    %78 = vector.broadcast %77 : vector<8x1xf32> to vector<8x128xf32>
    %79 = arith.mulf %75, %78 : vector<8x128xf32>
    %c1_30 = arith.constant 1 : index
    %c0_31 = arith.constant 0 : index
    %c0_32 = arith.constant 0 : index
    %80 = vector.load %arg9[%c1_30, %c0_31, %c0_32] : memref<8x8x128xf32, #tpu.memory_space<vmem>>, vector<1x8x128xf32>
    %81 = vector.shape_cast %80 : vector<1x8x128xf32> to vector<8x128xf32>
    %82 = vector.shape_cast %79 : vector<8x128xf32> to vector<1x8x128xf32>
    tpu.vector_store %arg9[%c1_30, %c0_31, %c0_32], %82 {strides = array<i32>} : memref<8x8x128xf32, #tpu.memory_space<vmem>>, vector<1x8x128xf32>,
    %c2 = arith.constant 2 : index
    %c0_33 = arith.constant 0 : index
    %c0_34 = arith.constant 0 : index
    %83 = vector.load %arg1[%c2, %c0_33, %c0_34] : memref<8x8x16xf32, #tpu.memory_space<vmem>>, vector<1x8x16xf32>
    %84 = vector.shape_cast %83 : vector<1x8x16xf32> to vector<8x16xf32>
    %cst_35 = arith.constant dense<0.000000e+00> : vector<8x512xf32>
    %85 = tpu.matmul %84, %2, %cst_35 {dimension_numbers = #tpu.dot_dimension_numbers<[1], [0], [0], [1], [0, 0, 1, 1], [], []>} : vector<8x16xf32>, vector<16x512xf32>, vector<8x512xf32> -> vector<8x512xf32>
    %cst_36 = arith.constant dense<0.000000e+00> : vector<8x512xf32>
    %86 = tpu.matmul %75, %3, %cst_36 {dimension_numbers = #tpu.dot_dimension_numbers<[1], [0], [0], [1], [0, 0, 1, 1], [], []>} : vector<8x128xf32>, vector<128x512xf32>, vector<8x512xf32> -> vector<8x512xf32>
    %87 = arith.addf %85, %86 : vector<8x512xf32>
    %88 = vector.broadcast %4 : vector<1x512xf32> to vector<8x512xf32>
    %89 = arith.addf %87, %88 : vector<8x512xf32>
    %90 = vector.extract_strided_slice %89 {offsets = [0, 0], sizes = [8, 128], strides = [1, 1]} : vector<8x512xf32> to vector<8x128xf32>
    %91 = arith.negf %90 : vector<8x128xf32>
    %92 = math.exp %91 : vector<8x128xf32>
    %cst_37 = arith.constant 1.000000e+00 : f32
    %93 = vector.broadcast %cst_37 : f32 to vector<8x128xf32>
    %94 = arith.addf %93, %92 : vector<8x128xf32>
    %95 = arith.divf %93, %94 : vector<8x128xf32>
    %96 = vector.extract_strided_slice %89 {offsets = [0, 128], sizes = [8, 128], strides = [1, 1]} : vector<8x512xf32> to vector<8x128xf32>
    %97 = arith.negf %96 : vector<8x128xf32>
    %98 = math.exp %97 : vector<8x128xf32>
    %cst_38 = arith.constant 1.000000e+00 : f32
    %99 = vector.broadcast %cst_38 : f32 to vector<8x128xf32>
    %100 = arith.addf %99, %98 : vector<8x128xf32>
    %101 = arith.divf %99, %100 : vector<8x128xf32>
    %102 = vector.extract_strided_slice %89 {offsets = [0, 256], sizes = [8, 128], strides = [1, 1]} : vector<8x512xf32> to vector<8x128xf32>
    %103 = math.tanh %102 : vector<8x128xf32>
    %104 = vector.extract_strided_slice %89 {offsets = [0, 384], sizes = [8, 128], strides = [1, 1]} : vector<8x512xf32> to vector<8x128xf32>
    %105 = arith.negf %104 : vector<8x128xf32>
    %106 = math.exp %105 : vector<8x128xf32>
    %cst_39 = arith.constant 1.000000e+00 : f32
    %107 = vector.broadcast %cst_39 : f32 to vector<8x128xf32>
    %108 = arith.addf %107, %106 : vector<8x128xf32>
    %109 = arith.divf %107, %108 : vector<8x128xf32>
    %110 = arith.mulf %101, %73 : vector<8x128xf32>
    %111 = arith.mulf %95, %103 : vector<8x128xf32>
    %112 = arith.addf %110, %111 : vector<8x128xf32>
    %113 = math.tanh %112 : vector<8x128xf32>
    %114 = arith.mulf %109, %113 : vector<8x128xf32>
    %c2_40 = arith.constant 2 : index
    %c0_41 = arith.constant 0 : index
    %c0_42 = arith.constant 0 : index
    %115 = vector.load %arg2[%c2_40, %c0_41, %c0_42] : memref<8x8x1xf32, #tpu.memory_space<vmem>>, vector<1x8x1xf32>
    %116 = vector.shape_cast %115 : vector<1x8x1xf32> to vector<8x1xf32>
    %117 = vector.broadcast %116 : vector<8x1xf32> to vector<8x128xf32>
    %118 = arith.mulf %114, %117 : vector<8x128xf32>
    %c2_43 = arith.constant 2 : index
    %c0_44 = arith.constant 0 : index
    %c0_45 = arith.constant 0 : index
    %119 = vector.load %arg9[%c2_43, %c0_44, %c0_45] : memref<8x8x128xf32, #tpu.memory_space<vmem>>, vector<1x8x128xf32>
    %120 = vector.shape_cast %119 : vector<1x8x128xf32> to vector<8x128xf32>
    %121 = vector.shape_cast %118 : vector<8x128xf32> to vector<1x8x128xf32>
    tpu.vector_store %arg9[%c2_43, %c0_44, %c0_45], %121 {strides = array<i32>} : memref<8x8x128xf32, #tpu.memory_space<vmem>>, vector<1x8x128xf32>,
    %c3 = arith.constant 3 : index
    %c0_46 = arith.constant 0 : index
    %c0_47 = arith.constant 0 : index
    %122 = vector.load %arg1[%c3, %c0_46, %c0_47] : memref<8x8x16xf32, #tpu.memory_space<vmem>>, vector<1x8x16xf32>
    %123 = vector.shape_cast %122 : vector<1x8x16xf32> to vector<8x16xf32>
    %cst_48 = arith.constant dense<0.000000e+00> : vector<8x512xf32>
    %124 = tpu.matmul %123, %2, %cst_48 {dimension_numbers = #tpu.dot_dimension_numbers<[1], [0], [0], [1], [0, 0, 1, 1], [], []>} : vector<8x16xf32>, vector<16x512xf32>, vector<8x512xf32> -> vector<8x512xf32>
    %cst_49 = arith.constant dense<0.000000e+00> : vector<8x512xf32>
    %125 = tpu.matmul %114, %3, %cst_49 {dimension_numbers = #tpu.dot_dimension_numbers<[1], [0], [0], [1], [0, 0, 1, 1], [], []>} : vector<8x128xf32>, vector<128x512xf32>, vector<8x512xf32> -> vector<8x512xf32>
    %126 = arith.addf %124, %125 : vector<8x512xf32>
    %127 = vector.broadcast %4 : vector<1x512xf32> to vector<8x512xf32>
    %128 = arith.addf %126, %127 : vector<8x512xf32>
    %129 = vector.extract_strided_slice %128 {offsets = [0, 0], sizes = [8, 128], strides = [1, 1]} : vector<8x512xf32> to vector<8x128xf32>
    %130 = arith.negf %129 : vector<8x128xf32>
    %131 = math.exp %130 : vector<8x128xf32>
    %cst_50 = arith.constant 1.000000e+00 : f32
    %132 = vector.broadcast %cst_50 : f32 to vector<8x128xf32>
    %133 = arith.addf %132, %131 : vector<8x128xf32>
    %134 = arith.divf %132, %133 : vector<8x128xf32>
    %135 = vector.extract_strided_slice %128 {offsets = [0, 128], sizes = [8, 128], strides = [1, 1]} : vector<8x512xf32> to vector<8x128xf32>
    %136 = arith.negf %135 : vector<8x128xf32>
    %137 = math.exp %136 : vector<8x128xf32>
    %cst_51 = arith.constant 1.000000e+00 : f32
    %138 = vector.broadcast %cst_51 : f32 to vector<8x128xf32>
    %139 = arith.addf %138, %137 : vector<8x128xf32>
    %140 = arith.divf %138, %139 : vector<8x128xf32>
    %141 = vector.extract_strided_slice %128 {offsets = [0, 256], sizes = [8, 128], strides = [1, 1]} : vector<8x512xf32> to vector<8x128xf32>
    %142 = math.tanh %141 : vector<8x128xf32>
    %143 = vector.extract_strided_slice %128 {offsets = [0, 384], sizes = [8, 128], strides = [1, 1]} : vector<8x512xf32> to vector<8x128xf32>
    %144 = arith.negf %143 : vector<8x128xf32>
    %145 = math.exp %144 : vector<8x128xf32>
    %cst_52 = arith.constant 1.000000e+00 : f32
    %146 = vector.broadcast %cst_52 : f32 to vector<8x128xf32>
    %147 = arith.addf %146, %145 : vector<8x128xf32>
    %148 = arith.divf %146, %147 : vector<8x128xf32>
    %149 = arith.mulf %140, %112 : vector<8x128xf32>
    %150 = arith.mulf %134, %142 : vector<8x128xf32>
    %151 = arith.addf %149, %150 : vector<8x128xf32>
    %152 = math.tanh %151 : vector<8x128xf32>
    %153 = arith.mulf %148, %152 : vector<8x128xf32>
    %c3_53 = arith.constant 3 : index
    %c0_54 = arith.constant 0 : index
    %c0_55 = arith.constant 0 : index
    %154 = vector.load %arg2[%c3_53, %c0_54, %c0_55] : memref<8x8x1xf32, #tpu.memory_space<vmem>>, vector<1x8x1xf32>
    %155 = vector.shape_cast %154 : vector<1x8x1xf32> to vector<8x1xf32>
    %156 = vector.broadcast %155 : vector<8x1xf32> to vector<8x128xf32>
    %157 = arith.mulf %153, %156 : vector<8x128xf32>
    %c3_56 = arith.constant 3 : index
    %c0_57 = arith.constant 0 : index
    %c0_58 = arith.constant 0 : index
    %158 = vector.load %arg9[%c3_56, %c0_57, %c0_58] : memref<8x8x128xf32, #tpu.memory_space<vmem>>, vector<1x8x128xf32>
    %159 = vector.shape_cast %158 : vector<1x8x128xf32> to vector<8x128xf32>
    %160 = vector.shape_cast %157 : vector<8x128xf32> to vector<1x8x128xf32>
    tpu.vector_store %arg9[%c3_56, %c0_57, %c0_58], %160 {strides = array<i32>} : memref<8x8x128xf32, #tpu.memory_space<vmem>>, vector<1x8x128xf32>,
    %c4 = arith.constant 4 : index
    %c0_59 = arith.constant 0 : index
    %c0_60 = arith.constant 0 : index
    %161 = vector.load %arg1[%c4, %c0_59, %c0_60] : memref<8x8x16xf32, #tpu.memory_space<vmem>>, vector<1x8x16xf32>
    %162 = vector.shape_cast %161 : vector<1x8x16xf32> to vector<8x16xf32>
    %cst_61 = arith.constant dense<0.000000e+00> : vector<8x512xf32>
    %163 = tpu.matmul %162, %2, %cst_61 {dimension_numbers = #tpu.dot_dimension_numbers<[1], [0], [0], [1], [0, 0, 1, 1], [], []>} : vector<8x16xf32>, vector<16x512xf32>, vector<8x512xf32> -> vector<8x512xf32>
    %cst_62 = arith.constant dense<0.000000e+00> : vector<8x512xf32>
    %164 = tpu.matmul %153, %3, %cst_62 {dimension_numbers = #tpu.dot_dimension_numbers<[1], [0], [0], [1], [0, 0, 1, 1], [], []>} : vector<8x128xf32>, vector<128x512xf32>, vector<8x512xf32> -> vector<8x512xf32>
    %165 = arith.addf %163, %164 : vector<8x512xf32>
    %166 = vector.broadcast %4 : vector<1x512xf32> to vector<8x512xf32>
    %167 = arith.addf %165, %166 : vector<8x512xf32>
    %168 = vector.extract_strided_slice %167 {offsets = [0, 0], sizes = [8, 128], strides = [1, 1]} : vector<8x512xf32> to vector<8x128xf32>
    %169 = arith.negf %168 : vector<8x128xf32>
    %170 = math.exp %169 : vector<8x128xf32>
    %cst_63 = arith.constant 1.000000e+00 : f32
    %171 = vector.broadcast %cst_63 : f32 to vector<8x128xf32>
    %172 = arith.addf %171, %170 : vector<8x128xf32>
    %173 = arith.divf %171, %172 : vector<8x128xf32>
    %174 = vector.extract_strided_slice %167 {offsets = [0, 128], sizes = [8, 128], strides = [1, 1]} : vector<8x512xf32> to vector<8x128xf32>
    %175 = arith.negf %174 : vector<8x128xf32>
    %176 = math.exp %175 : vector<8x128xf32>
    %cst_64 = arith.constant 1.000000e+00 : f32
    %177 = vector.broadcast %cst_64 : f32 to vector<8x128xf32>
    %178 = arith.addf %177, %176 : vector<8x128xf32>
    %179 = arith.divf %177, %178 : vector<8x128xf32>
    %180 = vector.extract_strided_slice %167 {offsets = [0, 256], sizes = [8, 128], strides = [1, 1]} : vector<8x512xf32> to vector<8x128xf32>
    %181 = math.tanh %180 : vector<8x128xf32>
    %182 = vector.extract_strided_slice %167 {offsets = [0, 384], sizes = [8, 128], strides = [1, 1]} : vector<8x512xf32> to vector<8x128xf32>
    %183 = arith.negf %182 : vector<8x128xf32>
    %184 = math.exp %183 : vector<8x128xf32>
    %cst_65 = arith.constant 1.000000e+00 : f32
    %185 = vector.broadcast %cst_65 : f32 to vector<8x128xf32>
    %186 = arith.addf %185, %184 : vector<8x128xf32>
    %187 = arith.divf %185, %186 : vector<8x128xf32>
    %188 = arith.mulf %179, %151 : vector<8x128xf32>
    %189 = arith.mulf %173, %181 : vector<8x128xf32>
    %190 = arith.addf %188, %189 : vector<8x128xf32>
    %191 = math.tanh %190 : vector<8x128xf32>
    %192 = arith.mulf %187, %191 : vector<8x128xf32>
    %c4_66 = arith.constant 4 : index
    %c0_67 = arith.constant 0 : index
    %c0_68 = arith.constant 0 : index
    %193 = vector.load %arg2[%c4_66, %c0_67, %c0_68] : memref<8x8x1xf32, #tpu.memory_space<vmem>>, vector<1x8x1xf32>
    %194 = vector.shape_cast %193 : vector<1x8x1xf32> to vector<8x1xf32>
    %195 = vector.broadcast %194 : vector<8x1xf32> to vector<8x128xf32>
    %196 = arith.mulf %192, %195 : vector<8x128xf32>
    %c4_69 = arith.constant 4 : index
    %c0_70 = arith.constant 0 : index
    %c0_71 = arith.constant 0 : index
    %197 = vector.load %arg9[%c4_69, %c0_70, %c0_71] : memref<8x8x128xf32, #tpu.memory_space<vmem>>, vector<1x8x128xf32>
    %198 = vector.shape_cast %197 : vector<1x8x128xf32> to vector<8x128xf32>
    %199 = vector.shape_cast %196 : vector<8x128xf32> to vector<1x8x128xf32>
    tpu.vector_store %arg9[%c4_69, %c0_70, %c0_71], %199 {strides = array<i32>} : memref<8x8x128xf32, #tpu.memory_space<vmem>>, vector<1x8x128xf32>,
    %c5 = arith.constant 5 : index
    %c0_72 = arith.constant 0 : index
    %c0_73 = arith.constant 0 : index
    %200 = vector.load %arg1[%c5, %c0_72, %c0_73] : memref<8x8x16xf32, #tpu.memory_space<vmem>>, vector<1x8x16xf32>
    %201 = vector.shape_cast %200 : vector<1x8x16xf32> to vector<8x16xf32>
    %cst_74 = arith.constant dense<0.000000e+00> : vector<8x512xf32>
    %202 = tpu.matmul %201, %2, %cst_74 {dimension_numbers = #tpu.dot_dimension_numbers<[1], [0], [0], [1], [0, 0, 1, 1], [], []>} : vector<8x16xf32>, vector<16x512xf32>, vector<8x512xf32> -> vector<8x512xf32>
    %cst_75 = arith.constant dense<0.000000e+00> : vector<8x512xf32>
    %203 = tpu.matmul %192, %3, %cst_75 {dimension_numbers = #tpu.dot_dimension_numbers<[1], [0], [0], [1], [0, 0, 1, 1], [], []>} : vector<8x128xf32>, vector<128x512xf32>, vector<8x512xf32> -> vector<8x512xf32>
    %204 = arith.addf %202, %203 : vector<8x512xf32>
    %205 = vector.broadcast %4 : vector<1x512xf32> to vector<8x512xf32>
    %206 = arith.addf %204, %205 : vector<8x512xf32>
    %207 = vector.extract_strided_slice %206 {offsets = [0, 0], sizes = [8, 128], strides = [1, 1]} : vector<8x512xf32> to vector<8x128xf32>
    %208 = arith.negf %207 : vector<8x128xf32>
    %209 = math.exp %208 : vector<8x128xf32>
    %cst_76 = arith.constant 1.000000e+00 : f32
    %210 = vector.broadcast %cst_76 : f32 to vector<8x128xf32>
    %211 = arith.addf %210, %209 : vector<8x128xf32>
    %212 = arith.divf %210, %211 : vector<8x128xf32>
    %213 = vector.extract_strided_slice %206 {offsets = [0, 128], sizes = [8, 128], strides = [1, 1]} : vector<8x512xf32> to vector<8x128xf32>
    %214 = arith.negf %213 : vector<8x128xf32>
    %215 = math.exp %214 : vector<8x128xf32>
    %cst_77 = arith.constant 1.000000e+00 : f32
    %216 = vector.broadcast %cst_77 : f32 to vector<8x128xf32>
    %217 = arith.addf %216, %215 : vector<8x128xf32>
    %218 = arith.divf %216, %217 : vector<8x128xf32>
    %219 = vector.extract_strided_slice %206 {offsets = [0, 256], sizes = [8, 128], strides = [1, 1]} : vector<8x512xf32> to vector<8x128xf32>
    %220 = math.tanh %219 : vector<8x128xf32>
    %221 = vector.extract_strided_slice %206 {offsets = [0, 384], sizes = [8, 128], strides = [1, 1]} : vector<8x512xf32> to vector<8x128xf32>
    %222 = arith.negf %221 : vector<8x128xf32>
    %223 = math.exp %222 : vector<8x128xf32>
    %cst_78 = arith.constant 1.000000e+00 : f32
    %224 = vector.broadcast %cst_78 : f32 to vector<8x128xf32>
    %225 = arith.addf %224, %223 : vector<8x128xf32>
    %226 = arith.divf %224, %225 : vector<8x128xf32>
    %227 = arith.mulf %218, %190 : vector<8x128xf32>
    %228 = arith.mulf %212, %220 : vector<8x128xf32>
    %229 = arith.addf %227, %228 : vector<8x128xf32>
    %230 = math.tanh %229 : vector<8x128xf32>
    %231 = arith.mulf %226, %230 : vector<8x128xf32>
    %c5_79 = arith.constant 5 : index
    %c0_80 = arith.constant 0 : index
    %c0_81 = arith.constant 0 : index
    %232 = vector.load %arg2[%c5_79, %c0_80, %c0_81] : memref<8x8x1xf32, #tpu.memory_space<vmem>>, vector<1x8x1xf32>
    %233 = vector.shape_cast %232 : vector<1x8x1xf32> to vector<8x1xf32>
    %234 = vector.broadcast %233 : vector<8x1xf32> to vector<8x128xf32>
    %235 = arith.mulf %231, %234 : vector<8x128xf32>
    %c5_82 = arith.constant 5 : index
    %c0_83 = arith.constant 0 : index
    %c0_84 = arith.constant 0 : index
    %236 = vector.load %arg9[%c5_82, %c0_83, %c0_84] : memref<8x8x128xf32, #tpu.memory_space<vmem>>, vector<1x8x128xf32>
    %237 = vector.shape_cast %236 : vector<1x8x128xf32> to vector<8x128xf32>
    %238 = vector.shape_cast %235 : vector<8x128xf32> to vector<1x8x128xf32>
    tpu.vector_store %arg9[%c5_82, %c0_83, %c0_84], %238 {strides = array<i32>} : memref<8x8x128xf32, #tpu.memory_space<vmem>>, vector<1x8x128xf32>,
    %c6 = arith.constant 6 : index
    %c0_85 = arith.constant 0 : index
    %c0_86 = arith.constant 0 : index
    %239 = vector.load %arg1[%c6, %c0_85, %c0_86] : memref<8x8x16xf32, #tpu.memory_space<vmem>>, vector<1x8x16xf32>
    %240 = vector.shape_cast %239 : vector<1x8x16xf32> to vector<8x16xf32>
    %cst_87 = arith.constant dense<0.000000e+00> : vector<8x512xf32>
    %241 = tpu.matmul %240, %2, %cst_87 {dimension_numbers = #tpu.dot_dimension_numbers<[1], [0], [0], [1], [0, 0, 1, 1], [], []>} : vector<8x16xf32>, vector<16x512xf32>, vector<8x512xf32> -> vector<8x512xf32>
    %cst_88 = arith.constant dense<0.000000e+00> : vector<8x512xf32>
    %242 = tpu.matmul %231, %3, %cst_88 {dimension_numbers = #tpu.dot_dimension_numbers<[1], [0], [0], [1], [0, 0, 1, 1], [], []>} : vector<8x128xf32>, vector<128x512xf32>, vector<8x512xf32> -> vector<8x512xf32>
    %243 = arith.addf %241, %242 : vector<8x512xf32>
    %244 = vector.broadcast %4 : vector<1x512xf32> to vector<8x512xf32>
    %245 = arith.addf %243, %244 : vector<8x512xf32>
    %246 = vector.extract_strided_slice %245 {offsets = [0, 0], sizes = [8, 128], strides = [1, 1]} : vector<8x512xf32> to vector<8x128xf32>
    %247 = arith.negf %246 : vector<8x128xf32>
    %248 = math.exp %247 : vector<8x128xf32>
    %cst_89 = arith.constant 1.000000e+00 : f32
    %249 = vector.broadcast %cst_89 : f32 to vector<8x128xf32>
    %250 = arith.addf %249, %248 : vector<8x128xf32>
    %251 = arith.divf %249, %250 : vector<8x128xf32>
    %252 = vector.extract_strided_slice %245 {offsets = [0, 128], sizes = [8, 128], strides = [1, 1]} : vector<8x512xf32> to vector<8x128xf32>
    %253 = arith.negf %252 : vector<8x128xf32>
    %254 = math.exp %253 : vector<8x128xf32>
    %cst_90 = arith.constant 1.000000e+00 : f32
    %255 = vector.broadcast %cst_90 : f32 to vector<8x128xf32>
    %256 = arith.addf %255, %254 : vector<8x128xf32>
    %257 = arith.divf %255, %256 : vector<8x128xf32>
    %258 = vector.extract_strided_slice %245 {offsets = [0, 256], sizes = [8, 128], strides = [1, 1]} : vector<8x512xf32> to vector<8x128xf32>
    %259 = math.tanh %258 : vector<8x128xf32>
    %260 = vector.extract_strided_slice %245 {offsets = [0, 384], sizes = [8, 128], strides = [1, 1]} : vector<8x512xf32> to vector<8x128xf32>
    %261 = arith.negf %260 : vector<8x128xf32>
    %262 = math.exp %261 : vector<8x128xf32>
    %cst_91 = arith.constant 1.000000e+00 : f32
    %263 = vector.broadcast %cst_91 : f32 to vector<8x128xf32>
    %264 = arith.addf %263, %262 : vector<8x128xf32>
    %265 = arith.divf %263, %264 : vector<8x128xf32>
    %266 = arith.mulf %257, %229 : vector<8x128xf32>
    %267 = arith.mulf %251, %259 : vector<8x128xf32>
    %268 = arith.addf %266, %267 : vector<8x128xf32>
    %269 = math.tanh %268 : vector<8x128xf32>
    %270 = arith.mulf %265, %269 : vector<8x128xf32>
    %c6_92 = arith.constant 6 : index
    %c0_93 = arith.constant 0 : index
    %c0_94 = arith.constant 0 : index
    %271 = vector.load %arg2[%c6_92, %c0_93, %c0_94] : memref<8x8x1xf32, #tpu.memory_space<vmem>>, vector<1x8x1xf32>
    %272 = vector.shape_cast %271 : vector<1x8x1xf32> to vector<8x1xf32>
    %273 = vector.broadcast %272 : vector<8x1xf32> to vector<8x128xf32>
    %274 = arith.mulf %270, %273 : vector<8x128xf32>
    %c6_95 = arith.constant 6 : index
    %c0_96 = arith.constant 0 : index
    %c0_97 = arith.constant 0 : index
    %275 = vector.load %arg9[%c6_95, %c0_96, %c0_97] : memref<8x8x128xf32, #tpu.memory_space<vmem>>, vector<1x8x128xf32>
    %276 = vector.shape_cast %275 : vector<1x8x128xf32> to vector<8x128xf32>
    %277 = vector.shape_cast %274 : vector<8x128xf32> to vector<1x8x128xf32>
    tpu.vector_store %arg9[%c6_95, %c0_96, %c0_97], %277 {strides = array<i32>} : memref<8x8x128xf32, #tpu.memory_space<vmem>>, vector<1x8x128xf32>,
    %c7 = arith.constant 7 : index
    %c0_98 = arith.constant 0 : index
    %c0_99 = arith.constant 0 : index
    %278 = vector.load %arg1[%c7, %c0_98, %c0_99] : memref<8x8x16xf32, #tpu.memory_space<vmem>>, vector<1x8x16xf32>
    %279 = vector.shape_cast %278 : vector<1x8x16xf32> to vector<8x16xf32>
    %cst_100 = arith.constant dense<0.000000e+00> : vector<8x512xf32>
    %280 = tpu.matmul %279, %2, %cst_100 {dimension_numbers = #tpu.dot_dimension_numbers<[1], [0], [0], [1], [0, 0, 1, 1], [], []>} : vector<8x16xf32>, vector<16x512xf32>, vector<8x512xf32> -> vector<8x512xf32>
    %cst_101 = arith.constant dense<0.000000e+00> : vector<8x512xf32>
    %281 = tpu.matmul %270, %3, %cst_101 {dimension_numbers = #tpu.dot_dimension_numbers<[1], [0], [0], [1], [0, 0, 1, 1], [], []>} : vector<8x128xf32>, vector<128x512xf32>, vector<8x512xf32> -> vector<8x512xf32>
    %282 = arith.addf %280, %281 : vector<8x512xf32>
    %283 = vector.broadcast %4 : vector<1x512xf32> to vector<8x512xf32>
    %284 = arith.addf %282, %283 : vector<8x512xf32>
    %285 = vector.extract_strided_slice %284 {offsets = [0, 0], sizes = [8, 128], strides = [1, 1]} : vector<8x512xf32> to vector<8x128xf32>
    %286 = arith.negf %285 : vector<8x128xf32>
    %287 = math.exp %286 : vector<8x128xf32>
    %cst_102 = arith.constant 1.000000e+00 : f32
    %288 = vector.broadcast %cst_102 : f32 to vector<8x128xf32>
    %289 = arith.addf %288, %287 : vector<8x128xf32>
    %290 = arith.divf %288, %289 : vector<8x128xf32>
    %291 = vector.extract_strided_slice %284 {offsets = [0, 128], sizes = [8, 128], strides = [1, 1]} : vector<8x512xf32> to vector<8x128xf32>
    %292 = arith.negf %291 : vector<8x128xf32>
    %293 = math.exp %292 : vector<8x128xf32>
    %cst_103 = arith.constant 1.000000e+00 : f32
    %294 = vector.broadcast %cst_103 : f32 to vector<8x128xf32>
    %295 = arith.addf %294, %293 : vector<8x128xf32>
    %296 = arith.divf %294, %295 : vector<8x128xf32>
    %297 = vector.extract_strided_slice %284 {offsets = [0, 256], sizes = [8, 128], strides = [1, 1]} : vector<8x512xf32> to vector<8x128xf32>
    %298 = math.tanh %297 : vector<8x128xf32>
    %299 = vector.extract_strided_slice %284 {offsets = [0, 384], sizes = [8, 128], strides = [1, 1]} : vector<8x512xf32> to vector<8x128xf32>
    %300 = arith.negf %299 : vector<8x128xf32>
    %301 = math.exp %300 : vector<8x128xf32>
    %cst_104 = arith.constant 1.000000e+00 : f32
    %302 = vector.broadcast %cst_104 : f32 to vector<8x128xf32>
    %303 = arith.addf %302, %301 : vector<8x128xf32>
    %304 = arith.divf %302, %303 : vector<8x128xf32>
    %305 = arith.mulf %296, %268 : vector<8x128xf32>
    %306 = arith.mulf %290, %298 : vector<8x128xf32>
    %307 = arith.addf %305, %306 : vector<8x128xf32>
    %308 = math.tanh %307 : vector<8x128xf32>
    %309 = arith.mulf %304, %308 : vector<8x128xf32>
    %c7_105 = arith.constant 7 : index
    %c0_106 = arith.constant 0 : index
    %c0_107 = arith.constant 0 : index
    %310 = vector.load %arg2[%c7_105, %c0_106, %c0_107] : memref<8x8x1xf32, #tpu.memory_space<vmem>>, vector<1x8x1xf32>
    %311 = vector.shape_cast %310 : vector<1x8x1xf32> to vector<8x1xf32>
    %312 = vector.broadcast %311 : vector<8x1xf32> to vector<8x128xf32>
    %313 = arith.mulf %309, %312 : vector<8x128xf32>
    %c7_108 = arith.constant 7 : index
    %c0_109 = arith.constant 0 : index
    %c0_110 = arith.constant 0 : index
    %314 = vector.load %arg9[%c7_108, %c0_109, %c0_110] : memref<8x8x128xf32, #tpu.memory_space<vmem>>, vector<1x8x128xf32>
    %315 = vector.shape_cast %314 : vector<1x8x128xf32> to vector<8x128xf32>
    %316 = vector.shape_cast %313 : vector<8x128xf32> to vector<1x8x128xf32>
    tpu.vector_store %arg9[%c7_108, %c0_109, %c0_110], %316 {strides = array<i32>} : memref<8x8x128xf32, #tpu.memory_space<vmem>>, vector<1x8x128xf32>,
    %c0_111 = arith.constant 0 : index
    %c0_112 = arith.constant 0 : index
    %c0_113 = arith.constant 0 : index
    %317 = vector.load %arg9[%c0_111, %c0_112, %c0_113] : memref<8x8x128xf32, #tpu.memory_space<vmem>>, vector<8x8x128xf32>
    %318 = vector.shape_cast %317 : vector<8x8x128xf32> to vector<64x128xf32>
    %c0_114 = arith.constant 0 : index
    %c0_115 = arith.constant 0 : index
    %319 = vector.load %arg6[%c0_114, %c0_115] : memref<128x128xf32, #tpu.memory_space<vmem>>, vector<128x128xf32>
    %cst_116 = arith.constant dense<0.000000e+00> : vector<64x128xf32>
    %320 = tpu.matmul %318, %319, %cst_116 {dimension_numbers = #tpu.dot_dimension_numbers<[1], [0], [0], [1], [0, 0, 1, 1], [], []>} : vector<64x128xf32>, vector<128x128xf32>, vector<64x128xf32> -> vector<64x128xf32>
    %c0_117 = arith.constant 0 : index
    %c0_118 = arith.constant 0 : index
    %321 = vector.load %arg7[%c0_117, %c0_118] : memref<1x128xf32, #tpu.memory_space<vmem>>, vector<1x128xf32>
    %322 = vector.broadcast %321 : vector<1x128xf32> to vector<64x128xf32>
    %323 = arith.addf %320, %322 : vector<64x128xf32>
    %cst_119 = arith.constant dense<0xFF800000> : vector<64xf32>
    %324 = vector.multi_reduction <maximumf>, %323, %cst_119 [1] : vector<64x128xf32> to vector<64xf32>
    %325 = vector.shape_cast %324 : vector<64xf32> to vector<64x1xf32>
    %326 = vector.broadcast %325 : vector<64x1xf32> to vector<64x128xf32>
    %327 = arith.subf %323, %326 : vector<64x128xf32>
    %328 = math.exp %327 : vector<64x128xf32>
    %cst_120 = arith.constant dense<0.000000e+00> : vector<64xf32>
    %329 = vector.multi_reduction <add>, %328, %cst_120 [1] : vector<64x128xf32> to vector<64xf32>
    %330 = vector.shape_cast %329 : vector<64xf32> to vector<64x1xf32>
    %331 = math.log %330 : vector<64x1xf32>
    %332 = arith.addf %325, %331 : vector<64x1xf32>
    %333 = vector.broadcast %332 : vector<64x1xf32> to vector<64x128xf32>
    %334 = arith.subf %323, %333 : vector<64x128xf32>
    %335 = vector.shape_cast %334 : vector<64x128xf32> to vector<8x8x128xf32>
    %c0_121 = arith.constant 0 : index
    %c0_122 = arith.constant 0 : index
    %c0_123 = arith.constant 0 : index
    %336 = vector.load %arg8[%c0_121, %c0_122, %c0_123] : memref<8x8x128xf32, #tpu.memory_space<vmem>>, vector<8x8x128xf32>
    tpu.vector_store %arg8[%c0_121, %c0_122, %c0_123], %335 {strides = array<i32>} : memref<8x8x128xf32, #tpu.memory_space<vmem>>, vector<8x8x128xf32>,
    return
  }
  func.func @transform_0(%arg0: i32) -> (i32, i32, i32) {
    %c0_i32 = arith.constant 0 : i32
    %c0_i32_0 = arith.constant 0 : i32
    %c0_i32_1 = arith.constant 0 : i32
    %c0_i32_2 = arith.constant 0 : i32
    return %c0_i32, %c0_i32_0, %c0_i32_1 : i32, i32, i32
  }
  func.func @transform_1(%arg0: i32) -> (i32, i32, i32) {
    %c0_i32 = arith.constant 0 : i32
    %c0_i32_0 = arith.constant 0 : i32
    %c0_i32_1 = arith.constant 0 : i32
    %c0_i32_2 = arith.constant 0 : i32
    return %c0_i32, %c0_i32_0, %c0_i32_1 : i32, i32, i32
  }
  func.func @transform_2(%arg0: i32) -> (i32, i32) {
    %c0_i32 = arith.constant 0 : i32
    %c0_i32_0 = arith.constant 0 : i32
    %c0_i32_1 = arith.constant 0 : i32
    return %c0_i32, %c0_i32_0 : i32, i32
  }
  func.func @transform_3(%arg0: i32) -> (i32, i32) {
    %c0_i32 = arith.constant 0 : i32
    %c0_i32_0 = arith.constant 0 : i32
    %c0_i32_1 = arith.constant 0 : i32
    return %c0_i32, %c0_i32_0 : i32, i32
  }
  func.func @transform_4(%arg0: i32) -> (i32, i32) {
    %c0_i32 = arith.constant 0 : i32
    %c0_i32_0 = arith.constant 0 : i32
    %c0_i32_1 = arith.constant 0 : i32
    return %c0_i32, %c0_i32_0 : i32, i32
  }
  func.func @transform_5(%arg0: i32) -> (i32, i32) {
    %c0_i32 = arith.constant 0 : i32
    %c0_i32_0 = arith.constant 0 : i32
    %c0_i32_1 = arith.constant 0 : i32
    return %c0_i32, %c0_i32_0 : i32, i32
  }
  func.func @transform_6(%arg0: i32) -> (i32, i32) {
    %c0_i32 = arith.constant 0 : i32
    %c0_i32_0 = arith.constant 0 : i32
    %c0_i32_1 = arith.constant 0 : i32
    return %c0_i32, %c0_i32_0 : i32, i32
  }
  func.func @transform_7(%arg0: i32) -> (i32, i32, i32) {
    %c0_i32 = arith.constant 0 : i32
    %c0_i32_0 = arith.constant 0 : i32
    %c0_i32_1 = arith.constant 0 : i32
    %c0_i32_2 = arith.constant 0 : i32
    return %c0_i32, %c0_i32_0, %c0_i32_1 : i32, i32, i32
  }
}

</mosaic_0001>

<llo_original>
// kernel: tpu_custom_call.1
$region0: #{tpu_custom_call.1}
  #allocation0 [shape = 'u32[]', space=smem, size = 0x4, offset = 0x4, fixed_abs, tag = 'smem constant byte address 0x4 - core index']
  #allocation1 [shape = 'u32[144,128]{1,0:T(1,128)}', space=vmem, size = 0x12000, scoped, tag = 'internal scratch']
  #allocation2 [shape = 'f32[8,8,128]{2,1,0:T(8,128)}', space=vmem, size = 0x8000, scoped, tag = 'scratch operand']
  %s0 = inlined_call_operand.vmem [shape: f32[8,8,16], index: 0, kind: input, shape index: {}]
  %s1 = inlined_call_operand.vmem [shape: f32[8,8,1], index: 1, kind: input, shape index: {}]
  %s2 = inlined_call_operand.hbm [shape: f32[16,512], index: 2, kind: input, shape index: {}]
  %s3 = inlined_call_operand.hbm [shape: f32[128,512], index: 3, kind: input, shape index: {}]
  %s4 = inlined_call_operand.vmem [shape: f32[1,512], index: 4, kind: input, shape index: {}]
  %s5 = inlined_call_operand.hbm [shape: f32[128,128], index: 5, kind: input, shape index: {}]
  %s6 = inlined_call_operand.vmem [shape: f32[1,128], index: 6, kind: input, shape index: {}]
  %s7 = inlined_call_operand.hbm [shape: f32[8,8,128], index: 7, kind: output, shape index: {}]
  %s8 = sld [smem:[#allocation0]]
  $region50: #{tpu_custom_call.1} parent=0
    _
  %s10 = ssub.s32 1, %s8
  %s11 = scalar_select 0, %s10, %s8
  $region1: #{tpu_custom_call.1} parent=0
    #allocation3 [shape = 'u8[32768]{0}', space=vmem, size = 0x8000, scoped, tag = 'input window, operand 2, single buffered']
    #allocation4 [shape = 's32[1]{0}', space=sflag, size = 0x4, scoped, tag = 'scoped memory for tpu_custom_call.1']
    #allocation5 [shape = 's32[1]{0}', space=sflag, size = 0x4, scoped, tag = 'scoped memory for tpu_custom_call.1']
    #allocation6 [shape = 'u8[262144]{0}', space=vmem, size = 0x40000, scoped, tag = 'input window, operand 3, single buffered']
    #allocation7 [shape = 's32[1]{0}', space=sflag, size = 0x4, scoped, tag = 'scoped memory for tpu_custom_call.1']
    #allocation8 [shape = 'u8[65536]{0}', space=vmem, size = 0x10000, scoped, tag = 'input window, operand 5, single buffered']
    #allocation9 [shape = 'u8[32768]{0}', space=vmem, size = 0x8000, scoped, tag = 'output window, operand 0, single buffered']
    %12 = vsyncpa [#allocation4], 0
    %13 = vsyncpa [#allocation7], 0
    %14 = vsyncpa [#allocation5], 0
    // Predicated region
    $region2: #{tpu_custom_call.1} parent=1 // pred_check
      _
    $region3: #{tpu_custom_call.1} parent=1 // pred_check_branch
      %16 = sbr.rel (0) target = $region5
    $region4: #{tpu_custom_call.1} parent=1 // pred_region
      _
    $region5: #{tpu_custom_call.1} parent=1 // pred_fallthru
      _
    // Predicated region
    $region6: #{tpu_custom_call.1} parent=1 // pred_check
      _
    $region7: #{tpu_custom_call.1} parent=1 // pred_check_branch
      %18 = sbr.rel (0) target = $region9
    $region8: #{tpu_custom_call.1} parent=1 // pred_region
      _
    $region9: #{tpu_custom_call.1} parent=1 // pred_fallthru
      _
    // Predicated region
    $region10: #{tpu_custom_call.1} parent=1 // pred_check
      _
    $region11: #{tpu_custom_call.1} parent=1 // pred_check_branch
      %20 = sbr.rel (0) target = $region13
    $region12: #{tpu_custom_call.1} parent=1 // pred_region
      %s22 = ssub.s32 1024, 1024
      %23 = vsyncadd [#allocation4], %s22
      %s24 = sshll.u32 [#allocation3], 4
      %s25 = int_to_ptr.vmem [resolvable:$true] %s24
      %30 = dma.hbm_to_vmem [thread:$0]  %s2, 1024, %s25, [#allocation4], 512, 512, 32
    $region13: #{tpu_custom_call.1} parent=1 // pred_fallthru
      _
    // Predicated region
    $region14: #{tpu_custom_call.1} parent=1 // pred_check
      _
    $region15: #{tpu_custom_call.1} parent=1 // pred_check_branch
      %32 = sbr.rel (0) target = $region17
    $region16: #{tpu_custom_call.1} parent=1 // pred_region
      %s34 = ssub.s32 8192, 8192
      %35 = vsyncadd [#allocation7], %s34
      %s36 = sshll.u32 [#allocation6], 4
      %s37 = int_to_ptr.vmem [resolvable:$true] %s36
      %42 = dma.hbm_to_vmem [thread:$0]  %s3, 8192, %s37, [#allocation7], 512, 512, 32
    $region17: #{tpu_custom_call.1} parent=1 // pred_fallthru
      _
    // Predicated region
    $region18: #{tpu_custom_call.1} parent=1 // pred_check
      _
    $region19: #{tpu_custom_call.1} parent=1 // pred_check_branch
      %44 = sbr.rel (0) target = $region21
    $region20: #{tpu_custom_call.1} parent=1 // pred_region
      _
    $region21: #{tpu_custom_call.1} parent=1 // pred_fallthru
      _
    // Predicated region
    $region22: #{tpu_custom_call.1} parent=1 // pred_check
      _
    $region23: #{tpu_custom_call.1} parent=1 // pred_check_branch
      %46 = sbr.rel (0) target = $region25
    $region24: #{tpu_custom_call.1} parent=1 // pred_region
      %s48 = ssub.s32 2048, 2048
      %49 = vsyncadd [#allocation7], %s48
      %s50 = sshll.u32 [#allocation8], 4
      %s51 = int_to_ptr.vmem [resolvable:$true] %s50
      %56 = dma.hbm_to_vmem [thread:$0]  %s5, 2048, %s51, [#allocation7], 128, 128, 8
    $region25: #{tpu_custom_call.1} parent=1 // pred_fallthru
      _
    // Predicated region
    $region26: #{tpu_custom_call.1} parent=1 // pred_check
      _
    $region27: #{tpu_custom_call.1} parent=1 // pred_check_branch
      %58 = sbr.rel (0) target = $region29
    $region28: #{tpu_custom_call.1} parent=1 // pred_region
      _
    $region29: #{tpu_custom_call.1} parent=1 // pred_fallthru
      _
    // Predicated region
    $region30: #{tpu_custom_call.1} parent=1 // pred_check
      _
    $region31: #{tpu_custom_call.1} parent=1 // pred_check_branch
      %60 = sbr.rel (0) target = $region33
    $region32: #{tpu_custom_call.1} parent=1 // pred_region
      %61 = dma.done [#allocation4], 1024
    $region33: #{tpu_custom_call.1} parent=1 // pred_fallthru
      _
    // Predicated region
    $region34: #{tpu_custom_call.1} parent=1 // pred_check
      _
    $region35: #{tpu_custom_call.1} parent=1 // pred_check_branch
      %63 = sbr.rel (0) target = $region37
    $region36: #{tpu_custom_call.1} parent=1 // pred_region
      %64 = dma.done [#allocation7], 8192
    $region37: #{tpu_custom_call.1} parent=1 // pred_fallthru
      _
    // Predicated region
    $region38: #{tpu_custom_call.1} parent=1 // pred_check
      _
    $region39: #{tpu_custom_call.1} parent=1 // pred_check_branch
      %66 = sbr.rel (0) target = $region41
    $region40: #{tpu_custom_call.1} parent=1 // pred_region
      %67 = dma.done [#allocation7], 2048
    $region41: #{tpu_custom_call.1} parent=1 // pred_fallthru
      _
    %v68 = vld [vmem:[#allocation3] sm:$0xff]
    %v69 = vld [vmem:[#allocation3 + $0x8] sm:$0xff]
    %v70 = vld [vmem:[#allocation3 + $0x10] sm:$0xff]
    %v71 = vld [vmem:[#allocation3 + $0x18] sm:$0xff]
    %v72 = vld [vmem:[#allocation3 + $0x20] sm:$0xff]
    %v73 = vld [vmem:[#allocation3 + $0x28] sm:$0xff]
    %v74 = vld [vmem:[#allocation3 + $0x30] sm:$0xff]
    %v75 = vld [vmem:[#allocation3 + $0x38] sm:$0xff]
    %v76 = vld [vmem:[#allocation6] sm:$0xff]
    %v77 = vld [vmem:[#allocation6 + $0x8] sm:$0xff]
    %v78 = vld [vmem:[#allocation6 + $0x10] sm:$0xff]
    %v79 = vld [vmem:[#allocation6 + $0x18] sm:$0xff]
    %v80 = vld [vmem:[#allocation6 + $0x20] sm:$0xff]
    %v81 = vld [vmem:[#allocation6 + $0x28] sm:$0xff]
    %v82 = vld [vmem:[#allocation6 + $0x30] sm:$0xff]
    %v83 = vld [vmem:[#allocation6 + $0x38] sm:$0xff]
    %v84 = vld [vmem:[#allocation6 + $0x40] sm:$0xff]
    %v85 = vld [vmem:[#allocation6 + $0x48] sm:$0xff]
    %v86 = vld [vmem:[#allocation6 + $0x50] sm:$0xff]
    %v87 = vld [vmem:[#allocation6 + $0x58] sm:$0xff]
    %v88 = vld [vmem:[#allocation6 + $0x60] sm:$0xff]
    %v89 = vld [vmem:[#allocation6 + $0x68] sm:$0xff]
    %v90 = vld [vmem:[#allocation6 + $0x70] sm:$0xff]
    %v91 = vld [vmem:[#allocation6 + $0x78] sm:$0xff]
    %v92 = vld [vmem:[#allocation6 + $0x80] sm:$0xff]
    %v93 = vld [vmem:[#allocation6 + $0x88] sm:$0xff]
    %v94 = vld [vmem:[#allocation6 + $0x90] sm:$0xff]
    %v95 = vld [vmem:[#allocation6 + $0x98] sm:$0xff]
    %v96 = vld [vmem:[#allocation6 + $0xa0] sm:$0xff]
    %v97 = vld [vmem:[#allocation6 + $0xa8] sm:$0xff]
    %v98 = vld [vmem:[#allocation6 + $0xb0] sm:$0xff]
    %v99 = vld [vmem:[#allocation6 + $0xb8] sm:$0xff]
    %v100 = vld [vmem:[#allocation6 + $0xc0] sm:$0xff]
    %v101 = vld [vmem:[#allocation6 + $0xc8] sm:$0xff]
    %v102 = vld [vmem:[#allocation6 + $0xd0] sm:$0xff]
    %v103 = vld [vmem:[#allocation6 + $0xd8] sm:$0xff]
    %v104 = vld [vmem:[#allocation6 + $0xe0] sm:$0xff]
    %v105 = vld [vmem:[#allocation6 + $0xe8] sm:$0xff]
    %v106 = vld [vmem:[#allocation6 + $0xf0] sm:$0xff]
    %v107 = vld [vmem:[#allocation6 + $0xf8] sm:$0xff]
    %v108 = vld [vmem:[#allocation6 + $0x100] sm:$0xff]
    %v109 = vld [vmem:[#allocation6 + $0x108] sm:$0xff]
    %v110 = vld [vmem:[#allocation6 + $0x110] sm:$0xff]
    %v111 = vld [vmem:[#allocation6 + $0x118] sm:$0xff]
    %v112 = vld [vmem:[#allocation6 + $0x120] sm:$0xff]
    %v113 = vld [vmem:[#allocation6 + $0x128] sm:$0xff]
    %v114 = vld [vmem:[#allocation6 + $0x130] sm:$0xff]
    %v115 = vld [vmem:[#allocation6 + $0x138] sm:$0xff]
    %v116 = vld [vmem:[#allocation6 + $0x140] sm:$0xff]
    %v117 = vld [vmem:[#allocation6 + $0x148] sm:$0xff]
    %v118 = vld [vmem:[#allocation6 + $0x150] sm:$0xff]
    %v119 = vld [vmem:[#allocation6 + $0x158] sm:$0xff]
    %v120 = vld [vmem:[#allocation6 + $0x160] sm:$0xff]
    %v121 = vld [vmem:[#allocation6 + $0x168] sm:$0xff]
    %v122 = vld [vmem:[#allocation6 + $0x170] sm:$0xff]
    %v123 = vld [vmem:[#allocation6 + $0x178] sm:$0xff]
    %v124 = vld [vmem:[#allocation6 + $0x180] sm:$0xff]
    %v125 = vld [vmem:[#allocation6 + $0x188] sm:$0xff]
    %v126 = vld [vmem:[#allocation6 + $0x190] sm:$0xff]
    %v127 = vld [vmem:[#allocation6 + $0x198] sm:$0xff]
    %v128 = vld [vmem:[#allocation6 + $0x1a0] sm:$0xff]
    %v129 = vld [vmem:[#allocation6 + $0x1a8] sm:$0xff]
    %v130 = vld [vmem:[#allocation6 + $0x1b0] sm:$0xff]
    %v131 = vld [vmem:[#allocation6 + $0x1b8] sm:$0xff]
    %v132 = vld [vmem:[#allocation6 + $0x1c0] sm:$0xff]
    %v133 = vld [vmem:[#allocation6 + $0x1c8] sm:$0xff]
    %v134 = vld [vmem:[#allocation6 + $0x1d0] sm:$0xff]
    %v135 = vld [vmem:[#allocation6 + $0x1d8] sm:$0xff]
    %v136 = vld [vmem:[#allocation6 + $0x1e0] sm:$0xff]
    %v137 = vld [vmem:[#allocation6 + $0x1e8] sm:$0xff]
    %v138 = vld [vmem:[#allocation6 + $0x1f0] sm:$0xff]
    %v139 = vld [vmem:[#allocation6 + $0x1f8] sm:$0xff]
    %v140 = vld [vmem:[%s4] sm:$0xf]
    %v141 = vld [vmem:[%s0] sm:$0xff]
    %142 = vmatprep.subr.mxu0 %v137
    %143 = vmatpush1.msra.mxu0 %v136
    %144 = vmatprep.subr.mxu0 %v133
    %145 = vmatpush1.msra.mxu0 %v132
    %146 = vmatprep.subr.mxu0 %v129
    %147 = vmatpush1.msra.mxu0 %v128
    %148 = vmatprep.subr.mxu0 %v125
    %149 = vmatpush1.msra.mxu0 %v124
    %150 = vmatprep.subr.mxu0 %v121
    %151 = vmatpush1.msra.mxu0 %v120
    %152 = vmatprep.subr.mxu0 %v117
    %153 = vmatpush1.msra.mxu0 %v116
    %154 = vmatprep.subr.mxu0 %v113
    %155 = vmatpush1.msra.mxu0 %v112
    %156 = vmatprep.subr.mxu0 %v109
    %157 = vmatpush1.msra.mxu0 %v108
    %158 = vmatprep.subr.mxu0 %v105
    %159 = vmatpush1.msra.mxu0 %v104
    %160 = vmatprep.subr.mxu0 %v101
    %161 = vmatpush1.msra.mxu0 %v100
    %162 = vmatprep.subr.mxu0 %v97
    %163 = vmatpush1.msra.mxu0 %v96
    %164 = vmatprep.subr.mxu0 %v93
    %165 = vmatpush1.msra.mxu0 %v92
    %166 = vmatprep.subr.mxu0 %v89
    %167 = vmatpush1.msra.mxu0 %v88
    %168 = vmatprep.subr.mxu0 %v85
    %169 = vmatpush1.msra.mxu0 %v84
    %170 = vmatprep.subr.mxu0 %v81
    %171 = vmatpush1.msra.mxu0 %v80
    %172 = vmatprep.subr.mxu0 %v77
    %173 = vmatpush1.msra.mxu0 %v76
    %174 = vmatprep.subr.mxu0 0.0
    %175 = vmatpush2.msra.mxu0 0.0
    %176 = vmatprep.subr.mxu0 0.0
    %177 = vmatpush2.msra.mxu0 0.0
    %178 = vmatprep.subr.mxu0 0.0
    %179 = vmatpush2.msra.mxu0 0.0
    %180 = vmatprep.subr.mxu0 0.0
    %181 = vmatpush2.msra.mxu0 0.0
    %182 = vmatprep.subr.mxu0 0.0
    %183 = vmatpush2.msra.mxu0 0.0
    %184 = vmatprep.subr.mxu0 0.0
    %185 = vmatpush2.msra.mxu0 0.0
    %186 = vmatprep.subr.mxu0 0.0
    %187 = vmatpush2.msra.mxu0 0.0
    %188 = vmatprep.subr.mxu0 0.0
    %189 = vmatpush2.msra.mxu0 0.0
    %190 = vmatprep.subr.mxu0 0.0
    %191 = vmatpush2.msra.mxu0 0.0
    %192 = vmatprep.subr.mxu0 0.0
    %193 = vmatpush2.msra.mxu0 0.0
    %194 = vmatprep.subr.mxu0 0.0
    %195 = vmatpush2.msra.mxu0 0.0
    %196 = vmatprep.subr.mxu0 0.0
    %197 = vmatpush2.msra.mxu0 0.0
    %198 = vmatprep.subr.mxu0 0.0
    %199 = vmatpush2.msra.mxu0 0.0
    %200 = vmatprep.subr.mxu0 0.0
    %201 = vmatpush2.msra.mxu0 0.0
    %202 = vmatprep.subr.mxu0 0.0
    %203 = vmatpush2.msra.mxu0 0.0
    %204 = vmatprep.subr.mxu0 0.0
    %205 = vmatpush2.msra.mxu0 0.0
    %206 = vmatprep.mubr.f32.mxu0 0.0
    %207 = vmatmul.mubr.f32.gmra.mxu0 0.0
    %v208 = vpop.f32.mrf.mxu0
    %v209 = vadd.f32 0.0, %v208
    %v210 = vpop.f32.mrf.mxu0
    %v211 = vadd.f32 0.0, %v210
    %212 = vdwg.mxu0
    %213 = vmatprep.subr.mxu0 %v139
    %214 = vmatpush1.msra.mxu0 %v138
    %215 = vmatprep.subr.mxu0 %v135
    %216 = vmatpush1.msra.mxu0 %v134
    %217 = vmatprep.subr.mxu0 %v131
    %218 = vmatpush1.msra.mxu0 %v130
    %219 = vmatprep.subr.mxu0 %v127
    %220 = vmatpush1.msra.mxu0 %v126
    %221 = vmatprep.subr.mxu0 %v123
    %222 = vmatpush1.msra.mxu0 %v122
    %223 = vmatprep.subr.mxu0 %v119
    %224 = vmatpush1.msra.mxu0 %v118
    %225 = vmatprep.subr.mxu0 %v115
    %226 = vmatpush1.msra.mxu0 %v114
    %227 = vmatprep.subr.mxu0 %v111
    %228 = vmatpush1.msra.mxu0 %v110
    %229 = vmatprep.subr.mxu0 %v107
    %230 = vmatpush1.msra.mxu0 %v106
    %231 = vmatprep.subr.mxu0 %v103
    %232 = vmatpush1.msra.mxu0 %v102
    %233 = vmatprep.subr.mxu0 %v99
    %234 = vmatpush1.msra.mxu0 %v98
    %235 = vmatprep.subr.mxu0 %v95
    %236 = vmatpush1.msra.mxu0 %v94
    %237 = vmatprep.subr.mxu0 %v91
    %238 = vmatpush1.msra.mxu0 %v90
    %239 = vmatprep.subr.mxu0 %v87
    %240 = vmatpush1.msra.mxu0 %v86
    %241 = vmatprep.subr.mxu0 %v83
    %242 = vmatpush1.msra.mxu0 %v82
    %243 = vmatprep.subr.mxu0 %v79
    %244 = vmatpush1.msra.mxu0 %v78
    %245 = vmatprep.subr.mxu0 0.0
    %246 = vmatpush2.msra.mxu0 0.0
    %247 = vmatprep.subr.mxu0 0.0
    %248 = vmatpush2.msra.mxu0 0.0
    %249 = vmatprep.subr.mxu0 0.0
    %250 = vmatpush2.msra.mxu0 0.0
    %251 = vmatprep.subr.mxu0 0.0
    %252 = vmatpush2.msra.mxu0 0.0
    %253 = vmatprep.subr.mxu0 0.0
    %254 = vmatpush2.msra.mxu0 0.0
    %255 = vmatprep.subr.mxu0 0.0
    %256 = vmatpush2.msra.mxu0 0.0
    %257 = vmatprep.subr.mxu0 0.0
    %258 = vmatpush2.msra.mxu0 0.0
    %259 = vmatprep.subr.mxu0 0.0
    %260 = vmatpush2.msra.mxu0 0.0
    %261 = vmatprep.subr.mxu0 0.0
    %262 = vmatpush2.msra.mxu0 0.0
    %263 = vmatprep.subr.mxu0 0.0
    %264 = vmatpush2.msra.mxu0 0.0
    %265 = vmatprep.subr.mxu0 0.0
    %266 = vmatpush2.msra.mxu0 0.0
    %267 = vmatprep.subr.mxu0 0.0
    %268 = vmatpush2.msra.mxu0 0.0
    %269 = vmatprep.subr.mxu0 0.0
    %270 = vmatpush2.msra.mxu0 0.0
    %271 = vmatprep.subr.mxu0 0.0
    %272 = vmatpush2.msra.mxu0 0.0
    %273 = vmatprep.subr.mxu0 0.0
    %274 = vmatpush2.msra.mxu0 0.0
    %275 = vmatprep.subr.mxu0 0.0
    %276 = vmatpush2.msra.mxu0 0.0
    %277 = vmatprep.mubr.f32.mxu0 0.0
    %278 = vmatmul.mubr.f32.gmra.mxu0 0.0
    %v279 = vpop.f32.mrf.mxu0
    %v280 = vadd.f32 0.0, %v279
    %v281 = vpop.f32.mrf.mxu0
    %v282 = vadd.f32 0.0, %v281
    %283 = vdwg.mxu0
    %vm284 = vcmask 130048
    %v286 = vsel %vm284, %v141, 0
    %288 = vmatprep.subr.mxu0 0.0
    %289 = vmatpush1.msra.mxu0 0.0
    %290 = vmatprep.subr.mxu0 0.0
    %291 = vmatpush1.msra.mxu0 0.0
    %292 = vmatprep.subr.mxu0 0.0
    %293 = vmatpush1.msra.mxu0 0.0
    %294 = vmatprep.subr.mxu0 0.0
    %295 = vmatpush1.msra.mxu0 0.0
    %296 = vmatprep.subr.mxu0 0.0
    %297 = vmatpush1.msra.mxu0 0.0
    %298 = vmatprep.subr.mxu0 0.0
    %299 = vmatpush1.msra.mxu0 0.0
    %300 = vmatprep.subr.mxu0 0.0
    %301 = vmatpush1.msra.mxu0 0.0
    %302 = vmatprep.subr.mxu0 0.0
    %303 = vmatpush1.msra.mxu0 0.0
    %304 = vmatprep.subr.mxu0 0.0
    %305 = vmatpush1.msra.mxu0 0.0
    %306 = vmatprep.subr.mxu0 0.0
    %307 = vmatpush1.msra.mxu0 0.0
    %308 = vmatprep.subr.mxu0 0.0
    %309 = vmatpush1.msra.mxu0 0.0
    %310 = vmatprep.subr.mxu0 0.0
    %311 = vmatpush1.msra.mxu0 0.0
    %312 = vmatprep.subr.mxu0 0.0
    %313 = vmatpush1.msra.mxu0 0.0
    %314 = vmatprep.subr.mxu0 0.0
    %315 = vmatpush1.msra.mxu0 0.0
    %316 = vmatprep.subr.mxu0 %v73
    %317 = vmatpush1.msra.mxu0 %v72
    %318 = vmatprep.subr.mxu0 %v69
    %319 = vmatpush1.msra.mxu0 %v68
    %320 = vmatprep.subr.mxu0 0.0
    %321 = vmatpush2.msra.mxu0 0.0
    %322 = vmatprep.subr.mxu0 0.0
    %323 = vmatpush2.msra.mxu0 0.0
    %324 = vmatprep.subr.mxu0 0.0
    %325 = vmatpush2.msra.mxu0 0.0
    %326 = vmatprep.subr.mxu0 0.0
    %327 = vmatpush2.msra.mxu0 0.0
    %328 = vmatprep.subr.mxu0 0.0
    %329 = vmatpush2.msra.mxu0 0.0
    %330 = vmatprep.subr.mxu0 0.0
    %331 = vmatpush2.msra.mxu0 0.0
    %332 = vmatprep.subr.mxu0 0.0
    %333 = vmatpush2.msra.mxu0 0.0
    %334 = vmatprep.subr.mxu0 0.0
    %335 = vmatpush2.msra.mxu0 0.0
    %336 = vmatprep.subr.mxu0 0.0
    %337 = vmatpush2.msra.mxu0 0.0
    %338 = vmatprep.subr.mxu0 0.0
    %339 = vmatpush2.msra.mxu0 0.0
    %340 = vmatprep.subr.mxu0 0.0
    %341 = vmatpush2.msra.mxu0 0.0
    %342 = vmatprep.subr.mxu0 0.0
    %343 = vmatpush2.msra.mxu0 0.0
    %344 = vmatprep.subr.mxu0 0.0
    %345 = vmatpush2.msra.mxu0 0.0
    %346 = vmatprep.subr.mxu0 0.0
    %347 = vmatpush2.msra.mxu0 0.0
    %348 = vmatprep.subr.mxu0 0.0
    %349 = vmatpush2.msra.mxu0 0.0
    %350 = vmatprep.subr.mxu0 0.0
    %351 = vmatpush2.msra.mxu0 0.0
    %352 = vmatprep.mubr.f32.mxu0 0.0
    %353 = vmatmul.mubr.f32.gmra.mxu0 %v286
    %v354 = vpop.f32.mrf.mxu0
    %v355 = vadd.f32 %v209, %v354
    %v356 = vpop.f32.mrf.mxu0
    %v357 = vadd.f32 %v211, %v356
    %358 = vdwg.mxu0
    %359 = vmatprep.subr.mxu0 0.0
    %360 = vmatpush1.msra.mxu0 0.0
    %361 = vmatprep.subr.mxu0 0.0
    %362 = vmatpush1.msra.mxu0 0.0
    %363 = vmatprep.subr.mxu0 0.0
    %364 = vmatpush1.msra.mxu0 0.0
    %365 = vmatprep.subr.mxu0 0.0
    %366 = vmatpush1.msra.mxu0 0.0
    %367 = vmatprep.subr.mxu0 0.0
    %368 = vmatpush1.msra.mxu0 0.0
    %369 = vmatprep.subr.mxu0 0.0
    %370 = vmatpush1.msra.mxu0 0.0
    %371 = vmatprep.subr.mxu0 0.0
    %372 = vmatpush1.msra.mxu0 0.0
    %373 = vmatprep.subr.mxu0 0.0
    %374 = vmatpush1.msra.mxu0 0.0
    %375 = vmatprep.subr.mxu0 0.0
    %376 = vmatpush1.msra.mxu0 0.0
    %377 = vmatprep.subr.mxu0 0.0
    %378 = vmatpush1.msra.mxu0 0.0
    %379 = vmatprep.subr.mxu0 0.0
    %380 = vmatpush1.msra.mxu0 0.0
    %381 = vmatprep.subr.mxu0 0.0
    %382 = vmatpush1.msra.mxu0 0.0
    %383 = vmatprep.subr.mxu0 0.0
    %384 = vmatpush1.msra.mxu0 0.0
    %385 = vmatprep.subr.mxu0 0.0
    %386 = vmatpush1.msra.mxu0 0.0
    %387 = vmatprep.subr.mxu0 %v75
    %388 = vmatpush1.msra.mxu0 %v74
    %389 = vmatprep.subr.mxu0 %v71
    %390 = vmatpush1.msra.mxu0 %v70
    %391 = vmatprep.subr.mxu0 0.0
    %392 = vmatpush2.msra.mxu0 0.0
    %393 = vmatprep.subr.mxu0 0.0
    %394 = vmatpush2.msra.mxu0 0.0
    %395 = vmatprep.subr.mxu0 0.0
    %396 = vmatpush2.msra.mxu0 0.0
    %397 = vmatprep.subr.mxu0 0.0
    %398 = vmatpush2.msra.mxu0 0.0
    %399 = vmatprep.subr.mxu0 0.0
    %400 = vmatpush2.msra.mxu0 0.0
    %401 = vmatprep.subr.mxu0 0.0
    %402 = vmatpush2.msra.mxu0 0.0
    %403 = vmatprep.subr.mxu0 0.0
    %404 = vmatpush2.msra.mxu0 0.0
    %405 = vmatprep.subr.mxu0 0.0
    %406 = vmatpush2.msra.mxu0 0.0
    %407 = vmatprep.subr.mxu0 0.0
    %408 = vmatpush2.msra.mxu0 0.0
    %409 = vmatprep.subr.mxu0 0.0
    %410 = vmatpush2.msra.mxu0 0.0
    %411 = vmatprep.subr.mxu0 0.0
    %412 = vmatpush2.msra.mxu0 0.0
    %413 = vmatprep.subr.mxu0 0.0
    %414 = vmatpush2.msra.mxu0 0.0
    %415 = vmatprep.subr.mxu0 0.0
    %416 = vmatpush2.msra.mxu0 0.0
    %417 = vmatprep.subr.mxu0 0.0
    %418 = vmatpush2.msra.mxu0 0.0
    %419 = vmatprep.subr.mxu0 0.0
    %420 = vmatpush2.msra.mxu0 0.0
    %421 = vmatprep.subr.mxu0 0.0
    %422 = vmatpush2.msra.mxu0 0.0
    %423 = vmatprep.mubr.f32.mxu0 0.0
    %424 = vmatmul.mubr.f32.gmra.mxu0 %v286
    %v425 = vpop.f32.mrf.mxu0
    %v426 = vadd.f32 %v280, %v425
    %v427 = vpop.f32.mrf.mxu0
    %v428 = vadd.f32 %v282, %v427
    %429 = vdwg.mxu0
    %v431 = vlaneseq
    %v432 = vshrl.u32 %v431, 7
    %v433 = vsub.s32 0, %v432
    %v434 = vrot.slane %v140, %v433
    %v435 = vlaneseq
    %v436 = vshrl.u32 %v435, 7
    %v437 = vsub.s32 1, %v436
    %v438 = vrot.slane %v140, %v437
    %v439 = vlaneseq
    %v440 = vshrl.u32 %v439, 7
    %v441 = vsub.s32 2, %v440
    %v442 = vrot.slane %v140, %v441
    %v443 = vlaneseq
    %v444 = vshrl.u32 %v443, 7
    %v445 = vsub.s32 3, %v444
    %v446 = vrot.slane %v140, %v445
    %v451 = vadd.f32 %v355, %v434
    %v452 = vadd.f32 %v357, %v438
    %v453 = vadd.f32 %v426, %v442
    %v454 = vadd.f32 %v428, %v446
    %v455 = vxor.u32 %v451, 2147483648
    %v456 = vmul.f32 %v455, 1.442695
    %v457 = vpow.pop %v456
    %v458 = vadd.f32 %v457, 1.0
    %v459 = vrcp.pop %v458
    %v460 = vmul.f32 1.0, %v459
    %v461 = vxor.u32 %v452, 2147483648
    %v462 = vmul.f32 %v461, 1.442695
    %v463 = vpow.pop %v462
    %v464 = vadd.f32 %v463, 1.0
    %v465 = vrcp.pop %v464
    %v466 = vmul.f32 1.0, %v465
    %v467 = vtanh.pop %v453
    %v468 = vxor.u32 %v454, 2147483648
    %v469 = vmul.f32 %v468, 1.442695
    %v470 = vpow.pop %v469
    %v471 = vadd.f32 %v470, 1.0
    %v472 = vrcp.pop %v471
    %v473 = vmul.f32 1.0, %v472
    %v474 = vmul.f32 %v466, 0.0
    %v475 = vmul.f32 %v460, %v467
    %v476 = vadd.f32 %v474, %v475
    %v477 = vtanh.pop %v476
    %v478 = vmul.f32 %v473, %v477
    %v479 = vld [vmem:[%s1] sm:$0xff]
    %481 = vset.pattern.permute.xlu0 0
    %482 = vperm.xlu0 %481, %v479
    %v483 = vpop.permute.xlu0 %482
    %v485 = vmul.f32 %v478, %v483
    %486 = vst [vmem:[#allocation2] sm:$0xff] %v485
    %s487 = scalar_lea.vmem %s0, 8
    %v488 = vld [vmem:[%s487] sm:$0xff]
    %489 = vmatprep.subr.mxu0 %v137
    %490 = vmatpush1.msra.mxu0 %v136
    %491 = vmatprep.subr.mxu0 %v133
    %492 = vmatpush1.msra.mxu0 %v132
    %493 = vmatprep.subr.mxu0 %v129
    %494 = vmatpush1.msra.mxu0 %v128
    %495 = vmatprep.subr.mxu0 %v125
    %496 = vmatpush1.msra.mxu0 %v124
    %497 = vmatprep.subr.mxu0 %v121
    %498 = vmatpush1.msra.mxu0 %v120
    %499 = vmatprep.subr.mxu0 %v117
    %500 = vmatpush1.msra.mxu0 %v116
    %501 = vmatprep.subr.mxu0 %v113
    %502 = vmatpush1.msra.mxu0 %v112
    %503 = vmatprep.subr.mxu0 %v109
    %504 = vmatpush1.msra.mxu0 %v108
    %505 = vmatprep.subr.mxu0 %v105
    %506 = vmatpush1.msra.mxu0 %v104
    %507 = vmatprep.subr.mxu0 %v101
    %508 = vmatpush1.msra.mxu0 %v100
    %509 = vmatprep.subr.mxu0 %v97
    %510 = vmatpush1.msra.mxu0 %v96
    %511 = vmatprep.subr.mxu0 %v93
    %512 = vmatpush1.msra.mxu0 %v92
    %513 = vmatprep.subr.mxu0 %v89
    %514 = vmatpush1.msra.mxu0 %v88
    %515 = vmatprep.subr.mxu0 %v85
    %516 = vmatpush1.msra.mxu0 %v84
    %517 = vmatprep.subr.mxu0 %v81
    %518 = vmatpush1.msra.mxu0 %v80
    %519 = vmatprep.subr.mxu0 %v77
    %520 = vmatpush1.msra.mxu0 %v76
    %521 = vmatprep.subr.mxu0 0.0
    %522 = vmatpush2.msra.mxu0 0.0
    %523 = vmatprep.subr.mxu0 0.0
    %524 = vmatpush2.msra.mxu0 0.0
    %525 = vmatprep.subr.mxu0 0.0
    %526 = vmatpush2.msra.mxu0 0.0
    %527 = vmatprep.subr.mxu0 0.0
    %528 = vmatpush2.msra.mxu0 0.0
    %529 = vmatprep.subr.mxu0 0.0
    %530 = vmatpush2.msra.mxu0 0.0
    %531 = vmatprep.subr.mxu0 0.0
    %532 = vmatpush2.msra.mxu0 0.0
    %533 = vmatprep.subr.mxu0 0.0
    %534 = vmatpush2.msra.mxu0 0.0
    %535 = vmatprep.subr.mxu0 0.0
    %536 = vmatpush2.msra.mxu0 0.0
    %537 = vmatprep.subr.mxu0 0.0
    %538 = vmatpush2.msra.mxu0 0.0
    %539 = vmatprep.subr.mxu0 0.0
    %540 = vmatpush2.msra.mxu0 0.0
    %541 = vmatprep.subr.mxu0 0.0
    %542 = vmatpush2.msra.mxu0 0.0
    %543 = vmatprep.subr.mxu0 0.0
    %544 = vmatpush2.msra.mxu0 0.0
    %545 = vmatprep.subr.mxu0 0.0
    %546 = vmatpush2.msra.mxu0 0.0
    %547 = vmatprep.subr.mxu0 0.0
    %548 = vmatpush2.msra.mxu0 0.0
    %549 = vmatprep.subr.mxu0 0.0
    %550 = vmatpush2.msra.mxu0 0.0
    %551 = vmatprep.subr.mxu0 0.0
    %552 = vmatpush2.msra.mxu0 0.0
    %553 = vmatprep.mubr.f32.mxu0 0.0
    %554 = vmatmul.mubr.f32.gmra.mxu0 %v478
    %v555 = vpop.f32.mrf.mxu0
    %v556 = vadd.f32 0.0, %v555
    %v557 = vpop.f32.mrf.mxu0
    %v558 = vadd.f32 0.0, %v557
    %559 = vdwg.mxu0
    %560 = vmatprep.subr.mxu0 %v139
    %561 = vmatpush1.msra.mxu0 %v138
    %562 = vmatprep.subr.mxu0 %v135
    %563 = vmatpush1.msra.mxu0 %v134
    %564 = vmatprep.subr.mxu0 %v131
    %565 = vmatpush1.msra.mxu0 %v130
    %566 = vmatprep.subr.mxu0 %v127
    %567 = vmatpush1.msra.mxu0 %v126
    %568 = vmatprep.subr.mxu0 %v123
    %569 = vmatpush1.msra.mxu0 %v122
    %570 = vmatprep.subr.mxu0 %v119
    %571 = vmatpush1.msra.mxu0 %v118
    %572 = vmatprep.subr.mxu0 %v115
    %573 = vmatpush1.msra.mxu0 %v114
    %574 = vmatprep.subr.mxu0 %v111
    %575 = vmatpush1.msra.mxu0 %v110
    %576 = vmatprep.subr.mxu0 %v107
    %577 = vmatpush1.msra.mxu0 %v106
    %578 = vmatprep.subr.mxu0 %v103
    %579 = vmatpush1.msra.mxu0 %v102
    %580 = vmatprep.subr.mxu0 %v99
    %581 = vmatpush1.msra.mxu0 %v98
    %582 = vmatprep.subr.mxu0 %v95
    %583 = vmatpush1.msra.mxu0 %v94
    %584 = vmatprep.subr.mxu0 %v91
    %585 = vmatpush1.msra.mxu0 %v90
    %586 = vmatprep.subr.mxu0 %v87
    %587 = vmatpush1.msra.mxu0 %v86
    %588 = vmatprep.subr.mxu0 %v83
    %589 = vmatpush1.msra.mxu0 %v82
    %590 = vmatprep.subr.mxu0 %v79
    %591 = vmatpush1.msra.mxu0 %v78
    %592 = vmatprep.subr.mxu0 0.0
    %593 = vmatpush2.msra.mxu0 0.0
    %594 = vmatprep.subr.mxu0 0.0
    %595 = vmatpush2.msra.mxu0 0.0
    %596 = vmatprep.subr.mxu0 0.0
    %597 = vmatpush2.msra.mxu0 0.0
    %598 = vmatprep.subr.mxu0 0.0
    %599 = vmatpush2.msra.mxu0 0.0
    %600 = vmatprep.subr.mxu0 0.0
    %601 = vmatpush2.msra.mxu0 0.0
    %602 = vmatprep.subr.mxu0 0.0
    %603 = vmatpush2.msra.mxu0 0.0
    %604 = vmatprep.subr.mxu0 0.0
    %605 = vmatpush2.msra.mxu0 0.0
    %606 = vmatprep.subr.mxu0 0.0
    %607 = vmatpush2.msra.mxu0 0.0
    %608 = vmatprep.subr.mxu0 0.0
    %609 = vmatpush2.msra.mxu0 0.0
    %610 = vmatprep.subr.mxu0 0.0
    %611 = vmatpush2.msra.mxu0 0.0
    %612 = vmatprep.subr.mxu0 0.0
    %613 = vmatpush2.msra.mxu0 0.0
    %614 = vmatprep.subr.mxu0 0.0
    %615 = vmatpush2.msra.mxu0 0.0
    %616 = vmatprep.subr.mxu0 0.0
    %617 = vmatpush2.msra.mxu0 0.0
    %618 = vmatprep.subr.mxu0 0.0
    %619 = vmatpush2.msra.mxu0 0.0
    %620 = vmatprep.subr.mxu0 0.0
    %621 = vmatpush2.msra.mxu0 0.0
    %622 = vmatprep.subr.mxu0 0.0
    %623 = vmatpush2.msra.mxu0 0.0
    %624 = vmatprep.mubr.f32.mxu0 0.0
    %625 = vmatmul.mubr.f32.gmra.mxu0 %v478
    %v626 = vpop.f32.mrf.mxu0
    %v627 = vadd.f32 0.0, %v626
    %v628 = vpop.f32.mrf.mxu0
    %v629 = vadd.f32 0.0, %v628
    %630 = vdwg.mxu0
    %v632 = vsel %vm284, %v488, 0
    %634 = vmatprep.subr.mxu0 0.0
    %635 = vmatpush1.msra.mxu0 0.0
    %636 = vmatprep.subr.mxu0 0.0
    %637 = vmatpush1.msra.mxu0 0.0
    %638 = vmatprep.subr.mxu0 0.0
    %639 = vmatpush1.msra.mxu0 0.0
    %640 = vmatprep.subr.mxu0 0.0
    %641 = vmatpush1.msra.mxu0 0.0
    %642 = vmatprep.subr.mxu0 0.0
    %643 = vmatpush1.msra.mxu0 0.0
    %644 = vmatprep.subr.mxu0 0.0
    %645 = vmatpush1.msra.mxu0 0.0
    %646 = vmatprep.subr.mxu0 0.0
    %647 = vmatpush1.msra.mxu0 0.0
    %648 = vmatprep.subr.mxu0 0.0
    %649 = vmatpush1.msra.mxu0 0.0
    %650 = vmatprep.subr.mxu0 0.0
    %651 = vmatpush1.msra.mxu0 0.0
    %652 = vmatprep.subr.mxu0 0.0
    %653 = vmatpush1.msra.mxu0 0.0
    %654 = vmatprep.subr.mxu0 0.0
    %655 = vmatpush1.msra.mxu0 0.0
    %656 = vmatprep.subr.mxu0 0.0
    %657 = vmatpush1.msra.mxu0 0.0
    %658 = vmatprep.subr.mxu0 0.0
    %659 = vmatpush1.msra.mxu0 0.0
    %660 = vmatprep.subr.mxu0 0.0
    %661 = vmatpush1.msra.mxu0 0.0
    %662 = vmatprep.subr.mxu0 %v73
    %663 = vmatpush1.msra.mxu0 %v72
    %664 = vmatprep.subr.mxu0 %v69
    %665 = vmatpush1.msra.mxu0 %v68
    %666 = vmatprep.subr.mxu0 0.0
    %667 = vmatpush2.msra.mxu0 0.0
    %668 = vmatprep.subr.mxu0 0.0
    %669 = vmatpush2.msra.mxu0 0.0
    %670 = vmatprep.subr.mxu0 0.0
    %671 = vmatpush2.msra.mxu0 0.0
    %672 = vmatprep.subr.mxu0 0.0
    %673 = vmatpush2.msra.mxu0 0.0
    %674 = vmatprep.subr.mxu0 0.0
    %675 = vmatpush2.msra.mxu0 0.0
    %676 = vmatprep.subr.mxu0 0.0
    %677 = vmatpush2.msra.mxu0 0.0
    %678 = vmatprep.subr.mxu0 0.0
    %679 = vmatpush2.msra.mxu0 0.0
    %680 = vmatprep.subr.mxu0 0.0
    %681 = vmatpush2.msra.mxu0 0.0
    %682 = vmatprep.subr.mxu0 0.0
    %683 = vmatpush2.msra.mxu0 0.0
    %684 = vmatprep.subr.mxu0 0.0
    %685 = vmatpush2.msra.mxu0 0.0
    %686 = vmatprep.subr.mxu0 0.0
    %687 = vmatpush2.msra.mxu0 0.0
    %688 = vmatprep.subr.mxu0 0.0
    %689 = vmatpush2.msra.mxu0 0.0
    %690 = vmatprep.subr.mxu0 0.0
    %691 = vmatpush2.msra.mxu0 0.0
    %692 = vmatprep.subr.mxu0 0.0
    %693 = vmatpush2.msra.mxu0 0.0
    %694 = vmatprep.subr.mxu0 0.0
    %695 = vmatpush2.msra.mxu0 0.0
    %696 = vmatprep.subr.mxu0 0.0
    %697 = vmatpush2.msra.mxu0 0.0
    %698 = vmatprep.mubr.f32.mxu0 0.0
    %699 = vmatmul.mubr.f32.gmra.mxu0 %v632
    %v700 = vpop.f32.mrf.mxu0
    %v701 = vadd.f32 %v556, %v700
    %v702 = vpop.f32.mrf.mxu0
    %v703 = vadd.f32 %v558, %v702
    %704 = vdwg.mxu0
    %705 = vmatprep.subr.mxu0 0.0
    %706 = vmatpush1.msra.mxu0 0.0
    %707 = vmatprep.subr.mxu0 0.0
    %708 = vmatpush1.msra.mxu0 0.0
    %709 = vmatprep.subr.mxu0 0.0
    %710 = vmatpush1.msra.mxu0 0.0
    %711 = vmatprep.subr.mxu0 0.0
    %712 = vmatpush1.msra.mxu0 0.0
    %713 = vmatprep.subr.mxu0 0.0
    %714 = vmatpush1.msra.mxu0 0.0
    %715 = vmatprep.subr.mxu0 0.0
    %716 = vmatpush1.msra.mxu0 0.0
    %717 = vmatprep.subr.mxu0 0.0
    %718 = vmatpush1.msra.mxu0 0.0
    %719 = vmatprep.subr.mxu0 0.0
    %720 = vmatpush1.msra.mxu0 0.0
    %721 = vmatprep.subr.mxu0 0.0
    %722 = vmatpush1.msra.mxu0 0.0
    %723 = vmatprep.subr.mxu0 0.0
    %724 = vmatpush1.msra.mxu0 0.0
    %725 = vmatprep.subr.mxu0 0.0
    %726 = vmatpush1.msra.mxu0 0.0
    %727 = vmatprep.subr.mxu0 0.0
    %728 = vmatpush1.msra.mxu0 0.0
    %729 = vmatprep.subr.mxu0 0.0
    %730 = vmatpush1.msra.mxu0 0.0
    %731 = vmatprep.subr.mxu0 0.0
    %732 = vmatpush1.msra.mxu0 0.0
    %733 = vmatprep.subr.mxu0 %v75
    %734 = vmatpush1.msra.mxu0 %v74
    %735 = vmatprep.subr.mxu0 %v71
    %736 = vmatpush1.msra.mxu0 %v70
    %737 = vmatprep.subr.mxu0 0.0
    %738 = vmatpush2.msra.mxu0 0.0
    %739 = vmatprep.subr.mxu0 0.0
    %740 = vmatpush2.msra.mxu0 0.0
    %741 = vmatprep.subr.mxu0 0.0
    %742 = vmatpush2.msra.mxu0 0.0
    %743 = vmatprep.subr.mxu0 0.0
    %744 = vmatpush2.msra.mxu0 0.0
    %745 = vmatprep.subr.mxu0 0.0
    %746 = vmatpush2.msra.mxu0 0.0
    %747 = vmatprep.subr.mxu0 0.0
    %748 = vmatpush2.msra.mxu0 0.0
    %749 = vmatprep.subr.mxu0 0.0
    %750 = vmatpush2.msra.mxu0 0.0
    %751 = vmatprep.subr.mxu0 0.0
    %752 = vmatpush2.msra.mxu0 0.0
    %753 = vmatprep.subr.mxu0 0.0
    %754 = vmatpush2.msra.mxu0 0.0
    %755 = vmatprep.subr.mxu0 0.0
    %756 = vmatpush2.msra.mxu0 0.0
    %757 = vmatprep.subr.mxu0 0.0
    %758 = vmatpush2.msra.mxu0 0.0
    %759 = vmatprep.subr.mxu0 0.0
    %760 = vmatpush2.msra.mxu0 0.0
    %761 = vmatprep.subr.mxu0 0.0
    %762 = vmatpush2.msra.mxu0 0.0
    %763 = vmatprep.subr.mxu0 0.0
    %764 = vmatpush2.msra.mxu0 0.0
    %765 = vmatprep.subr.mxu0 0.0
    %766 = vmatpush2.msra.mxu0 0.0
    %767 = vmatprep.subr.mxu0 0.0
    %768 = vmatpush2.msra.mxu0 0.0
    %769 = vmatprep.mubr.f32.mxu0 0.0
    %770 = vmatmul.mubr.f32.gmra.mxu0 %v632
    %v771 = vpop.f32.mrf.mxu0
    %v772 = vadd.f32 %v627, %v771
    %v773 = vpop.f32.mrf.mxu0
    %v774 = vadd.f32 %v629, %v773
    %775 = vdwg.mxu0
    %v776 = vadd.f32 %v701, %v434
    %v777 = vadd.f32 %v703, %v438
    %v778 = vadd.f32 %v772, %v442
    %v779 = vadd.f32 %v774, %v446
    %v780 = vxor.u32 %v776, 2147483648
    %v781 = vmul.f32 %v780, 1.442695
    %v782 = vpow.pop %v781
    %v783 = vadd.f32 %v782, 1.0
    %v784 = vrcp.pop %v783
    %v785 = vmul.f32 1.0, %v784
    %v786 = vxor.u32 %v777, 2147483648
    %v787 = vmul.f32 %v786, 1.442695
    %v788 = vpow.pop %v787
    %v789 = vadd.f32 %v788, 1.0
    %v790 = vrcp.pop %v789
    %v791 = vmul.f32 1.0, %v790
    %v792 = vtanh.pop %v778
    %v793 = vxor.u32 %v779, 2147483648
    %v794 = vmul.f32 %v793, 1.442695
    %v795 = vpow.pop %v794
    %v796 = vadd.f32 %v795, 1.0
    %v797 = vrcp.pop %v796
    %v798 = vmul.f32 1.0, %v797
    %v799 = vmul.f32 %v791, %v476
    %v800 = vmul.f32 %v785, %v792
    %v801 = vadd.f32 %v799, %v800
    %v802 = vtanh.pop %v801
    %v803 = vmul.f32 %v798, %v802
    %s804 = scalar_lea.vmem %s1, 8
    %v805 = vld [vmem:[%s804] sm:$0xff]
    %807 = vset.pattern.permute.xlu0 0
    %808 = vperm.xlu0 %807, %v805
    %v809 = vpop.permute.xlu0 %808
    %v811 = vmul.f32 %v803, %v809
    %s812 = scalar_lea.vmem [#allocation2], 8
    %813 = vst [vmem:[%s812] sm:$0xff] %v811
    %s814 = scalar_lea.vmem %s0, 16
    %v815 = vld [vmem:[%s814] sm:$0xff]
    %816 = vmatprep.subr.mxu0 %v137
    %817 = vmatpush1.msra.mxu0 %v136
    %818 = vmatprep.subr.mxu0 %v133
    %819 = vmatpush1.msra.mxu0 %v132
    %820 = vmatprep.subr.mxu0 %v129
    %821 = vmatpush1.msra.mxu0 %v128
    %822 = vmatprep.subr.mxu0 %v125
    %823 = vmatpush1.msra.mxu0 %v124
    %824 = vmatprep.subr.mxu0 %v121
    %825 = vmatpush1.msra.mxu0 %v120
    %826 = vmatprep.subr.mxu0 %v117
    %827 = vmatpush1.msra.mxu0 %v116
    %828 = vmatprep.subr.mxu0 %v113
    %829 = vmatpush1.msra.mxu0 %v112
    %830 = vmatprep.subr.mxu0 %v109
    %831 = vmatpush1.msra.mxu0 %v108
    %832 = vmatprep.subr.mxu0 %v105
    %833 = vmatpush1.msra.mxu0 %v104
    %834 = vmatprep.subr.mxu0 %v101
    %835 = vmatpush1.msra.mxu0 %v100
    %836 = vmatprep.subr.mxu0 %v97
    %837 = vmatpush1.msra.mxu0 %v96
    %838 = vmatprep.subr.mxu0 %v93
    %839 = vmatpush1.msra.mxu0 %v92
    %840 = vmatprep.subr.mxu0 %v89
    %841 = vmatpush1.msra.mxu0 %v88
    %842 = vmatprep.subr.mxu0 %v85
    %843 = vmatpush1.msra.mxu0 %v84
    %844 = vmatprep.subr.mxu0 %v81
    %845 = vmatpush1.msra.mxu0 %v80
    %846 = vmatprep.subr.mxu0 %v77
    %847 = vmatpush1.msra.mxu0 %v76
    %848 = vmatprep.subr.mxu0 0.0
    %849 = vmatpush2.msra.mxu0 0.0
    %850 = vmatprep.subr.mxu0 0.0
    %851 = vmatpush2.msra.mxu0 0.0
    %852 = vmatprep.subr.mxu0 0.0
    %853 = vmatpush2.msra.mxu0 0.0
    %854 = vmatprep.subr.mxu0 0.0
    %855 = vmatpush2.msra.mxu0 0.0
    %856 = vmatprep.subr.mxu0 0.0
    %857 = vmatpush2.msra.mxu0 0.0
    %858 = vmatprep.subr.mxu0 0.0
    %859 = vmatpush2.msra.mxu0 0.0
    %860 = vmatprep.subr.mxu0 0.0
    %861 = vmatpush2.msra.mxu0 0.0
    %862 = vmatprep.subr.mxu0 0.0
    %863 = vmatpush2.msra.mxu0 0.0
    %864 = vmatprep.subr.mxu0 0.0
    %865 = vmatpush2.msra.mxu0 0.0
    %866 = vmatprep.subr.mxu0 0.0
    %867 = vmatpush2.msra.mxu0 0.0
    %868 = vmatprep.subr.mxu0 0.0
    %869 = vmatpush2.msra.mxu0 0.0
    %870 = vmatprep.subr.mxu0 0.0
    %871 = vmatpush2.msra.mxu0 0.0
    %872 = vmatprep.subr.mxu0 0.0
    %873 = vmatpush2.msra.mxu0 0.0
    %874 = vmatprep.subr.mxu0 0.0
    %875 = vmatpush2.msra.mxu0 0.0
    %876 = vmatprep.subr.mxu0 0.0
    %877 = vmatpush2.msra.mxu0 0.0
    %878 = vmatprep.subr.mxu0 0.0
    %879 = vmatpush2.msra.mxu0 0.0
    %880 = vmatprep.mubr.f32.mxu0 0.0
    %881 = vmatmul.mubr.f32.gmra.mxu0 %v803
    %v882 = vpop.f32.mrf.mxu0
    %v883 = vadd.f32 0.0, %v882
    %v884 = vpop.f32.mrf.mxu0
    %v885 = vadd.f32 0.0, %v884
    %886 = vdwg.mxu0
    %887 = vmatprep.subr.mxu0 %v139
    %888 = vmatpush1.msra.mxu0 %v138
    %889 = vmatprep.subr.mxu0 %v135
    %890 = vmatpush1.msra.mxu0 %v134
    %891 = vmatprep.subr.mxu0 %v131
    %892 = vmatpush1.msra.mxu0 %v130
    %893 = vmatprep.subr.mxu0 %v127
    %894 = vmatpush1.msra.mxu0 %v126
    %895 = vmatprep.subr.mxu0 %v123
    %896 = vmatpush1.msra.mxu0 %v122
    %897 = vmatprep.subr.mxu0 %v119
    %898 = vmatpush1.msra.mxu0 %v118
    %899 = vmatprep.subr.mxu0 %v115
    %900 = vmatpush1.msra.mxu0 %v114
    %901 = vmatprep.subr.mxu0 %v111
    %902 = vmatpush1.msra.mxu0 %v110
    %903 = vmatprep.subr.mxu0 %v107
    %904 = vmatpush1.msra.mxu0 %v106
    %905 = vmatprep.subr.mxu0 %v103
    %906 = vmatpush1.msra.mxu0 %v102
    %907 = vmatprep.subr.mxu0 %v99
    %908 = vmatpush1.msra.mxu0 %v98
    %909 = vmatprep.subr.mxu0 %v95
    %910 = vmatpush1.msra.mxu0 %v94
    %911 = vmatprep.subr.mxu0 %v91
    %912 = vmatpush1.msra.mxu0 %v90
    %913 = vmatprep.subr.mxu0 %v87
    %914 = vmatpush1.msra.mxu0 %v86
    %915 = vmatprep.subr.mxu0 %v83
    %916 = vmatpush1.msra.mxu0 %v82
    %917 = vmatprep.subr.mxu0 %v79
    %918 = vmatpush1.msra.mxu0 %v78
    %919 = vmatprep.subr.mxu0 0.0
    %920 = vmatpush2.msra.mxu0 0.0
    %921 = vmatprep.subr.mxu0 0.0
    %922 = vmatpush2.msra.mxu0 0.0
    %923 = vmatprep.subr.mxu0 0.0
    %924 = vmatpush2.msra.mxu0 0.0
    %925 = vmatprep.subr.mxu0 0.0
    %926 = vmatpush2.msra.mxu0 0.0
    %927 = vmatprep.subr.mxu0 0.0
    %928 = vmatpush2.msra.mxu0 0.0
    %929 = vmatprep.subr.mxu0 0.0
    %930 = vmatpush2.msra.mxu0 0.0
    %931 = vmatprep.subr.mxu0 0.0
    %932 = vmatpush2.msra.mxu0 0.0
    %933 = vmatprep.subr.mxu0 0.0
    %934 = vmatpush2.msra.mxu0 0.0
    %935 = vmatprep.subr.mxu0 0.0
    %936 = vmatpush2.msra.mxu0 0.0
    %937 = vmatprep.subr.mxu0 0.0
    %938 = vmatpush2.msra.mxu0 0.0
    %939 = vmatprep.subr.mxu0 0.0
    %940 = vmatpush2.msra.mxu0 0.0
    %941 = vmatprep.subr.mxu0 0.0
    %942 = vmatpush2.msra.mxu0 0.0
    %943 = vmatprep.subr.mxu0 0.0
    %944 = vmatpush2.msra.mxu0 0.0
    %945 = vmatprep.subr.mxu0 0.0
    %946 = vmatpush2.msra.mxu0 0.0
    %947 = vmatprep.subr.mxu0 0.0
    %948 = vmatpush2.msra.mxu0 0.0
    %949 = vmatprep.subr.mxu0 0.0
    %950 = vmatpush2.msra.mxu0 0.0
    %951 = vmatprep.mubr.f32.mxu0 0.0
    %952 = vmatmul.mubr.f32.gmra.mxu0 %v803
    %v953 = vpop.f32.mrf.mxu0
    %v954 = vadd.f32 0.0, %v953
    %v955 = vpop.f32.mrf.mxu0
    %v956 = vadd.f32 0.0, %v955
    %957 = vdwg.mxu0
    %v959 = vsel %vm284, %v815, 0
    %961 = vmatprep.subr.mxu0 0.0
    %962 = vmatpush1.msra.mxu0 0.0
    %963 = vmatprep.subr.mxu0 0.0
    %964 = vmatpush1.msra.mxu0 0.0
    %965 = vmatprep.subr.mxu0 0.0
    %966 = vmatpush1.msra.mxu0 0.0
    %967 = vmatprep.subr.mxu0 0.0
    %968 = vmatpush1.msra.mxu0 0.0
    %969 = vmatprep.subr.mxu0 0.0
    %970 = vmatpush1.msra.mxu0 0.0
    %971 = vmatprep.subr.mxu0 0.0
    %972 = vmatpush1.msra.mxu0 0.0
    %973 = vmatprep.subr.mxu0 0.0
    %974 = vmatpush1.msra.mxu0 0.0
    %975 = vmatprep.subr.mxu0 0.0
    %976 = vmatpush1.msra.mxu0 0.0
    %977 = vmatprep.subr.mxu0 0.0
    %978 = vmatpush1.msra.mxu0 0.0
    %979 = vmatprep.subr.mxu0 0.0
    %980 = vmatpush1.msra.mxu0 0.0
    %981 = vmatprep.subr.mxu0 0.0
    %982 = vmatpush1.msra.mxu0 0.0
    %983 = vmatprep.subr.mxu0 0.0
    %984 = vmatpush1.msra.mxu0 0.0
    %985 = vmatprep.subr.mxu0 0.0
    %986 = vmatpush1.msra.mxu0 0.0
    %987 = vmatprep.subr.mxu0 0.0
    %988 = vmatpush1.msra.mxu0 0.0
    %989 = vmatprep.subr.mxu0 %v73
    %990 = vmatpush1.msra.mxu0 %v72
    %991 = vmatprep.subr.mxu0 %v69
    %992 = vmatpush1.msra.mxu0 %v68
    %993 = vmatprep.subr.mxu0 0.0
    %994 = vmatpush2.msra.mxu0 0.0
    %995 = vmatprep.subr.mxu0 0.0
    %996 = vmatpush2.msra.mxu0 0.0
    %997 = vmatprep.subr.mxu0 0.0
    %998 = vmatpush2.msra.mxu0 0.0
    %999 = vmatprep.subr.mxu0 0.0
    %1000 = vmatpush2.msra.mxu0 0.0
    %1001 = vmatprep.subr.mxu0 0.0
    %1002 = vmatpush2.msra.mxu0 0.0
    %1003 = vmatprep.subr.mxu0 0.0
    %1004 = vmatpush2.msra.mxu0 0.0
    %1005 = vmatprep.subr.mxu0 0.0
    %1006 = vmatpush2.msra.mxu0 0.0
    %1007 = vmatprep.subr.mxu0 0.0
    %1008 = vmatpush2.msra.mxu0 0.0
    %1009 = vmatprep.subr.mxu0 0.0
    %1010 = vmatpush2.msra.mxu0 0.0
    %1011 = vmatprep.subr.mxu0 0.0
    %1012 = vmatpush2.msra.mxu0 0.0
    %1013 = vmatprep.subr.mxu0 0.0
    %1014 = vmatpush2.msra.mxu0 0.0
    %1015 = vmatprep.subr.mxu0 0.0
    %1016 = vmatpush2.msra.mxu0 0.0
    %1017 = vmatprep.subr.mxu0 0.0
    %1018 = vmatpush2.msra.mxu0 0.0
    %1019 = vmatprep.subr.mxu0 0.0
    %1020 = vmatpush2.msra.mxu0 0.0
    %1021 = vmatprep.subr.mxu0 0.0
    %1022 = vmatpush2.msra.mxu0 0.0
    %1023 = vmatprep.subr.mxu0 0.0
    %1024 = vmatpush2.msra.mxu0 0.0
    %1025 = vmatprep.mubr.f32.mxu0 0.0
    %1026 = vmatmul.mubr.f32.gmra.mxu0 %v959
    %v1027 = vpop.f32.mrf.mxu0
    %v1028 = vadd.f32 %v883, %v1027
    %v1029 = vpop.f32.mrf.mxu0
    %v1030 = vadd.f32 %v885, %v1029
    %1031 = vdwg.mxu0
    %1032 = vmatprep.subr.mxu0 0.0
    %1033 = vmatpush1.msra.mxu0 0.0
    %1034 = vmatprep.subr.mxu0 0.0
    %1035 = vmatpush1.msra.mxu0 0.0
    %1036 = vmatprep.subr.mxu0 0.0
    %1037 = vmatpush1.msra.mxu0 0.0
    %1038 = vmatprep.subr.mxu0 0.0
    %1039 = vmatpush1.msra.mxu0 0.0
    %1040 = vmatprep.subr.mxu0 0.0
    %1041 = vmatpush1.msra.mxu0 0.0
    %1042 = vmatprep.subr.mxu0 0.0
    %1043 = vmatpush1.msra.mxu0 0.0
    %1044 = vmatprep.subr.mxu0 0.0
    %1045 = vmatpush1.msra.mxu0 0.0
    %1046 = vmatprep.subr.mxu0 0.0
    %1047 = vmatpush1.msra.mxu0 0.0
    %1048 = vmatprep.subr.mxu0 0.0
    %1049 = vmatpush1.msra.mxu0 0.0
    %1050 = vmatprep.subr.mxu0 0.0
    %1051 = vmatpush1.msra.mxu0 0.0
    %1052 = vmatprep.subr.mxu0 0.0
    %1053 = vmatpush1.msra.mxu0 0.0
    %1054 = vmatprep.subr.mxu0 0.0
    %1055 = vmatpush1.msra.mxu0 0.0
    %1056 = vmatprep.subr.mxu0 0.0
    %1057 = vmatpush1.msra.mxu0 0.0
    %1058 = vmatprep.subr.mxu0 0.0
    %1059 = vmatpush1.msra.mxu0 0.0
    %1060 = vmatprep.subr.mxu0 %v75
    %1061 = vmatpush1.msra.mxu0 %v74
    %1062 = vmatprep.subr.mxu0 %v71
    %1063 = vmatpush1.msra.mxu0 %v70
    %1064 = vmatprep.subr.mxu0 0.0
    %1065 = vmatpush2.msra.mxu0 0.0
    %1066 = vmatprep.subr.mxu0 0.0
    %1067 = vmatpush2.msra.mxu0 0.0
    %1068 = vmatprep.subr.mxu0 0.0
    %1069 = vmatpush2.msra.mxu0 0.0
    %1070 = vmatprep.subr.mxu0 0.0
    %1071 = vmatpush2.msra.mxu0 0.0
    %1072 = vmatprep.subr.mxu0 0.0
    %1073 = vmatpush2.msra.mxu0 0.0
    %1074 = vmatprep.subr.mxu0 0.0
    %1075 = vmatpush2.msra.mxu0 0.0
    %1076 = vmatprep.subr.mxu0 0.0
    %1077 = vmatpush2.msra.mxu0 0.0
    %1078 = vmatprep.subr.mxu0 0.0
    %1079 = vmatpush2.msra.mxu0 0.0
    %1080 = vmatprep.subr.mxu0 0.0
    %1081 = vmatpush2.msra.mxu0 0.0
    %1082 = vmatprep.subr.mxu0 0.0
    %1083 = vmatpush2.msra.mxu0 0.0
    %1084 = vmatprep.subr.mxu0 0.0
    %1085 = vmatpush2.msra.mxu0 0.0
    %1086 = vmatprep.subr.mxu0 0.0
    %1087 = vmatpush2.msra.mxu0 0.0
    %1088 = vmatprep.subr.mxu0 0.0
    %1089 = vmatpush2.msra.mxu0 0.0
    %1090 = vmatprep.subr.mxu0 0.0
    %1091 = vmatpush2.msra.mxu0 0.0
    %1092 = vmatprep.subr.mxu0 0.0
    %1093 = vmatpush2.msra.mxu0 0.0
    %1094 = vmatprep.subr.mxu0 0.0
    %1095 = vmatpush2.msra.mxu0 0.0
    %1096 = vmatprep.mubr.f32.mxu0 0.0
    %1097 = vmatmul.mubr.f32.gmra.mxu0 %v959
    %v1098 = vpop.f32.mrf.mxu0
    %v1099 = vadd.f32 %v954, %v1098
    %v1100 = vpop.f32.mrf.mxu0
    %v1101 = vadd.f32 %v956, %v1100
    %1102 = vdwg.mxu0
    %v1103 = vadd.f32 %v1028, %v434
    %v1104 = vadd.f32 %v1030, %v438
    %v1105 = vadd.f32 %v1099, %v442
    %v1106 = vadd.f32 %v1101, %v446
    %v1107 = vxor.u32 %v1103, 2147483648
    %v1108 = vmul.f32 %v1107, 1.442695
    %v1109 = vpow.pop %v1108
    %v1110 = vadd.f32 %v1109, 1.0
    %v1111 = vrcp.pop %v1110
    %v1112 = vmul.f32 1.0, %v1111
    %v1113 = vxor.u32 %v1104, 2147483648
    %v1114 = vmul.f32 %v1113, 1.442695
    %v1115 = vpow.pop %v1114
    %v1116 = vadd.f32 %v1115, 1.0
    %v1117 = vrcp.pop %v1116
    %v1118 = vmul.f32 1.0, %v1117
    %v1119 = vtanh.pop %v1105
    %v1120 = vxor.u32 %v1106, 2147483648
    %v1121 = vmul.f32 %v1120, 1.442695
    %v1122 = vpow.pop %v1121
    %v1123 = vadd.f32 %v1122, 1.0
    %v1124 = vrcp.pop %v1123
    %v1125 = vmul.f32 1.0, %v1124
    %v1126 = vmul.f32 %v1118, %v801
    %v1127 = vmul.f32 %v1112, %v1119
    %v1128 = vadd.f32 %v1126, %v1127
    %v1129 = vtanh.pop %v1128
    %v1130 = vmul.f32 %v1125, %v1129
    %s1131 = scalar_lea.vmem %s1, 16
    %v1132 = vld [vmem:[%s1131] sm:$0xff]
    %1134 = vset.pattern.permute.xlu0 0
    %1135 = vperm.xlu0 %1134, %v1132
    %v1136 = vpop.permute.xlu0 %1135
    %v1138 = vmul.f32 %v1130, %v1136
    %s1139 = scalar_lea.vmem [#allocation2], 16
    %1140 = vst [vmem:[%s1139] sm:$0xff] %v1138
    %s1141 = scalar_lea.vmem %s0, 24
    %v1142 = vld [vmem:[%s1141] sm:$0xff]
    %1143 = vmatprep.subr.mxu0 %v137
    %1144 = vmatpush1.msra.mxu0 %v136
    %1145 = vmatprep.subr.mxu0 %v133
    %1146 = vmatpush1.msra.mxu0 %v132
    %1147 = vmatprep.subr.mxu0 %v129
    %1148 = vmatpush1.msra.mxu0 %v128
    %1149 = vmatprep.subr.mxu0 %v125
    %1150 = vmatpush1.msra.mxu0 %v124
    %1151 = vmatprep.subr.mxu0 %v121
    %1152 = vmatpush1.msra.mxu0 %v120
    %1153 = vmatprep.subr.mxu0 %v117
    %1154 = vmatpush1.msra.mxu0 %v116
    %1155 = vmatprep.subr.mxu0 %v113
    %1156 = vmatpush1.msra.mxu0 %v112
    %1157 = vmatprep.subr.mxu0 %v109
    %1158 = vmatpush1.msra.mxu0 %v108
    %1159 = vmatprep.subr.mxu0 %v105
    %1160 = vmatpush1.msra.mxu0 %v104
    %1161 = vmatprep.subr.mxu0 %v101
    %1162 = vmatpush1.msra.mxu0 %v100
    %1163 = vmatprep.subr.mxu0 %v97
    %1164 = vmatpush1.msra.mxu0 %v96
    %1165 = vmatprep.subr.mxu0 %v93
    %1166 = vmatpush1.msra.mxu0 %v92
    %1167 = vmatprep.subr.mxu0 %v89
    %1168 = vmatpush1.msra.mxu0 %v88
    %1169 = vmatprep.subr.mxu0 %v85
    %1170 = vmatpush1.msra.mxu0 %v84
    %1171 = vmatprep.subr.mxu0 %v81
    %1172 = vmatpush1.msra.mxu0 %v80
    %1173 = vmatprep.subr.mxu0 %v77
    %1174 = vmatpush1.msra.mxu0 %v76
    %1175 = vmatprep.subr.mxu0 0.0
    %1176 = vmatpush2.msra.mxu0 0.0
    %1177 = vmatprep.subr.mxu0 0.0
    %1178 = vmatpush2.msra.mxu0 0.0
    %1179 = vmatprep.subr.mxu0 0.0
    %1180 = vmatpush2.msra.mxu0 0.0
    %1181 = vmatprep.subr.mxu0 0.0
    %1182 = vmatpush2.msra.mxu0 0.0
    %1183 = vmatprep.subr.mxu0 0.0
    %1184 = vmatpush2.msra.mxu0 0.0
    %1185 = vmatprep.subr.mxu0 0.0
    %1186 = vmatpush2.msra.mxu0 0.0
    %1187 = vmatprep.subr.mxu0 0.0
    %1188 = vmatpush2.msra.mxu0 0.0
    %1189 = vmatprep.subr.mxu0 0.0
    %1190 = vmatpush2.msra.mxu0 0.0
    %1191 = vmatprep.subr.mxu0 0.0
    %1192 = vmatpush2.msra.mxu0 0.0
    %1193 = vmatprep.subr.mxu0 0.0
    %1194 = vmatpush2.msra.mxu0 0.0
    %1195 = vmatprep.subr.mxu0 0.0
    %1196 = vmatpush2.msra.mxu0 0.0
    %1197 = vmatprep.subr.mxu0 0.0
    %1198 = vmatpush2.msra.mxu0 0.0
    %1199 = vmatprep.subr.mxu0 0.0
    %1200 = vmatpush2.msra.mxu0 0.0
    %1201 = vmatprep.subr.mxu0 0.0
    %1202 = vmatpush2.msra.mxu0 0.0
    %1203 = vmatprep.subr.mxu0 0.0
    %1204 = vmatpush2.msra.mxu0 0.0
    %1205 = vmatprep.subr.mxu0 0.0
    %1206 = vmatpush2.msra.mxu0 0.0
    %1207 = vmatprep.mubr.f32.mxu0 0.0
    %1208 = vmatmul.mubr.f32.gmra.mxu0 %v1130
    %v1209 = vpop.f32.mrf.mxu0
    %v1210 = vadd.f32 0.0, %v1209
    %v1211 = vpop.f32.mrf.mxu0
    %v1212 = vadd.f32 0.0, %v1211
    %1213 = vdwg.mxu0
    %1214 = vmatprep.subr.mxu0 %v139
    %1215 = vmatpush1.msra.mxu0 %v138
    %1216 = vmatprep.subr.mxu0 %v135
    %1217 = vmatpush1.msra.mxu0 %v134
    %1218 = vmatprep.subr.mxu0 %v131
    %1219 = vmatpush1.msra.mxu0 %v130
    %1220 = vmatprep.subr.mxu0 %v127
    %1221 = vmatpush1.msra.mxu0 %v126
    %1222 = vmatprep.subr.mxu0 %v123
    %1223 = vmatpush1.msra.mxu0 %v122
    %1224 = vmatprep.subr.mxu0 %v119
    %1225 = vmatpush1.msra.mxu0 %v118
    %1226 = vmatprep.subr.mxu0 %v115
    %1227 = vmatpush1.msra.mxu0 %v114
    %1228 = vmatprep.subr.mxu0 %v111
    %1229 = vmatpush1.msra.mxu0 %v110
    %1230 = vmatprep.subr.mxu0 %v107
    %1231 = vmatpush1.msra.mxu0 %v106
    %1232 = vmatprep.subr.mxu0 %v103
    %1233 = vmatpush1.msra.mxu0 %v102
    %1234 = vmatprep.subr.mxu0 %v99
    %1235 = vmatpush1.msra.mxu0 %v98
    %1236 = vmatprep.subr.mxu0 %v95
    %1237 = vmatpush1.msra.mxu0 %v94
    %1238 = vmatprep.subr.mxu0 %v91
    %1239 = vmatpush1.msra.mxu0 %v90
    %1240 = vmatprep.subr.mxu0 %v87
    %1241 = vmatpush1.msra.mxu0 %v86
    %1242 = vmatprep.subr.mxu0 %v83
    %1243 = vmatpush1.msra.mxu0 %v82
    %1244 = vmatprep.subr.mxu0 %v79
    %1245 = vmatpush1.msra.mxu0 %v78
    %1246 = vmatprep.subr.mxu0 0.0
    %1247 = vmatpush2.msra.mxu0 0.0
    %1248 = vmatprep.subr.mxu0 0.0
    %1249 = vmatpush2.msra.mxu0 0.0
    %1250 = vmatprep.subr.mxu0 0.0
    %1251 = vmatpush2.msra.mxu0 0.0
    %1252 = vmatprep.subr.mxu0 0.0
    %1253 = vmatpush2.msra.mxu0 0.0
    %1254 = vmatprep.subr.mxu0 0.0
    %1255 = vmatpush2.msra.mxu0 0.0
    %1256 = vmatprep.subr.mxu0 0.0
    %1257 = vmatpush2.msra.mxu0 0.0
    %1258 = vmatprep.subr.mxu0 0.0
    %1259 = vmatpush2.msra.mxu0 0.0
    %1260 = vmatprep.subr.mxu0 0.0
    %1261 = vmatpush2.msra.mxu0 0.0
    %1262 = vmatprep.subr.mxu0 0.0
    %1263 = vmatpush2.msra.mxu0 0.0
    %1264 = vmatprep.subr.mxu0 0.0
    %1265 = vmatpush2.msra.mxu0 0.0
    %1266 = vmatprep.subr.mxu0 0.0
    %1267 = vmatpush2.msra.mxu0 0.0
    %1268 = vmatprep.subr.mxu0 0.0
    %1269 = vmatpush2.msra.mxu0 0.0
    %1270 = vmatprep.subr.mxu0 0.0
    %1271 = vmatpush2.msra.mxu0 0.0
    %1272 = vmatprep.subr.mxu0 0.0
    %1273 = vmatpush2.msra.mxu0 0.0
    %1274 = vmatprep.subr.mxu0 0.0
    %1275 = vmatpush2.msra.mxu0 0.0
    %1276 = vmatprep.subr.mxu0 0.0
    %1277 = vmatpush2.msra.mxu0 0.0
    %1278 = vmatprep.mubr.f32.mxu0 0.0
    %1279 = vmatmul.mubr.f32.gmra.mxu0 %v1130
    %v1280 = vpop.f32.mrf.mxu0
    %v1281 = vadd.f32 0.0, %v1280
    %v1282 = vpop.f32.mrf.mxu0
    %v1283 = vadd.f32 0.0, %v1282
    %1284 = vdwg.mxu0
    %v1286 = vsel %vm284, %v1142, 0
    %1288 = vmatprep.subr.mxu0 0.0
    %1289 = vmatpush1.msra.mxu0 0.0
    %1290 = vmatprep.subr.mxu0 0.0
    %1291 = vmatpush1.msra.mxu0 0.0
    %1292 = vmatprep.subr.mxu0 0.0
    %1293 = vmatpush1.msra.mxu0 0.0
    %1294 = vmatprep.subr.mxu0 0.0
    %1295 = vmatpush1.msra.mxu0 0.0
    %1296 = vmatprep.subr.mxu0 0.0
    %1297 = vmatpush1.msra.mxu0 0.0
    %1298 = vmatprep.subr.mxu0 0.0
    %1299 = vmatpush1.msra.mxu0 0.0
    %1300 = vmatprep.subr.mxu0 0.0
    %1301 = vmatpush1.msra.mxu0 0.0
    %1302 = vmatprep.subr.mxu0 0.0
    %1303 = vmatpush1.msra.mxu0 0.0
    %1304 = vmatprep.subr.mxu0 0.0
    %1305 = vmatpush1.msra.mxu0 0.0
    %1306 = vmatprep.subr.mxu0 0.0
    %1307 = vmatpush1.msra.mxu0 0.0
    %1308 = vmatprep.subr.mxu0 0.0
    %1309 = vmatpush1.msra.mxu0 0.0
    %1310 = vmatprep.subr.mxu0 0.0
    %1311 = vmatpush1.msra.mxu0 0.0
    %1312 = vmatprep.subr.mxu0 0.0
    %1313 = vmatpush1.msra.mxu0 0.0
    %1314 = vmatprep.subr.mxu0 0.0
    %1315 = vmatpush1.msra.mxu0 0.0
    %1316 = vmatprep.subr.mxu0 %v73
    %1317 = vmatpush1.msra.mxu0 %v72
    %1318 = vmatprep.subr.mxu0 %v69
    %1319 = vmatpush1.msra.mxu0 %v68
    %1320 = vmatprep.subr.mxu0 0.0
    %1321 = vmatpush2.msra.mxu0 0.0
    %1322 = vmatprep.subr.mxu0 0.0
    %1323 = vmatpush2.msra.mxu0 0.0
    %1324 = vmatprep.subr.mxu0 0.0
    %1325 = vmatpush2.msra.mxu0 0.0
    %1326 = vmatprep.subr.mxu0 0.0
    %1327 = vmatpush2.msra.mxu0 0.0
    %1328 = vmatprep.subr.mxu0 0.0
    %1329 = vmatpush2.msra.mxu0 0.0
    %1330 = vmatprep.subr.mxu0 0.0
    %1331 = vmatpush2.msra.mxu0 0.0
    %1332 = vmatprep.subr.mxu0 0.0
    %1333 = vmatpush2.msra.mxu0 0.0
    %1334 = vmatprep.subr.mxu0 0.0
    %1335 = vmatpush2.msra.mxu0 0.0
    %1336 = vmatprep.subr.mxu0 0.0
    %1337 = vmatpush2.msra.mxu0 0.0
    %1338 = vmatprep.subr.mxu0 0.0
    %1339 = vmatpush2.msra.mxu0 0.0
    %1340 = vmatprep.subr.mxu0 0.0
    %1341 = vmatpush2.msra.mxu0 0.0
    %1342 = vmatprep.subr.mxu0 0.0
    %1343 = vmatpush2.msra.mxu0 0.0
    %1344 = vmatprep.subr.mxu0 0.0
    %1345 = vmatpush2.msra.mxu0 0.0
    %1346 = vmatprep.subr.mxu0 0.0
    %1347 = vmatpush2.msra.mxu0 0.0
    %1348 = vmatprep.subr.mxu0 0.0
    %1349 = vmatpush2.msra.mxu0 0.0
    %1350 = vmatprep.subr.mxu0 0.0
    %1351 = vmatpush2.msra.mxu0 0.0
    %1352 = vmatprep.mubr.f32.mxu0 0.0
    %1353 = vmatmul.mubr.f32.gmra.mxu0 %v1286
    %v1354 = vpop.f32.mrf.mxu0
    %v1355 = vadd.f32 %v1210, %v1354
    %v1356 = vpop.f32.mrf.mxu0
    %v1357 = vadd.f32 %v1212, %v1356
    %1358 = vdwg.mxu0
    %1359 = vmatprep.subr.mxu0 0.0
    %1360 = vmatpush1.msra.mxu0 0.0
    %1361 = vmatprep.subr.mxu0 0.0
    %1362 = vmatpush1.msra.mxu0 0.0
    %1363 = vmatprep.subr.mxu0 0.0
    %1364 = vmatpush1.msra.mxu0 0.0
    %1365 = vmatprep.subr.mxu0 0.0
    %1366 = vmatpush1.msra.mxu0 0.0
    %1367 = vmatprep.subr.mxu0 0.0
    %1368 = vmatpush1.msra.mxu0 0.0
    %1369 = vmatprep.subr.mxu0 0.0
    %1370 = vmatpush1.msra.mxu0 0.0
    %1371 = vmatprep.subr.mxu0 0.0
    %1372 = vmatpush1.msra.mxu0 0.0
    %1373 = vmatprep.subr.mxu0 0.0
    %1374 = vmatpush1.msra.mxu0 0.0
    %1375 = vmatprep.subr.mxu0 0.0
    %1376 = vmatpush1.msra.mxu0 0.0
    %1377 = vmatprep.subr.mxu0 0.0
    %1378 = vmatpush1.msra.mxu0 0.0
    %1379 = vmatprep.subr.mxu0 0.0
    %1380 = vmatpush1.msra.mxu0 0.0
    %1381 = vmatprep.subr.mxu0 0.0
    %1382 = vmatpush1.msra.mxu0 0.0
    %1383 = vmatprep.subr.mxu0 0.0
    %1384 = vmatpush1.msra.mxu0 0.0
    %1385 = vmatprep.subr.mxu0 0.0
    %1386 = vmatpush1.msra.mxu0 0.0
    %1387 = vmatprep.subr.mxu0 %v75
    %1388 = vmatpush1.msra.mxu0 %v74
    %1389 = vmatprep.subr.mxu0 %v71
    %1390 = vmatpush1.msra.mxu0 %v70
    %1391 = vmatprep.subr.mxu0 0.0
    %1392 = vmatpush2.msra.mxu0 0.0
    %1393 = vmatprep.subr.mxu0 0.0
    %1394 = vmatpush2.msra.mxu0 0.0
    %1395 = vmatprep.subr.mxu0 0.0
    %1396 = vmatpush2.msra.mxu0 0.0
    %1397 = vmatprep.subr.mxu0 0.0
    %1398 = vmatpush2.msra.mxu0 0.0
    %1399 = vmatprep.subr.mxu0 0.0
    %1400 = vmatpush2.msra.mxu0 0.0
    %1401 = vmatprep.subr.mxu0 0.0
    %1402 = vmatpush2.msra.mxu0 0.0
    %1403 = vmatprep.subr.mxu0 0.0
    %1404 = vmatpush2.msra.mxu0 0.0
    %1405 = vmatprep.subr.mxu0 0.0
    %1406 = vmatpush2.msra.mxu0 0.0
    %1407 = vmatprep.subr.mxu0 0.0
    %1408 = vmatpush2.msra.mxu0 0.0
    %1409 = vmatprep.subr.mxu0 0.0
    %1410 = vmatpush2.msra.mxu0 0.0
    %1411 = vmatprep.subr.mxu0 0.0
    %1412 = vmatpush2.msra.mxu0 0.0
    %1413 = vmatprep.subr.mxu0 0.0
    %1414 = vmatpush2.msra.mxu0 0.0
    %1415 = vmatprep.subr.mxu0 0.0
    %1416 = vmatpush2.msra.mxu0 0.0
    %1417 = vmatprep.subr.mxu0 0.0
    %1418 = vmatpush2.msra.mxu0 0.0
    %1419 = vmatprep.subr.mxu0 0.0
    %1420 = vmatpush2.msra.mxu0 0.0
    %1421 = vmatprep.subr.mxu0 0.0
    %1422 = vmatpush2.msra.mxu0 0.0
    %1423 = vmatprep.mubr.f32.mxu0 0.0
    %1424 = vmatmul.mubr.f32.gmra.mxu0 %v1286
    %v1425 = vpop.f32.mrf.mxu0
    %v1426 = vadd.f32 %v1281, %v1425
    %v1427 = vpop.f32.mrf.mxu0
    %v1428 = vadd.f32 %v1283, %v1427
    %1429 = vdwg.mxu0
    %v1430 = vadd.f32 %v1355, %v434
    %v1431 = vadd.f32 %v1357, %v438
    %v1432 = vadd.f32 %v1426, %v442
    %v1433 = vadd.f32 %v1428, %v446
    %v1434 = vxor.u32 %v1430, 2147483648
    %v1435 = vmul.f32 %v1434, 1.442695
    %v1436 = vpow.pop %v1435
    %v1437 = vadd.f32 %v1436, 1.0
    %v1438 = vrcp.pop %v1437
    %v1439 = vmul.f32 1.0, %v1438
    %v1440 = vxor.u32 %v1431, 2147483648
    %v1441 = vmul.f32 %v1440, 1.442695
    %v1442 = vpow.pop %v1441
    %v1443 = vadd.f32 %v1442, 1.0
    %v1444 = vrcp.pop %v1443
    %v1445 = vmul.f32 1.0, %v1444
    %v1446 = vtanh.pop %v1432
    %v1447 = vxor.u32 %v1433, 2147483648
    %v1448 = vmul.f32 %v1447, 1.442695
    %v1449 = vpow.pop %v1448
    %v1450 = vadd.f32 %v1449, 1.0
    %v1451 = vrcp.pop %v1450
    %v1452 = vmul.f32 1.0, %v1451
    %v1453 = vmul.f32 %v1445, %v1128
    %v1454 = vmul.f32 %v1439, %v1446
    %v1455 = vadd.f32 %v1453, %v1454
    %v1456 = vtanh.pop %v1455
    %v1457 = vmul.f32 %v1452, %v1456
    %s1458 = scalar_lea.vmem %s1, 24
    %v1459 = vld [vmem:[%s1458] sm:$0xff]
    %1461 = vset.pattern.permute.xlu0 0
    %1462 = vperm.xlu0 %1461, %v1459
    %v1463 = vpop.permute.xlu0 %1462
    %v1465 = vmul.f32 %v1457, %v1463
    %s1466 = scalar_lea.vmem [#allocation2], 24
    %1467 = vst [vmem:[%s1466] sm:$0xff] %v1465
    %s1468 = scalar_lea.vmem %s0, 32
    %v1469 = vld [vmem:[%s1468] sm:$0xff]
    %1470 = vmatprep.subr.mxu0 %v137
    %1471 = vmatpush1.msra.mxu0 %v136
    %1472 = vmatprep.subr.mxu0 %v133
    %1473 = vmatpush1.msra.mxu0 %v132
    %1474 = vmatprep.subr.mxu0 %v129
    %1475 = vmatpush1.msra.mxu0 %v128
    %1476 = vmatprep.subr.mxu0 %v125
    %1477 = vmatpush1.msra.mxu0 %v124
    %1478 = vmatprep.subr.mxu0 %v121
    %1479 = vmatpush1.msra.mxu0 %v120
    %1480 = vmatprep.subr.mxu0 %v117
    %1481 = vmatpush1.msra.mxu0 %v116
    %1482 = vmatprep.subr.mxu0 %v113
    %1483 = vmatpush1.msra.mxu0 %v112
    %1484 = vmatprep.subr.mxu0 %v109
    %1485 = vmatpush1.msra.mxu0 %v108
    %1486 = vmatprep.subr.mxu0 %v105
    %1487 = vmatpush1.msra.mxu0 %v104
    %1488 = vmatprep.subr.mxu0 %v101
    %1489 = vmatpush1.msra.mxu0 %v100
    %1490 = vmatprep.subr.mxu0 %v97
    %1491 = vmatpush1.msra.mxu0 %v96
    %1492 = vmatprep.subr.mxu0 %v93
    %1493 = vmatpush1.msra.mxu0 %v92
    %1494 = vmatprep.subr.mxu0 %v89
    %1495 = vmatpush1.msra.mxu0 %v88
    %1496 = vmatprep.subr.mxu0 %v85
    %1497 = vmatpush1.msra.mxu0 %v84
    %1498 = vmatprep.subr.mxu0 %v81
    %1499 = vmatpush1.msra.mxu0 %v80
    %1500 = vmatprep.subr.mxu0 %v77
    %1501 = vmatpush1.msra.mxu0 %v76
    %1502 = vmatprep.subr.mxu0 0.0
    %1503 = vmatpush2.msra.mxu0 0.0
    %1504 = vmatprep.subr.mxu0 0.0
    %1505 = vmatpush2.msra.mxu0 0.0
    %1506 = vmatprep.subr.mxu0 0.0
    %1507 = vmatpush2.msra.mxu0 0.0
    %1508 = vmatprep.subr.mxu0 0.0
    %1509 = vmatpush2.msra.mxu0 0.0
    %1510 = vmatprep.subr.mxu0 0.0
    %1511 = vmatpush2.msra.mxu0 0.0
    %1512 = vmatprep.subr.mxu0 0.0
    %1513 = vmatpush2.msra.mxu0 0.0
    %1514 = vmatprep.subr.mxu0 0.0
    %1515 = vmatpush2.msra.mxu0 0.0
    %1516 = vmatprep.subr.mxu0 0.0
    %1517 = vmatpush2.msra.mxu0 0.0
    %1518 = vmatprep.subr.mxu0 0.0
    %1519 = vmatpush2.msra.mxu0 0.0
    %1520 = vmatprep.subr.mxu0 0.0
    %1521 = vmatpush2.msra.mxu0 0.0
    %1522 = vmatprep.subr.mxu0 0.0
    %1523 = vmatpush2.msra.mxu0 0.0
    %1524 = vmatprep.subr.mxu0 0.0
    %1525 = vmatpush2.msra.mxu0 0.0
    %1526 = vmatprep.subr.mxu0 0.0
    %1527 = vmatpush2.msra.mxu0 0.0
    %1528 = vmatprep.subr.mxu0 0.0
    %1529 = vmatpush2.msra.mxu0 0.0
    %1530 = vmatprep.subr.mxu0 0.0
    %1531 = vmatpush2.msra.mxu0 0.0
    %1532 = vmatprep.subr.mxu0 0.0
    %1533 = vmatpush2.msra.mxu0 0.0
    %1534 = vmatprep.mubr.f32.mxu0 0.0
    %1535 = vmatmul.mubr.f32.gmra.mxu0 %v1457
    %v1536 = vpop.f32.mrf.mxu0
    %v1537 = vadd.f32 0.0, %v1536
    %v1538 = vpop.f32.mrf.mxu0
    %v1539 = vadd.f32 0.0, %v1538
    %1540 = vdwg.mxu0
    %1541 = vmatprep.subr.mxu0 %v139
    %1542 = vmatpush1.msra.mxu0 %v138
    %1543 = vmatprep.subr.mxu0 %v135
    %1544 = vmatpush1.msra.mxu0 %v134
    %1545 = vmatprep.subr.mxu0 %v131
    %1546 = vmatpush1.msra.mxu0 %v130
    %1547 = vmatprep.subr.mxu0 %v127
    %1548 = vmatpush1.msra.mxu0 %v126
    %1549 = vmatprep.subr.mxu0 %v123
    %1550 = vmatpush1.msra.mxu0 %v122
    %1551 = vmatprep.subr.mxu0 %v119
    %1552 = vmatpush1.msra.mxu0 %v118
    %1553 = vmatprep.subr.mxu0 %v115
    %1554 = vmatpush1.msra.mxu0 %v114
    %1555 = vmatprep.subr.mxu0 %v111
    %1556 = vmatpush1.msra.mxu0 %v110
    %1557 = vmatprep.subr.mxu0 %v107
    %1558 = vmatpush1.msra.mxu0 %v106
    %1559 = vmatprep.subr.mxu0 %v103
    %1560 = vmatpush1.msra.mxu0 %v102
    %1561 = vmatprep.subr.mxu0 %v99
    %1562 = vmatpush1.msra.mxu0 %v98
    %1563 = vmatprep.subr.mxu0 %v95
    %1564 = vmatpush1.msra.mxu0 %v94
    %1565 = vmatprep.subr.mxu0 %v91
    %1566 = vmatpush1.msra.mxu0 %v90
    %1567 = vmatprep.subr.mxu0 %v87
    %1568 = vmatpush1.msra.mxu0 %v86
    %1569 = vmatprep.subr.mxu0 %v83
    %1570 = vmatpush1.msra.mxu0 %v82
    %1571 = vmatprep.subr.mxu0 %v79
    %1572 = vmatpush1.msra.mxu0 %v78
    %1573 = vmatprep.subr.mxu0 0.0
    %1574 = vmatpush2.msra.mxu0 0.0
    %1575 = vmatprep.subr.mxu0 0.0
    %1576 = vmatpush2.msra.mxu0 0.0
    %1577 = vmatprep.subr.mxu0 0.0
    %1578 = vmatpush2.msra.mxu0 0.0
    %1579 = vmatprep.subr.mxu0 0.0
    %1580 = vmatpush2.msra.mxu0 0.0
    %1581 = vmatprep.subr.mxu0 0.0
    %1582 = vmatpush2.msra.mxu0 0.0
    %1583 = vmatprep.subr.mxu0 0.0
    %1584 = vmatpush2.msra.mxu0 0.0
    %1585 = vmatprep.subr.mxu0 0.0
    %1586 = vmatpush2.msra.mxu0 0.0
    %1587 = vmatprep.subr.mxu0 0.0
    %1588 = vmatpush2.msra.mxu0 0.0
    %1589 = vmatprep.subr.mxu0 0.0
    %1590 = vmatpush2.msra.mxu0 0.0
    %1591 = vmatprep.subr.mxu0 0.0
    %1592 = vmatpush2.msra.mxu0 0.0
    %1593 = vmatprep.subr.mxu0 0.0
    %1594 = vmatpush2.msra.mxu0 0.0
    %1595 = vmatprep.subr.mxu0 0.0
    %1596 = vmatpush2.msra.mxu0 0.0
    %1597 = vmatprep.subr.mxu0 0.0
    %1598 = vmatpush2.msra.mxu0 0.0
    %1599 = vmatprep.subr.mxu0 0.0
    %1600 = vmatpush2.msra.mxu0 0.0
    %1601 = vmatprep.subr.mxu0 0.0
    %1602 = vmatpush2.msra.mxu0 0.0
    %1603 = vmatprep.subr.mxu0 0.0
    %1604 = vmatpush2.msra.mxu0 0.0
    %1605 = vmatprep.mubr.f32.mxu0 0.0
    %1606 = vmatmul.mubr.f32.gmra.mxu0 %v1457
    %v1607 = vpop.f32.mrf.mxu0
    %v1608 = vadd.f32 0.0, %v1607
    %v1609 = vpop.f32.mrf.mxu0
    %v1610 = vadd.f32 0.0, %v1609
    %1611 = vdwg.mxu0
    %v1613 = vsel %vm284, %v1469, 0
    %1615 = vmatprep.subr.mxu0 0.0
    %1616 = vmatpush1.msra.mxu0 0.0
    %1617 = vmatprep.subr.mxu0 0.0
    %1618 = vmatpush1.msra.mxu0 0.0
    %1619 = vmatprep.subr.mxu0 0.0
    %1620 = vmatpush1.msra.mxu0 0.0
    %1621 = vmatprep.subr.mxu0 0.0
    %1622 = vmatpush1.msra.mxu0 0.0
    %1623 = vmatprep.subr.mxu0 0.0
    %1624 = vmatpush1.msra.mxu0 0.0
    %1625 = vmatprep.subr.mxu0 0.0
    %1626 = vmatpush1.msra.mxu0 0.0
    %1627 = vmatprep.subr.mxu0 0.0
    %1628 = vmatpush1.msra.mxu0 0.0
    %1629 = vmatprep.subr.mxu0 0.0
    %1630 = vmatpush1.msra.mxu0 0.0
    %1631 = vmatprep.subr.mxu0 0.0
    %1632 = vmatpush1.msra.mxu0 0.0
    %1633 = vmatprep.subr.mxu0 0.0
    %1634 = vmatpush1.msra.mxu0 0.0
    %1635 = vmatprep.subr.mxu0 0.0
    %1636 = vmatpush1.msra.mxu0 0.0
    %1637 = vmatprep.subr.mxu0 0.0
    %1638 = vmatpush1.msra.mxu0 0.0
    %1639 = vmatprep.subr.mxu0 0.0
    %1640 = vmatpush1.msra.mxu0 0.0
    %1641 = vmatprep.subr.mxu0 0.0
    %1642 = vmatpush1.msra.mxu0 0.0
    %1643 = vmatprep.subr.mxu0 %v73
    %1644 = vmatpush1.msra.mxu0 %v72
    %1645 = vmatprep.subr.mxu0 %v69
    %1646 = vmatpush1.msra.mxu0 %v68
    %1647 = vmatprep.subr.mxu0 0.0
    %1648 = vmatpush2.msra.mxu0 0.0
    %1649 = vmatprep.subr.mxu0 0.0
    %1650 = vmatpush2.msra.mxu0 0.0
    %1651 = vmatprep.subr.mxu0 0.0
    %1652 = vmatpush2.msra.mxu0 0.0
    %1653 = vmatprep.subr.mxu0 0.0
    %1654 = vmatpush2.msra.mxu0 0.0
    %1655 = vmatprep.subr.mxu0 0.0
    %1656 = vmatpush2.msra.mxu0 0.0
    %1657 = vmatprep.subr.mxu0 0.0
    %1658 = vmatpush2.msra.mxu0 0.0
    %1659 = vmatprep.subr.mxu0 0.0
    %1660 = vmatpush2.msra.mxu0 0.0
    %1661 = vmatprep.subr.mxu0 0.0
    %1662 = vmatpush2.msra.mxu0 0.0
    %1663 = vmatprep.subr.mxu0 0.0
    %1664 = vmatpush2.msra.mxu0 0.0
    %1665 = vmatprep.subr.mxu0 0.0
    %1666 = vmatpush2.msra.mxu0 0.0
    %1667 = vmatprep.subr.mxu0 0.0
    %1668 = vmatpush2.msra.mxu0 0.0
    %1669 = vmatprep.subr.mxu0 0.0
    %1670 = vmatpush2.msra.mxu0 0.0
    %1671 = vmatprep.subr.mxu0 0.0
    %1672 = vmatpush2.msra.mxu0 0.0
    %1673 = vmatprep.subr.mxu0 0.0
    %1674 = vmatpush2.msra.mxu0 0.0
    %1675 = vmatprep.subr.mxu0 0.0
    %1676 = vmatpush2.msra.mxu0 0.0
    %1677 = vmatprep.subr.mxu0 0.0
    %1678 = vmatpush2.msra.mxu0 0.0
    %1679 = vmatprep.mubr.f32.mxu0 0.0
    %1680 = vmatmul.mubr.f32.gmra.mxu0 %v1613
    %v1681 = vpop.f32.mrf.mxu0
    %v1682 = vadd.f32 %v1537, %v1681
    %v1683 = vpop.f32.mrf.mxu0
    %v1684 = vadd.f32 %v1539, %v1683
    %1685 = vdwg.mxu0
    %1686 = vmatprep.subr.mxu0 0.0
    %1687 = vmatpush1.msra.mxu0 0.0
    %1688 = vmatprep.subr.mxu0 0.0
    %1689 = vmatpush1.msra.mxu0 0.0
    %1690 = vmatprep.subr.mxu0 0.0
    %1691 = vmatpush1.msra.mxu0 0.0
    %1692 = vmatprep.subr.mxu0 0.0
    %1693 = vmatpush1.msra.mxu0 0.0
    %1694 = vmatprep.subr.mxu0 0.0
    %1695 = vmatpush1.msra.mxu0 0.0
    %1696 = vmatprep.subr.mxu0 0.0
    %1697 = vmatpush1.msra.mxu0 0.0
    %1698 = vmatprep.subr.mxu0 0.0
    %1699 = vmatpush1.msra.mxu0 0.0
    %1700 = vmatprep.subr.mxu0 0.0
    %1701 = vmatpush1.msra.mxu0 0.0
    %1702 = vmatprep.subr.mxu0 0.0
    %1703 = vmatpush1.msra.mxu0 0.0
    %1704 = vmatprep.subr.mxu0 0.0
    %1705 = vmatpush1.msra.mxu0 0.0
    %1706 = vmatprep.subr.mxu0 0.0
    %1707 = vmatpush1.msra.mxu0 0.0
    %1708 = vmatprep.subr.mxu0 0.0
    %1709 = vmatpush1.msra.mxu0 0.0
    %1710 = vmatprep.subr.mxu0 0.0
    %1711 = vmatpush1.msra.mxu0 0.0
    %1712 = vmatprep.subr.mxu0 0.0
    %1713 = vmatpush1.msra.mxu0 0.0
    %1714 = vmatprep.subr.mxu0 %v75
    %1715 = vmatpush1.msra.mxu0 %v74
    %1716 = vmatprep.subr.mxu0 %v71
    %1717 = vmatpush1.msra.mxu0 %v70
    %1718 = vmatprep.subr.mxu0 0.0
    %1719 = vmatpush2.msra.mxu0 0.0
    %1720 = vmatprep.subr.mxu0 0.0
    %1721 = vmatpush2.msra.mxu0 0.0
    %1722 = vmatprep.subr.mxu0 0.0
    %1723 = vmatpush2.msra.mxu0 0.0
    %1724 = vmatprep.subr.mxu0 0.0
    %1725 = vmatpush2.msra.mxu0 0.0
    %1726 = vmatprep.subr.mxu0 0.0
    %1727 = vmatpush2.msra.mxu0 0.0
    %1728 = vmatprep.subr.mxu0 0.0
    %1729 = vmatpush2.msra.mxu0 0.0
    %1730 = vmatprep.subr.mxu0 0.0
    %1731 = vmatpush2.msra.mxu0 0.0
    %1732 = vmatprep.subr.mxu0 0.0
    %1733 = vmatpush2.msra.mxu0 0.0
    %1734 = vmatprep.subr.mxu0 0.0
    %1735 = vmatpush2.msra.mxu0 0.0
    %1736 = vmatprep.subr.mxu0 0.0
    %1737 = vmatpush2.msra.mxu0 0.0
    %1738 = vmatprep.subr.mxu0 0.0
    %1739 = vmatpush2.msra.mxu0 0.0
    %1740 = vmatprep.subr.mxu0 0.0
    %1741 = vmatpush2.msra.mxu0 0.0
    %1742 = vmatprep.subr.mxu0 0.0
    %1743 = vmatpush2.msra.mxu0 0.0
    %1744 = vmatprep.subr.mxu0 0.0
    %1745 = vmatpush2.msra.mxu0 0.0
    %1746 = vmatprep.subr.mxu0 0.0
    %1747 = vmatpush2.msra.mxu0 0.0
    %1748 = vmatprep.subr.mxu0 0.0
    %1749 = vmatpush2.msra.mxu0 0.0
    %1750 = vmatprep.mubr.f32.mxu0 0.0
    %1751 = vmatmul.mubr.f32.gmra.mxu0 %v1613
    %v1752 = vpop.f32.mrf.mxu0
    %v1753 = vadd.f32 %v1608, %v1752
    %v1754 = vpop.f32.mrf.mxu0
    %v1755 = vadd.f32 %v1610, %v1754
    %1756 = vdwg.mxu0
    %v1757 = vadd.f32 %v1682, %v434
    %v1758 = vadd.f32 %v1684, %v438
    %v1759 = vadd.f32 %v1753, %v442
    %v1760 = vadd.f32 %v1755, %v446
    %v1761 = vxor.u32 %v1757, 2147483648
    %v1762 = vmul.f32 %v1761, 1.442695
    %v1763 = vpow.pop %v1762
    %v1764 = vadd.f32 %v1763, 1.0
    %v1765 = vrcp.pop %v1764
    %v1766 = vmul.f32 1.0, %v1765
    %v1767 = vxor.u32 %v1758, 2147483648
    %v1768 = vmul.f32 %v1767, 1.442695
    %v1769 = vpow.pop %v1768
    %v1770 = vadd.f32 %v1769, 1.0
    %v1771 = vrcp.pop %v1770
    %v1772 = vmul.f32 1.0, %v1771
    %v1773 = vtanh.pop %v1759
    %v1774 = vxor.u32 %v1760, 2147483648
    %v1775 = vmul.f32 %v1774, 1.442695
    %v1776 = vpow.pop %v1775
    %v1777 = vadd.f32 %v1776, 1.0
    %v1778 = vrcp.pop %v1777
    %v1779 = vmul.f32 1.0, %v1778
    %v1780 = vmul.f32 %v1772, %v1455
    %v1781 = vmul.f32 %v1766, %v1773
    %v1782 = vadd.f32 %v1780, %v1781
    %v1783 = vtanh.pop %v1782
    %v1784 = vmul.f32 %v1779, %v1783
    %s1785 = scalar_lea.vmem %s1, 32
    %v1786 = vld [vmem:[%s1785] sm:$0xff]
    %1788 = vset.pattern.permute.xlu0 0
    %1789 = vperm.xlu0 %1788, %v1786
    %v1790 = vpop.permute.xlu0 %1789
    %v1792 = vmul.f32 %v1784, %v1790
    %s1793 = scalar_lea.vmem [#allocation2], 32
    %1794 = vst [vmem:[%s1793] sm:$0xff] %v1792
    %s1795 = scalar_lea.vmem %s0, 40
    %v1796 = vld [vmem:[%s1795] sm:$0xff]
    %1797 = vmatprep.subr.mxu0 %v137
    %1798 = vmatpush1.msra.mxu0 %v136
    %1799 = vmatprep.subr.mxu0 %v133
    %1800 = vmatpush1.msra.mxu0 %v132
    %1801 = vmatprep.subr.mxu0 %v129
    %1802 = vmatpush1.msra.mxu0 %v128
    %1803 = vmatprep.subr.mxu0 %v125
    %1804 = vmatpush1.msra.mxu0 %v124
    %1805 = vmatprep.subr.mxu0 %v121
    %1806 = vmatpush1.msra.mxu0 %v120
    %1807 = vmatprep.subr.mxu0 %v117
    %1808 = vmatpush1.msra.mxu0 %v116
    %1809 = vmatprep.subr.mxu0 %v113
    %1810 = vmatpush1.msra.mxu0 %v112
    %1811 = vmatprep.subr.mxu0 %v109
    %1812 = vmatpush1.msra.mxu0 %v108
    %1813 = vmatprep.subr.mxu0 %v105
    %1814 = vmatpush1.msra.mxu0 %v104
    %1815 = vmatprep.subr.mxu0 %v101
    %1816 = vmatpush1.msra.mxu0 %v100
    %1817 = vmatprep.subr.mxu0 %v97
    %1818 = vmatpush1.msra.mxu0 %v96
    %1819 = vmatprep.subr.mxu0 %v93
    %1820 = vmatpush1.msra.mxu0 %v92
    %1821 = vmatprep.subr.mxu0 %v89
    %1822 = vmatpush1.msra.mxu0 %v88
    %1823 = vmatprep.subr.mxu0 %v85
    %1824 = vmatpush1.msra.mxu0 %v84
    %1825 = vmatprep.subr.mxu0 %v81
    %1826 = vmatpush1.msra.mxu0 %v80
    %1827 = vmatprep.subr.mxu0 %v77
    %1828 = vmatpush1.msra.mxu0 %v76
    %1829 = vmatprep.subr.mxu0 0.0
    %1830 = vmatpush2.msra.mxu0 0.0
    %1831 = vmatprep.subr.mxu0 0.0
    %1832 = vmatpush2.msra.mxu0 0.0
    %1833 = vmatprep.subr.mxu0 0.0
    %1834 = vmatpush2.msra.mxu0 0.0
    %1835 = vmatprep.subr.mxu0 0.0
    %1836 = vmatpush2.msra.mxu0 0.0
    %1837 = vmatprep.subr.mxu0 0.0
    %1838 = vmatpush2.msra.mxu0 0.0
    %1839 = vmatprep.subr.mxu0 0.0
    %1840 = vmatpush2.msra.mxu0 0.0
    %1841 = vmatprep.subr.mxu0 0.0
    %1842 = vmatpush2.msra.mxu0 0.0
    %1843 = vmatprep.subr.mxu0 0.0
    %1844 = vmatpush2.msra.mxu0 0.0
    %1845 = vmatprep.subr.mxu0 0.0
    %1846 = vmatpush2.msra.mxu0 0.0
    %1847 = vmatprep.subr.mxu0 0.0
    %1848 = vmatpush2.msra.mxu0 0.0
    %1849 = vmatprep.subr.mxu0 0.0
    %1850 = vmatpush2.msra.mxu0 0.0
    %1851 = vmatprep.subr.mxu0 0.0
    %1852 = vmatpush2.msra.mxu0 0.0
    %1853 = vmatprep.subr.mxu0 0.0
    %1854 = vmatpush2.msra.mxu0 0.0
    %1855 = vmatprep.subr.mxu0 0.0
    %1856 = vmatpush2.msra.mxu0 0.0
    %1857 = vmatprep.subr.mxu0 0.0
    %1858 = vmatpush2.msra.mxu0 0.0
    %1859 = vmatprep.subr.mxu0 0.0
    %1860 = vmatpush2.msra.mxu0 0.0
    %1861 = vmatprep.mubr.f32.mxu0 0.0
    %1862 = vmatmul.mubr.f32.gmra.mxu0 %v1784
    %v1863 = vpop.f32.mrf.mxu0
    %v1864 = vadd.f32 0.0, %v1863
    %v1865 = vpop.f32.mrf.mxu0
    %v1866 = vadd.f32 0.0, %v1865
    %1867 = vdwg.mxu0
    %1868 = vmatprep.subr.mxu0 %v139
    %1869 = vmatpush1.msra.mxu0 %v138
    %1870 = vmatprep.subr.mxu0 %v135
    %1871 = vmatpush1.msra.mxu0 %v134
    %1872 = vmatprep.subr.mxu0 %v131
    %1873 = vmatpush1.msra.mxu0 %v130
    %1874 = vmatprep.subr.mxu0 %v127
    %1875 = vmatpush1.msra.mxu0 %v126
    %1876 = vmatprep.subr.mxu0 %v123
    %1877 = vmatpush1.msra.mxu0 %v122
    %1878 = vmatprep.subr.mxu0 %v119
    %1879 = vmatpush1.msra.mxu0 %v118
    %1880 = vmatprep.subr.mxu0 %v115
    %1881 = vmatpush1.msra.mxu0 %v114
    %1882 = vmatprep.subr.mxu0 %v111
    %1883 = vmatpush1.msra.mxu0 %v110
    %1884 = vmatprep.subr.mxu0 %v107
    %1885 = vmatpush1.msra.mxu0 %v106
    %1886 = vmatprep.subr.mxu0 %v103
    %1887 = vmatpush1.msra.mxu0 %v102
    %1888 = vmatprep.subr.mxu0 %v99
    %1889 = vmatpush1.msra.mxu0 %v98
    %1890 = vmatprep.subr.mxu0 %v95
    %1891 = vmatpush1.msra.mxu0 %v94
    %1892 = vmatprep.subr.mxu0 %v91
    %1893 = vmatpush1.msra.mxu0 %v90
    %1894 = vmatprep.subr.mxu0 %v87
    %1895 = vmatpush1.msra.mxu0 %v86
    %1896 = vmatprep.subr.mxu0 %v83
    %1897 = vmatpush1.msra.mxu0 %v82
    %1898 = vmatprep.subr.mxu0 %v79
    %1899 = vmatpush1.msra.mxu0 %v78
    %1900 = vmatprep.subr.mxu0 0.0
    %1901 = vmatpush2.msra.mxu0 0.0
    %1902 = vmatprep.subr.mxu0 0.0
    %1903 = vmatpush2.msra.mxu0 0.0
    %1904 = vmatprep.subr.mxu0 0.0
    %1905 = vmatpush2.msra.mxu0 0.0
    %1906 = vmatprep.subr.mxu0 0.0
    %1907 = vmatpush2.msra.mxu0 0.0
    %1908 = vmatprep.subr.mxu0 0.0
    %1909 = vmatpush2.msra.mxu0 0.0
    %1910 = vmatprep.subr.mxu0 0.0
    %1911 = vmatpush2.msra.mxu0 0.0
    %1912 = vmatprep.subr.mxu0 0.0
    %1913 = vmatpush2.msra.mxu0 0.0
    %1914 = vmatprep.subr.mxu0 0.0
    %1915 = vmatpush2.msra.mxu0 0.0
    %1916 = vmatprep.subr.mxu0 0.0
    %1917 = vmatpush2.msra.mxu0 0.0
    %1918 = vmatprep.subr.mxu0 0.0
    %1919 = vmatpush2.msra.mxu0 0.0
    %1920 = vmatprep.subr.mxu0 0.0
    %1921 = vmatpush2.msra.mxu0 0.0
    %1922 = vmatprep.subr.mxu0 0.0
    %1923 = vmatpush2.msra.mxu0 0.0
    %1924 = vmatprep.subr.mxu0 0.0
    %1925 = vmatpush2.msra.mxu0 0.0
    %1926 = vmatprep.subr.mxu0 0.0
    %1927 = vmatpush2.msra.mxu0 0.0
    %1928 = vmatprep.subr.mxu0 0.0
    %1929 = vmatpush2.msra.mxu0 0.0
    %1930 = vmatprep.subr.mxu0 0.0
    %1931 = vmatpush2.msra.mxu0 0.0
    %1932 = vmatprep.mubr.f32.mxu0 0.0
    %1933 = vmatmul.mubr.f32.gmra.mxu0 %v1784
    %v1934 = vpop.f32.mrf.mxu0
    %v1935 = vadd.f32 0.0, %v1934
    %v1936 = vpop.f32.mrf.mxu0
    %v1937 = vadd.f32 0.0, %v1936
    %1938 = vdwg.mxu0
    %v1940 = vsel %vm284, %v1796, 0
    %1942 = vmatprep.subr.mxu0 0.0
    %1943 = vmatpush1.msra.mxu0 0.0
    %1944 = vmatprep.subr.mxu0 0.0
    %1945 = vmatpush1.msra.mxu0 0.0
    %1946 = vmatprep.subr.mxu0 0.0
    %1947 = vmatpush1.msra.mxu0 0.0
    %1948 = vmatprep.subr.mxu0 0.0
    %1949 = vmatpush1.msra.mxu0 0.0
    %1950 = vmatprep.subr.mxu0 0.0
    %1951 = vmatpush1.msra.mxu0 0.0
    %1952 = vmatprep.subr.mxu0 0.0
    %1953 = vmatpush1.msra.mxu0 0.0
    %1954 = vmatprep.subr.mxu0 0.0
    %1955 = vmatpush1.msra.mxu0 0.0
    %1956 = vmatprep.subr.mxu0 0.0
    %1957 = vmatpush1.msra.mxu0 0.0
    %1958 = vmatprep.subr.mxu0 0.0
    %1959 = vmatpush1.msra.mxu0 0.0
    %1960 = vmatprep.subr.mxu0 0.0
    %1961 = vmatpush1.msra.mxu0 0.0
    %1962 = vmatprep.subr.mxu0 0.0
    %1963 = vmatpush1.msra.mxu0 0.0
    %1964 = vmatprep.subr.mxu0 0.0
    %1965 = vmatpush1.msra.mxu0 0.0
    %1966 = vmatprep.subr.mxu0 0.0
    %1967 = vmatpush1.msra.mxu0 0.0
    %1968 = vmatprep.subr.mxu0 0.0
    %1969 = vmatpush1.msra.mxu0 0.0
    %1970 = vmatprep.subr.mxu0 %v73
    %1971 = vmatpush1.msra.mxu0 %v72
    %1972 = vmatprep.subr.mxu0 %v69
    %1973 = vmatpush1.msra.mxu0 %v68
    %1974 = vmatprep.subr.mxu0 0.0
    %1975 = vmatpush2.msra.mxu0 0.0
    %1976 = vmatprep.subr.mxu0 0.0
    %1977 = vmatpush2.msra.mxu0 0.0
    %1978 = vmatprep.subr.mxu0 0.0
    %1979 = vmatpush2.msra.mxu0 0.0
    %1980 = vmatprep.subr.mxu0 0.0
    %1981 = vmatpush2.msra.mxu0 0.0
    %1982 = vmatprep.subr.mxu0 0.0
    %1983 = vmatpush2.msra.mxu0 0.0
    %1984 = vmatprep.subr.mxu0 0.0
    %1985 = vmatpush2.msra.mxu0 0.0
    %1986 = vmatprep.subr.mxu0 0.0
    %1987 = vmatpush2.msra.mxu0 0.0
    %1988 = vmatprep.subr.mxu0 0.0
    %1989 = vmatpush2.msra.mxu0 0.0
    %1990 = vmatprep.subr.mxu0 0.0
    %1991 = vmatpush2.msra.mxu0 0.0
    %1992 = vmatprep.subr.mxu0 0.0
    %1993 = vmatpush2.msra.mxu0 0.0
    %1994 = vmatprep.subr.mxu0 0.0
    %1995 = vmatpush2.msra.mxu0 0.0
    %1996 = vmatprep.subr.mxu0 0.0
    %1997 = vmatpush2.msra.mxu0 0.0
    %1998 = vmatprep.subr.mxu0 0.0
    %1999 = vmatpush2.msra.mxu0 0.0
    %2000 = vmatprep.subr.mxu0 0.0
    %2001 = vmatpush2.msra.mxu0 0.0
    %2002 = vmatprep.subr.mxu0 0.0
    %2003 = vmatpush2.msra.mxu0 0.0
    %2004 = vmatprep.subr.mxu0 0.0
    %2005 = vmatpush2.msra.mxu0 0.0
    %2006 = vmatprep.mubr.f32.mxu0 0.0
    %2007 = vmatmul.mubr.f32.gmra.mxu0 %v1940
    %v2008 = vpop.f32.mrf.mxu0
    %v2009 = vadd.f32 %v1864, %v2008
    %v2010 = vpop.f32.mrf.mxu0
    %v2011 = vadd.f32 %v1866, %v2010
    %2012 = vdwg.mxu0
    %2013 = vmatprep.subr.mxu0 0.0
    %2014 = vmatpush1.msra.mxu0 0.0
    %2015 = vmatprep.subr.mxu0 0.0
    %2016 = vmatpush1.msra.mxu0 0.0
    %2017 = vmatprep.subr.mxu0 0.0
    %2018 = vmatpush1.msra.mxu0 0.0
    %2019 = vmatprep.subr.mxu0 0.0
    %2020 = vmatpush1.msra.mxu0 0.0
    %2021 = vmatprep.subr.mxu0 0.0
    %2022 = vmatpush1.msra.mxu0 0.0
    %2023 = vmatprep.subr.mxu0 0.0
    %2024 = vmatpush1.msra.mxu0 0.0
    %2025 = vmatprep.subr.mxu0 0.0
    %2026 = vmatpush1.msra.mxu0 0.0
    %2027 = vmatprep.subr.mxu0 0.0
    %2028 = vmatpush1.msra.mxu0 0.0
    %2029 = vmatprep.subr.mxu0 0.0
    %2030 = vmatpush1.msra.mxu0 0.0
    %2031 = vmatprep.subr.mxu0 0.0
    %2032 = vmatpush1.msra.mxu0 0.0
    %2033 = vmatprep.subr.mxu0 0.0
    %2034 = vmatpush1.msra.mxu0 0.0
    %2035 = vmatprep.subr.mxu0 0.0
    %2036 = vmatpush1.msra.mxu0 0.0
    %2037 = vmatprep.subr.mxu0 0.0
    %2038 = vmatpush1.msra.mxu0 0.0
    %2039 = vmatprep.subr.mxu0 0.0
    %2040 = vmatpush1.msra.mxu0 0.0
    %2041 = vmatprep.subr.mxu0 %v75
    %2042 = vmatpush1.msra.mxu0 %v74
    %2043 = vmatprep.subr.mxu0 %v71
    %2044 = vmatpush1.msra.mxu0 %v70
    %2045 = vmatprep.subr.mxu0 0.0
    %2046 = vmatpush2.msra.mxu0 0.0
    %2047 = vmatprep.subr.mxu0 0.0
    %2048 = vmatpush2.msra.mxu0 0.0
    %2049 = vmatprep.subr.mxu0 0.0
    %2050 = vmatpush2.msra.mxu0 0.0
    %2051 = vmatprep.subr.mxu0 0.0
    %2052 = vmatpush2.msra.mxu0 0.0
    %2053 = vmatprep.subr.mxu0 0.0
    %2054 = vmatpush2.msra.mxu0 0.0
    %2055 = vmatprep.subr.mxu0 0.0
    %2056 = vmatpush2.msra.mxu0 0.0
    %2057 = vmatprep.subr.mxu0 0.0
    %2058 = vmatpush2.msra.mxu0 0.0
    %2059 = vmatprep.subr.mxu0 0.0
    %2060 = vmatpush2.msra.mxu0 0.0
    %2061 = vmatprep.subr.mxu0 0.0
    %2062 = vmatpush2.msra.mxu0 0.0
    %2063 = vmatprep.subr.mxu0 0.0
    %2064 = vmatpush2.msra.mxu0 0.0
    %2065 = vmatprep.subr.mxu0 0.0
    %2066 = vmatpush2.msra.mxu0 0.0
    %2067 = vmatprep.subr.mxu0 0.0
    %2068 = vmatpush2.msra.mxu0 0.0
    %2069 = vmatprep.subr.mxu0 0.0
    %2070 = vmatpush2.msra.mxu0 0.0
    %2071 = vmatprep.subr.mxu0 0.0
    %2072 = vmatpush2.msra.mxu0 0.0
    %2073 = vmatprep.subr.mxu0 0.0
    %2074 = vmatpush2.msra.mxu0 0.0
    %2075 = vmatprep.subr.mxu0 0.0
    %2076 = vmatpush2.msra.mxu0 0.0
    %2077 = vmatprep.mubr.f32.mxu0 0.0
    %2078 = vmatmul.mubr.f32.gmra.mxu0 %v1940
    %v2079 = vpop.f32.mrf.mxu0
    %v2080 = vadd.f32 %v1935, %v2079
    %v2081 = vpop.f32.mrf.mxu0
    %v2082 = vadd.f32 %v1937, %v2081
    %2083 = vdwg.mxu0
    %v2084 = vadd.f32 %v2009, %v434
    %v2085 = vadd.f32 %v2011, %v438
    %v2086 = vadd.f32 %v2080, %v442
    %v2087 = vadd.f32 %v2082, %v446
    %v2088 = vxor.u32 %v2084, 2147483648
    %v2089 = vmul.f32 %v2088, 1.442695
    %v2090 = vpow.pop %v2089
    %v2091 = vadd.f32 %v2090, 1.0
    %v2092 = vrcp.pop %v2091
    %v2093 = vmul.f32 1.0, %v2092
    %v2094 = vxor.u32 %v2085, 2147483648
    %v2095 = vmul.f32 %v2094, 1.442695
    %v2096 = vpow.pop %v2095
    %v2097 = vadd.f32 %v2096, 1.0
    %v2098 = vrcp.pop %v2097
    %v2099 = vmul.f32 1.0, %v2098
    %v2100 = vtanh.pop %v2086
    %v2101 = vxor.u32 %v2087, 2147483648
    %v2102 = vmul.f32 %v2101, 1.442695
    %v2103 = vpow.pop %v2102
    %v2104 = vadd.f32 %v2103, 1.0
    %v2105 = vrcp.pop %v2104
    %v2106 = vmul.f32 1.0, %v2105
    %v2107 = vmul.f32 %v2099, %v1782
    %v2108 = vmul.f32 %v2093, %v2100
    %v2109 = vadd.f32 %v2107, %v2108
    %v2110 = vtanh.pop %v2109
    %v2111 = vmul.f32 %v2106, %v2110
    %s2112 = scalar_lea.vmem %s1, 40
    %v2113 = vld [vmem:[%s2112] sm:$0xff]
    %2115 = vset.pattern.permute.xlu0 0
    %2116 = vperm.xlu0 %2115, %v2113
    %v2117 = vpop.permute.xlu0 %2116
    %v2119 = vmul.f32 %v2111, %v2117
    %s2120 = scalar_lea.vmem [#allocation2], 40
    %2121 = vst [vmem:[%s2120] sm:$0xff] %v2119
    %s2122 = scalar_lea.vmem %s0, 48
    %v2123 = vld [vmem:[%s2122] sm:$0xff]
    %2124 = vmatprep.subr.mxu0 %v137
    %2125 = vmatpush1.msra.mxu0 %v136
    %2126 = vmatprep.subr.mxu0 %v133
    %2127 = vmatpush1.msra.mxu0 %v132
    %2128 = vmatprep.subr.mxu0 %v129
    %2129 = vmatpush1.msra.mxu0 %v128
    %2130 = vmatprep.subr.mxu0 %v125
    %2131 = vmatpush1.msra.mxu0 %v124
    %2132 = vmatprep.subr.mxu0 %v121
    %2133 = vmatpush1.msra.mxu0 %v120
    %2134 = vmatprep.subr.mxu0 %v117
    %2135 = vmatpush1.msra.mxu0 %v116
    %2136 = vmatprep.subr.mxu0 %v113
    %2137 = vmatpush1.msra.mxu0 %v112
    %2138 = vmatprep.subr.mxu0 %v109
    %2139 = vmatpush1.msra.mxu0 %v108
    %2140 = vmatprep.subr.mxu0 %v105
    %2141 = vmatpush1.msra.mxu0 %v104
    %2142 = vmatprep.subr.mxu0 %v101
    %2143 = vmatpush1.msra.mxu0 %v100
    %2144 = vmatprep.subr.mxu0 %v97
    %2145 = vmatpush1.msra.mxu0 %v96
    %2146 = vmatprep.subr.mxu0 %v93
    %2147 = vmatpush1.msra.mxu0 %v92
    %2148 = vmatprep.subr.mxu0 %v89
    %2149 = vmatpush1.msra.mxu0 %v88
    %2150 = vmatprep.subr.mxu0 %v85
    %2151 = vmatpush1.msra.mxu0 %v84
    %2152 = vmatprep.subr.mxu0 %v81
    %2153 = vmatpush1.msra.mxu0 %v80
    %2154 = vmatprep.subr.mxu0 %v77
    %2155 = vmatpush1.msra.mxu0 %v76
    %2156 = vmatprep.subr.mxu0 0.0
    %2157 = vmatpush2.msra.mxu0 0.0
    %2158 = vmatprep.subr.mxu0 0.0
    %2159 = vmatpush2.msra.mxu0 0.0
    %2160 = vmatprep.subr.mxu0 0.0
    %2161 = vmatpush2.msra.mxu0 0.0
    %2162 = vmatprep.subr.mxu0 0.0
    %2163 = vmatpush2.msra.mxu0 0.0
    %2164 = vmatprep.subr.mxu0 0.0
    %2165 = vmatpush2.msra.mxu0 0.0
    %2166 = vmatprep.subr.mxu0 0.0
    %2167 = vmatpush2.msra.mxu0 0.0
    %2168 = vmatprep.subr.mxu0 0.0
    %2169 = vmatpush2.msra.mxu0 0.0
    %2170 = vmatprep.subr.mxu0 0.0
    %2171 = vmatpush2.msra.mxu0 0.0
    %2172 = vmatprep.subr.mxu0 0.0
    %2173 = vmatpush2.msra.mxu0 0.0
    %2174 = vmatprep.subr.mxu0 0.0
    %2175 = vmatpush2.msra.mxu0 0.0
    %2176 = vmatprep.subr.mxu0 0.0
    %2177 = vmatpush2.msra.mxu0 0.0
    %2178 = vmatprep.subr.mxu0 0.0
    %2179 = vmatpush2.msra.mxu0 0.0
    %2180 = vmatprep.subr.mxu0 0.0
    %2181 = vmatpush2.msra.mxu0 0.0
    %2182 = vmatprep.subr.mxu0 0.0
    %2183 = vmatpush2.msra.mxu0 0.0
    %2184 = vmatprep.subr.mxu0 0.0
    %2185 = vmatpush2.msra.mxu0 0.0
    %2186 = vmatprep.subr.mxu0 0.0
    %2187 = vmatpush2.msra.mxu0 0.0
    %2188 = vmatprep.mubr.f32.mxu0 0.0
    %2189 = vmatmul.mubr.f32.gmra.mxu0 %v2111
    %v2190 = vpop.f32.mrf.mxu0
    %v2191 = vadd.f32 0.0, %v2190
    %v2192 = vpop.f32.mrf.mxu0
    %v2193 = vadd.f32 0.0, %v2192
    %2194 = vdwg.mxu0
    %2195 = vmatprep.subr.mxu0 %v139
    %2196 = vmatpush1.msra.mxu0 %v138
    %2197 = vmatprep.subr.mxu0 %v135
    %2198 = vmatpush1.msra.mxu0 %v134
    %2199 = vmatprep.subr.mxu0 %v131
    %2200 = vmatpush1.msra.mxu0 %v130
    %2201 = vmatprep.subr.mxu0 %v127
    %2202 = vmatpush1.msra.mxu0 %v126
    %2203 = vmatprep.subr.mxu0 %v123
    %2204 = vmatpush1.msra.mxu0 %v122
    %2205 = vmatprep.subr.mxu0 %v119
    %2206 = vmatpush1.msra.mxu0 %v118
    %2207 = vmatprep.subr.mxu0 %v115
    %2208 = vmatpush1.msra.mxu0 %v114
    %2209 = vmatprep.subr.mxu0 %v111
    %2210 = vmatpush1.msra.mxu0 %v110
    %2211 = vmatprep.subr.mxu0 %v107
    %2212 = vmatpush1.msra.mxu0 %v106
    %2213 = vmatprep.subr.mxu0 %v103
    %2214 = vmatpush1.msra.mxu0 %v102
    %2215 = vmatprep.subr.mxu0 %v99
    %2216 = vmatpush1.msra.mxu0 %v98
    %2217 = vmatprep.subr.mxu0 %v95
    %2218 = vmatpush1.msra.mxu0 %v94
    %2219 = vmatprep.subr.mxu0 %v91
    %2220 = vmatpush1.msra.mxu0 %v90
    %2221 = vmatprep.subr.mxu0 %v87
    %2222 = vmatpush1.msra.mxu0 %v86
    %2223 = vmatprep.subr.mxu0 %v83
    %2224 = vmatpush1.msra.mxu0 %v82
    %2225 = vmatprep.subr.mxu0 %v79
    %2226 = vmatpush1.msra.mxu0 %v78
    %2227 = vmatprep.subr.mxu0 0.0
    %2228 = vmatpush2.msra.mxu0 0.0
    %2229 = vmatprep.subr.mxu0 0.0
    %2230 = vmatpush2.msra.mxu0 0.0
    %2231 = vmatprep.subr.mxu0 0.0
    %2232 = vmatpush2.msra.mxu0 0.0
    %2233 = vmatprep.subr.mxu0 0.0
    %2234 = vmatpush2.msra.mxu0 0.0
    %2235 = vmatprep.subr.mxu0 0.0
    %2236 = vmatpush2.msra.mxu0 0.0
    %2237 = vmatprep.subr.mxu0 0.0
    %2238 = vmatpush2.msra.mxu0 0.0
    %2239 = vmatprep.subr.mxu0 0.0
    %2240 = vmatpush2.msra.mxu0 0.0
    %2241 = vmatprep.subr.mxu0 0.0
    %2242 = vmatpush2.msra.mxu0 0.0
    %2243 = vmatprep.subr.mxu0 0.0
    %2244 = vmatpush2.msra.mxu0 0.0
    %2245 = vmatprep.subr.mxu0 0.0
    %2246 = vmatpush2.msra.mxu0 0.0
    %2247 = vmatprep.subr.mxu0 0.0
    %2248 = vmatpush2.msra.mxu0 0.0
    %2249 = vmatprep.subr.mxu0 0.0
    %2250 = vmatpush2.msra.mxu0 0.0
    %2251 = vmatprep.subr.mxu0 0.0
    %2252 = vmatpush2.msra.mxu0 0.0
    %2253 = vmatprep.subr.mxu0 0.0
    %2254 = vmatpush2.msra.mxu0 0.0
    %2255 = vmatprep.subr.mxu0 0.0
    %2256 = vmatpush2.msra.mxu0 0.0
    %2257 = vmatprep.subr.mxu0 0.0
    %2258 = vmatpush2.msra.mxu0 0.0
    %2259 = vmatprep.mubr.f32.mxu0 0.0
    %2260 = vmatmul.mubr.f32.gmra.mxu0 %v2111
    %v2261 = vpop.f32.mrf.mxu0
    %v2262 = vadd.f32 0.0, %v2261
    %v2263 = vpop.f32.mrf.mxu0
    %v2264 = vadd.f32 0.0, %v2263
    %2265 = vdwg.mxu0
    %v2267 = vsel %vm284, %v2123, 0
    %2269 = vmatprep.subr.mxu0 0.0
    %2270 = vmatpush1.msra.mxu0 0.0
    %2271 = vmatprep.subr.mxu0 0.0
    %2272 = vmatpush1.msra.mxu0 0.0
    %2273 = vmatprep.subr.mxu0 0.0
    %2274 = vmatpush1.msra.mxu0 0.0
    %2275 = vmatprep.subr.mxu0 0.0
    %2276 = vmatpush1.msra.mxu0 0.0
    %2277 = vmatprep.subr.mxu0 0.0
    %2278 = vmatpush1.msra.mxu0 0.0
    %2279 = vmatprep.subr.mxu0 0.0
    %2280 = vmatpush1.msra.mxu0 0.0
    %2281 = vmatprep.subr.mxu0 0.0
    %2282 = vmatpush1.msra.mxu0 0.0
    %2283 = vmatprep.subr.mxu0 0.0
    %2284 = vmatpush1.msra.mxu0 0.0
    %2285 = vmatprep.subr.mxu0 0.0
    %2286 = vmatpush1.msra.mxu0 0.0
    %2287 = vmatprep.subr.mxu0 0.0
    %2288 = vmatpush1.msra.mxu0 0.0
    %2289 = vmatprep.subr.mxu0 0.0
    %2290 = vmatpush1.msra.mxu0 0.0
    %2291 = vmatprep.subr.mxu0 0.0
    %2292 = vmatpush1.msra.mxu0 0.0
    %2293 = vmatprep.subr.mxu0 0.0
    %2294 = vmatpush1.msra.mxu0 0.0
    %2295 = vmatprep.subr.mxu0 0.0
    %2296 = vmatpush1.msra.mxu0 0.0
    %2297 = vmatprep.subr.mxu0 %v73
    %2298 = vmatpush1.msra.mxu0 %v72
    %2299 = vmatprep.subr.mxu0 %v69
    %2300 = vmatpush1.msra.mxu0 %v68
    %2301 = vmatprep.subr.mxu0 0.0
    %2302 = vmatpush2.msra.mxu0 0.0
    %2303 = vmatprep.subr.mxu0 0.0
    %2304 = vmatpush2.msra.mxu0 0.0
    %2305 = vmatprep.subr.mxu0 0.0
    %2306 = vmatpush2.msra.mxu0 0.0
    %2307 = vmatprep.subr.mxu0 0.0
    %2308 = vmatpush2.msra.mxu0 0.0
    %2309 = vmatprep.subr.mxu0 0.0
    %2310 = vmatpush2.msra.mxu0 0.0
    %2311 = vmatprep.subr.mxu0 0.0
    %2312 = vmatpush2.msra.mxu0 0.0
    %2313 = vmatprep.subr.mxu0 0.0
    %2314 = vmatpush2.msra.mxu0 0.0
    %2315 = vmatprep.subr.mxu0 0.0
    %2316 = vmatpush2.msra.mxu0 0.0
    %2317 = vmatprep.subr.mxu0 0.0
    %2318 = vmatpush2.msra.mxu0 0.0
    %2319 = vmatprep.subr.mxu0 0.0
    %2320 = vmatpush2.msra.mxu0 0.0
    %2321 = vmatprep.subr.mxu0 0.0
    %2322 = vmatpush2.msra.mxu0 0.0
    %2323 = vmatprep.subr.mxu0 0.0
    %2324 = vmatpush2.msra.mxu0 0.0
    %2325 = vmatprep.subr.mxu0 0.0
    %2326 = vmatpush2.msra.mxu0 0.0
    %2327 = vmatprep.subr.mxu0 0.0
    %2328 = vmatpush2.msra.mxu0 0.0
    %2329 = vmatprep.subr.mxu0 0.0
    %2330 = vmatpush2.msra.mxu0 0.0
    %2331 = vmatprep.subr.mxu0 0.0
    %2332 = vmatpush2.msra.mxu0 0.0
    %2333 = vmatprep.mubr.f32.mxu0 0.0
    %2334 = vmatmul.mubr.f32.gmra.mxu0 %v2267
    %v2335 = vpop.f32.mrf.mxu0
    %v2336 = vadd.f32 %v2191, %v2335
    %v2337 = vpop.f32.mrf.mxu0
    %v2338 = vadd.f32 %v2193, %v2337
    %2339 = vdwg.mxu0
    %2340 = vmatprep.subr.mxu0 0.0
    %2341 = vmatpush1.msra.mxu0 0.0
    %2342 = vmatprep.subr.mxu0 0.0
    %2343 = vmatpush1.msra.mxu0 0.0
    %2344 = vmatprep.subr.mxu0 0.0
    %2345 = vmatpush1.msra.mxu0 0.0
    %2346 = vmatprep.subr.mxu0 0.0
    %2347 = vmatpush1.msra.mxu0 0.0
    %2348 = vmatprep.subr.mxu0 0.0
    %2349 = vmatpush1.msra.mxu0 0.0
    %2350 = vmatprep.subr.mxu0 0.0
    %2351 = vmatpush1.msra.mxu0 0.0
    %2352 = vmatprep.subr.mxu0 0.0
    %2353 = vmatpush1.msra.mxu0 0.0
    %2354 = vmatprep.subr.mxu0 0.0
    %2355 = vmatpush1.msra.mxu0 0.0
    %2356 = vmatprep.subr.mxu0 0.0
    %2357 = vmatpush1.msra.mxu0 0.0
    %2358 = vmatprep.subr.mxu0 0.0
    %2359 = vmatpush1.msra.mxu0 0.0
    %2360 = vmatprep.subr.mxu0 0.0
    %2361 = vmatpush1.msra.mxu0 0.0
    %2362 = vmatprep.subr.mxu0 0.0
    %2363 = vmatpush1.msra.mxu0 0.0
    %2364 = vmatprep.subr.mxu0 0.0
    %2365 = vmatpush1.msra.mxu0 0.0
    %2366 = vmatprep.subr.mxu0 0.0
    %2367 = vmatpush1.msra.mxu0 0.0
    %2368 = vmatprep.subr.mxu0 %v75
    %2369 = vmatpush1.msra.mxu0 %v74
    %2370 = vmatprep.subr.mxu0 %v71
    %2371 = vmatpush1.msra.mxu0 %v70
    %2372 = vmatprep.subr.mxu0 0.0
    %2373 = vmatpush2.msra.mxu0 0.0
    %2374 = vmatprep.subr.mxu0 0.0
    %2375 = vmatpush2.msra.mxu0 0.0
    %2376 = vmatprep.subr.mxu0 0.0
    %2377 = vmatpush2.msra.mxu0 0.0
    %2378 = vmatprep.subr.mxu0 0.0
    %2379 = vmatpush2.msra.mxu0 0.0
    %2380 = vmatprep.subr.mxu0 0.0
    %2381 = vmatpush2.msra.mxu0 0.0
    %2382 = vmatprep.subr.mxu0 0.0
    %2383 = vmatpush2.msra.mxu0 0.0
    %2384 = vmatprep.subr.mxu0 0.0
    %2385 = vmatpush2.msra.mxu0 0.0
    %2386 = vmatprep.subr.mxu0 0.0
    %2387 = vmatpush2.msra.mxu0 0.0
    %2388 = vmatprep.subr.mxu0 0.0
    %2389 = vmatpush2.msra.mxu0 0.0
    %2390 = vmatprep.subr.mxu0 0.0
    %2391 = vmatpush2.msra.mxu0 0.0
    %2392 = vmatprep.subr.mxu0 0.0
    %2393 = vmatpush2.msra.mxu0 0.0
    %2394 = vmatprep.subr.mxu0 0.0
    %2395 = vmatpush2.msra.mxu0 0.0
    %2396 = vmatprep.subr.mxu0 0.0
    %2397 = vmatpush2.msra.mxu0 0.0
    %2398 = vmatprep.subr.mxu0 0.0
    %2399 = vmatpush2.msra.mxu0 0.0
    %2400 = vmatprep.subr.mxu0 0.0
    %2401 = vmatpush2.msra.mxu0 0.0
    %2402 = vmatprep.subr.mxu0 0.0
    %2403 = vmatpush2.msra.mxu0 0.0
    %2404 = vmatprep.mubr.f32.mxu0 0.0
    %2405 = vmatmul.mubr.f32.gmra.mxu0 %v2267
    %v2406 = vpop.f32.mrf.mxu0
    %v2407 = vadd.f32 %v2262, %v2406
    %v2408 = vpop.f32.mrf.mxu0
    %v2409 = vadd.f32 %v2264, %v2408
    %2410 = vdwg.mxu0
    %v2411 = vadd.f32 %v2336, %v434
    %v2412 = vadd.f32 %v2338, %v438
    %v2413 = vadd.f32 %v2407, %v442
    %v2414 = vadd.f32 %v2409, %v446
    %v2415 = vxor.u32 %v2411, 2147483648
    %v2416 = vmul.f32 %v2415, 1.442695
    %v2417 = vpow.pop %v2416
    %v2418 = vadd.f32 %v2417, 1.0
    %v2419 = vrcp.pop %v2418
    %v2420 = vmul.f32 1.0, %v2419
    %v2421 = vxor.u32 %v2412, 2147483648
    %v2422 = vmul.f32 %v2421, 1.442695
    %v2423 = vpow.pop %v2422
    %v2424 = vadd.f32 %v2423, 1.0
    %v2425 = vrcp.pop %v2424
    %v2426 = vmul.f32 1.0, %v2425
    %v2427 = vtanh.pop %v2413
    %v2428 = vxor.u32 %v2414, 2147483648
    %v2429 = vmul.f32 %v2428, 1.442695
    %v2430 = vpow.pop %v2429
    %v2431 = vadd.f32 %v2430, 1.0
    %v2432 = vrcp.pop %v2431
    %v2433 = vmul.f32 1.0, %v2432
    %v2434 = vmul.f32 %v2426, %v2109
    %v2435 = vmul.f32 %v2420, %v2427
    %v2436 = vadd.f32 %v2434, %v2435
    %v2437 = vtanh.pop %v2436
    %v2438 = vmul.f32 %v2433, %v2437
    %s2439 = scalar_lea.vmem %s1, 48
    %v2440 = vld [vmem:[%s2439] sm:$0xff]
    %2442 = vset.pattern.permute.xlu0 0
    %2443 = vperm.xlu0 %2442, %v2440
    %v2444 = vpop.permute.xlu0 %2443
    %v2446 = vmul.f32 %v2438, %v2444
    %s2447 = scalar_lea.vmem [#allocation2], 48
    %2448 = vst [vmem:[%s2447] sm:$0xff] %v2446
    %s2449 = scalar_lea.vmem %s0, 56
    %v2450 = vld [vmem:[%s2449] sm:$0xff]
    %2451 = vmatprep.subr.mxu0 %v137
    %2452 = vmatpush1.msra.mxu0 %v136
    %2453 = vmatprep.subr.mxu0 %v133
    %2454 = vmatpush1.msra.mxu0 %v132
    %2455 = vmatprep.subr.mxu0 %v129
    %2456 = vmatpush1.msra.mxu0 %v128
    %2457 = vmatprep.subr.mxu0 %v125
    %2458 = vmatpush1.msra.mxu0 %v124
    %2459 = vmatprep.subr.mxu0 %v121
    %2460 = vmatpush1.msra.mxu0 %v120
    %2461 = vmatprep.subr.mxu0 %v117
    %2462 = vmatpush1.msra.mxu0 %v116
    %2463 = vmatprep.subr.mxu0 %v113
    %2464 = vmatpush1.msra.mxu0 %v112
    %2465 = vmatprep.subr.mxu0 %v109
    %2466 = vmatpush1.msra.mxu0 %v108
    %2467 = vmatprep.subr.mxu0 %v105
    %2468 = vmatpush1.msra.mxu0 %v104
    %2469 = vmatprep.subr.mxu0 %v101
    %2470 = vmatpush1.msra.mxu0 %v100
    %2471 = vmatprep.subr.mxu0 %v97
    %2472 = vmatpush1.msra.mxu0 %v96
    %2473 = vmatprep.subr.mxu0 %v93
    %2474 = vmatpush1.msra.mxu0 %v92
    %2475 = vmatprep.subr.mxu0 %v89
    %2476 = vmatpush1.msra.mxu0 %v88
    %2477 = vmatprep.subr.mxu0 %v85
    %2478 = vmatpush1.msra.mxu0 %v84
    %2479 = vmatprep.subr.mxu0 %v81
    %2480 = vmatpush1.msra.mxu0 %v80
    %2481 = vmatprep.subr.mxu0 %v77
    %2482 = vmatpush1.msra.mxu0 %v76
    %2483 = vmatprep.subr.mxu0 0.0
    %2484 = vmatpush2.msra.mxu0 0.0
    %2485 = vmatprep.subr.mxu0 0.0
    %2486 = vmatpush2.msra.mxu0 0.0
    %2487 = vmatprep.subr.mxu0 0.0
    %2488 = vmatpush2.msra.mxu0 0.0
    %2489 = vmatprep.subr.mxu0 0.0
    %2490 = vmatpush2.msra.mxu0 0.0
    %2491 = vmatprep.subr.mxu0 0.0
    %2492 = vmatpush2.msra.mxu0 0.0
    %2493 = vmatprep.subr.mxu0 0.0
    %2494 = vmatpush2.msra.mxu0 0.0
    %2495 = vmatprep.subr.mxu0 0.0
    %2496 = vmatpush2.msra.mxu0 0.0
    %2497 = vmatprep.subr.mxu0 0.0
    %2498 = vmatpush2.msra.mxu0 0.0
    %2499 = vmatprep.subr.mxu0 0.0
    %2500 = vmatpush2.msra.mxu0 0.0
    %2501 = vmatprep.subr.mxu0 0.0
    %2502 = vmatpush2.msra.mxu0 0.0
    %2503 = vmatprep.subr.mxu0 0.0
    %2504 = vmatpush2.msra.mxu0 0.0
    %2505 = vmatprep.subr.mxu0 0.0
    %2506 = vmatpush2.msra.mxu0 0.0
    %2507 = vmatprep.subr.mxu0 0.0
    %2508 = vmatpush2.msra.mxu0 0.0
    %2509 = vmatprep.subr.mxu0 0.0
    %2510 = vmatpush2.msra.mxu0 0.0
    %2511 = vmatprep.subr.mxu0 0.0
    %2512 = vmatpush2.msra.mxu0 0.0
    %2513 = vmatprep.subr.mxu0 0.0
    %2514 = vmatpush2.msra.mxu0 0.0
    %2515 = vmatprep.mubr.f32.mxu0 0.0
    %2516 = vmatmul.mubr.f32.gmra.mxu0 %v2438
    %v2517 = vpop.f32.mrf.mxu0
    %v2518 = vadd.f32 0.0, %v2517
    %v2519 = vpop.f32.mrf.mxu0
    %v2520 = vadd.f32 0.0, %v2519
    %2521 = vdwg.mxu0
    %2522 = vmatprep.subr.mxu0 %v139
    %2523 = vmatpush1.msra.mxu0 %v138
    %2524 = vmatprep.subr.mxu0 %v135
    %2525 = vmatpush1.msra.mxu0 %v134
    %2526 = vmatprep.subr.mxu0 %v131
    %2527 = vmatpush1.msra.mxu0 %v130
    %2528 = vmatprep.subr.mxu0 %v127
    %2529 = vmatpush1.msra.mxu0 %v126
    %2530 = vmatprep.subr.mxu0 %v123
    %2531 = vmatpush1.msra.mxu0 %v122
    %2532 = vmatprep.subr.mxu0 %v119
    %2533 = vmatpush1.msra.mxu0 %v118
    %2534 = vmatprep.subr.mxu0 %v115
    %2535 = vmatpush1.msra.mxu0 %v114
    %2536 = vmatprep.subr.mxu0 %v111
    %2537 = vmatpush1.msra.mxu0 %v110
    %2538 = vmatprep.subr.mxu0 %v107
    %2539 = vmatpush1.msra.mxu0 %v106
    %2540 = vmatprep.subr.mxu0 %v103
    %2541 = vmatpush1.msra.mxu0 %v102
    %2542 = vmatprep.subr.mxu0 %v99
    %2543 = vmatpush1.msra.mxu0 %v98
    %2544 = vmatprep.subr.mxu0 %v95
    %2545 = vmatpush1.msra.mxu0 %v94
    %2546 = vmatprep.subr.mxu0 %v91
    %2547 = vmatpush1.msra.mxu0 %v90
    %2548 = vmatprep.subr.mxu0 %v87
    %2549 = vmatpush1.msra.mxu0 %v86
    %2550 = vmatprep.subr.mxu0 %v83
    %2551 = vmatpush1.msra.mxu0 %v82
    %2552 = vmatprep.subr.mxu0 %v79
    %2553 = vmatpush1.msra.mxu0 %v78
    %2554 = vmatprep.subr.mxu0 0.0
    %2555 = vmatpush2.msra.mxu0 0.0
    %2556 = vmatprep.subr.mxu0 0.0
    %2557 = vmatpush2.msra.mxu0 0.0
    %2558 = vmatprep.subr.mxu0 0.0
    %2559 = vmatpush2.msra.mxu0 0.0
    %2560 = vmatprep.subr.mxu0 0.0
    %2561 = vmatpush2.msra.mxu0 0.0
    %2562 = vmatprep.subr.mxu0 0.0
    %2563 = vmatpush2.msra.mxu0 0.0
    %2564 = vmatprep.subr.mxu0 0.0
    %2565 = vmatpush2.msra.mxu0 0.0
    %2566 = vmatprep.subr.mxu0 0.0
    %2567 = vmatpush2.msra.mxu0 0.0
    %2568 = vmatprep.subr.mxu0 0.0
    %2569 = vmatpush2.msra.mxu0 0.0
    %2570 = vmatprep.subr.mxu0 0.0
    %2571 = vmatpush2.msra.mxu0 0.0
    %2572 = vmatprep.subr.mxu0 0.0
    %2573 = vmatpush2.msra.mxu0 0.0
    %2574 = vmatprep.subr.mxu0 0.0
    %2575 = vmatpush2.msra.mxu0 0.0
    %2576 = vmatprep.subr.mxu0 0.0
    %2577 = vmatpush2.msra.mxu0 0.0
    %2578 = vmatprep.subr.mxu0 0.0
    %2579 = vmatpush2.msra.mxu0 0.0
    %2580 = vmatprep.subr.mxu0 0.0
    %2581 = vmatpush2.msra.mxu0 0.0
    %2582 = vmatprep.subr.mxu0 0.0
    %2583 = vmatpush2.msra.mxu0 0.0
    %2584 = vmatprep.subr.mxu0 0.0
    %2585 = vmatpush2.msra.mxu0 0.0
    %2586 = vmatprep.mubr.f32.mxu0 0.0
    %2587 = vmatmul.mubr.f32.gmra.mxu0 %v2438
    %v2588 = vpop.f32.mrf.mxu0
    %v2589 = vadd.f32 0.0, %v2588
    %v2590 = vpop.f32.mrf.mxu0
    %v2591 = vadd.f32 0.0, %v2590
    %2592 = vdwg.mxu0
    %v2594 = vsel %vm284, %v2450, 0
    %2596 = vmatprep.subr.mxu0 0.0
    %2597 = vmatpush1.msra.mxu0 0.0
    %2598 = vmatprep.subr.mxu0 0.0
    %2599 = vmatpush1.msra.mxu0 0.0
    %2600 = vmatprep.subr.mxu0 0.0
    %2601 = vmatpush1.msra.mxu0 0.0
    %2602 = vmatprep.subr.mxu0 0.0
    %2603 = vmatpush1.msra.mxu0 0.0
    %2604 = vmatprep.subr.mxu0 0.0
    %2605 = vmatpush1.msra.mxu0 0.0
    %2606 = vmatprep.subr.mxu0 0.0
    %2607 = vmatpush1.msra.mxu0 0.0
    %2608 = vmatprep.subr.mxu0 0.0
    %2609 = vmatpush1.msra.mxu0 0.0
    %2610 = vmatprep.subr.mxu0 0.0
    %2611 = vmatpush1.msra.mxu0 0.0
    %2612 = vmatprep.subr.mxu0 0.0
    %2613 = vmatpush1.msra.mxu0 0.0
    %2614 = vmatprep.subr.mxu0 0.0
    %2615 = vmatpush1.msra.mxu0 0.0
    %2616 = vmatprep.subr.mxu0 0.0
    %2617 = vmatpush1.msra.mxu0 0.0
    %2618 = vmatprep.subr.mxu0 0.0
    %2619 = vmatpush1.msra.mxu0 0.0
    %2620 = vmatprep.subr.mxu0 0.0
    %2621 = vmatpush1.msra.mxu0 0.0
    %2622 = vmatprep.subr.mxu0 0.0
    %2623 = vmatpush1.msra.mxu0 0.0
    %2624 = vmatprep.subr.mxu0 %v73
    %2625 = vmatpush1.msra.mxu0 %v72
    %2626 = vmatprep.subr.mxu0 %v69
    %2627 = vmatpush1.msra.mxu0 %v68
    %2628 = vmatprep.subr.mxu0 0.0
    %2629 = vmatpush2.msra.mxu0 0.0
    %2630 = vmatprep.subr.mxu0 0.0
    %2631 = vmatpush2.msra.mxu0 0.0
    %2632 = vmatprep.subr.mxu0 0.0
    %2633 = vmatpush2.msra.mxu0 0.0
    %2634 = vmatprep.subr.mxu0 0.0
    %2635 = vmatpush2.msra.mxu0 0.0
    %2636 = vmatprep.subr.mxu0 0.0
    %2637 = vmatpush2.msra.mxu0 0.0
    %2638 = vmatprep.subr.mxu0 0.0
    %2639 = vmatpush2.msra.mxu0 0.0
    %2640 = vmatprep.subr.mxu0 0.0
    %2641 = vmatpush2.msra.mxu0 0.0
    %2642 = vmatprep.subr.mxu0 0.0
    %2643 = vmatpush2.msra.mxu0 0.0
    %2644 = vmatprep.subr.mxu0 0.0
    %2645 = vmatpush2.msra.mxu0 0.0
    %2646 = vmatprep.subr.mxu0 0.0
    %2647 = vmatpush2.msra.mxu0 0.0
    %2648 = vmatprep.subr.mxu0 0.0
    %2649 = vmatpush2.msra.mxu0 0.0
    %2650 = vmatprep.subr.mxu0 0.0
    %2651 = vmatpush2.msra.mxu0 0.0
    %2652 = vmatprep.subr.mxu0 0.0
    %2653 = vmatpush2.msra.mxu0 0.0
    %2654 = vmatprep.subr.mxu0 0.0
    %2655 = vmatpush2.msra.mxu0 0.0
    %2656 = vmatprep.subr.mxu0 0.0
    %2657 = vmatpush2.msra.mxu0 0.0
    %2658 = vmatprep.subr.mxu0 0.0
    %2659 = vmatpush2.msra.mxu0 0.0
    %2660 = vmatprep.mubr.f32.mxu0 0.0
    %2661 = vmatmul.mubr.f32.gmra.mxu0 %v2594
    %v2662 = vpop.f32.mrf.mxu0
    %v2663 = vadd.f32 %v2518, %v2662
    %v2664 = vpop.f32.mrf.mxu0
    %v2665 = vadd.f32 %v2520, %v2664
    %2666 = vdwg.mxu0
    %2667 = vmatprep.subr.mxu0 0.0
    %2668 = vmatpush1.msra.mxu0 0.0
    %2669 = vmatprep.subr.mxu0 0.0
    %2670 = vmatpush1.msra.mxu0 0.0
    %2671 = vmatprep.subr.mxu0 0.0
    %2672 = vmatpush1.msra.mxu0 0.0
    %2673 = vmatprep.subr.mxu0 0.0
    %2674 = vmatpush1.msra.mxu0 0.0
    %2675 = vmatprep.subr.mxu0 0.0
    %2676 = vmatpush1.msra.mxu0 0.0
    %2677 = vmatprep.subr.mxu0 0.0
    %2678 = vmatpush1.msra.mxu0 0.0
    %2679 = vmatprep.subr.mxu0 0.0
    %2680 = vmatpush1.msra.mxu0 0.0
    %2681 = vmatprep.subr.mxu0 0.0
    %2682 = vmatpush1.msra.mxu0 0.0
    %2683 = vmatprep.subr.mxu0 0.0
    %2684 = vmatpush1.msra.mxu0 0.0
    %2685 = vmatprep.subr.mxu0 0.0
    %2686 = vmatpush1.msra.mxu0 0.0
    %2687 = vmatprep.subr.mxu0 0.0
    %2688 = vmatpush1.msra.mxu0 0.0
    %2689 = vmatprep.subr.mxu0 0.0
    %2690 = vmatpush1.msra.mxu0 0.0
    %2691 = vmatprep.subr.mxu0 0.0
    %2692 = vmatpush1.msra.mxu0 0.0
    %2693 = vmatprep.subr.mxu0 0.0
    %2694 = vmatpush1.msra.mxu0 0.0
    %2695 = vmatprep.subr.mxu0 %v75
    %2696 = vmatpush1.msra.mxu0 %v74
    %2697 = vmatprep.subr.mxu0 %v71
    %2698 = vmatpush1.msra.mxu0 %v70
    %2699 = vmatprep.subr.mxu0 0.0
    %2700 = vmatpush2.msra.mxu0 0.0
    %2701 = vmatprep.subr.mxu0 0.0
    %2702 = vmatpush2.msra.mxu0 0.0
    %2703 = vmatprep.subr.mxu0 0.0
    %2704 = vmatpush2.msra.mxu0 0.0
    %2705 = vmatprep.subr.mxu0 0.0
    %2706 = vmatpush2.msra.mxu0 0.0
    %2707 = vmatprep.subr.mxu0 0.0
    %2708 = vmatpush2.msra.mxu0 0.0
    %2709 = vmatprep.subr.mxu0 0.0
    %2710 = vmatpush2.msra.mxu0 0.0
    %2711 = vmatprep.subr.mxu0 0.0
    %2712 = vmatpush2.msra.mxu0 0.0
    %2713 = vmatprep.subr.mxu0 0.0
    %2714 = vmatpush2.msra.mxu0 0.0
    %2715 = vmatprep.subr.mxu0 0.0
    %2716 = vmatpush2.msra.mxu0 0.0
    %2717 = vmatprep.subr.mxu0 0.0
    %2718 = vmatpush2.msra.mxu0 0.0
    %2719 = vmatprep.subr.mxu0 0.0
    %2720 = vmatpush2.msra.mxu0 0.0
    %2721 = vmatprep.subr.mxu0 0.0
    %2722 = vmatpush2.msra.mxu0 0.0
    %2723 = vmatprep.subr.mxu0 0.0
    %2724 = vmatpush2.msra.mxu0 0.0
    %2725 = vmatprep.subr.mxu0 0.0
    %2726 = vmatpush2.msra.mxu0 0.0
    %2727 = vmatprep.subr.mxu0 0.0
    %2728 = vmatpush2.msra.mxu0 0.0
    %2729 = vmatprep.subr.mxu0 0.0
    %2730 = vmatpush2.msra.mxu0 0.0
    %2731 = vmatprep.mubr.f32.mxu0 0.0
    %2732 = vmatmul.mubr.f32.gmra.mxu0 %v2594
    %v2733 = vpop.f32.mrf.mxu0
    %v2734 = vadd.f32 %v2589, %v2733
    %v2735 = vpop.f32.mrf.mxu0
    %v2736 = vadd.f32 %v2591, %v2735
    %2737 = vdwg.mxu0
    %v2738 = vadd.f32 %v2663, %v434
    %v2739 = vadd.f32 %v2665, %v438
    %v2740 = vadd.f32 %v2734, %v442
    %v2741 = vadd.f32 %v2736, %v446
    %v2742 = vxor.u32 %v2738, 2147483648
    %v2743 = vmul.f32 %v2742, 1.442695
    %v2744 = vpow.pop %v2743
    %v2745 = vadd.f32 %v2744, 1.0
    %v2746 = vrcp.pop %v2745
    %v2747 = vmul.f32 1.0, %v2746
    %v2748 = vxor.u32 %v2739, 2147483648
    %v2749 = vmul.f32 %v2748, 1.442695
    %v2750 = vpow.pop %v2749
    %v2751 = vadd.f32 %v2750, 1.0
    %v2752 = vrcp.pop %v2751
    %v2753 = vmul.f32 1.0, %v2752
    %v2754 = vtanh.pop %v2740
    %v2755 = vxor.u32 %v2741, 2147483648
    %v2756 = vmul.f32 %v2755, 1.442695
    %v2757 = vpow.pop %v2756
    %v2758 = vadd.f32 %v2757, 1.0
    %v2759 = vrcp.pop %v2758
    %v2760 = vmul.f32 1.0, %v2759
    %v2761 = vmul.f32 %v2753, %v2436
    %v2762 = vmul.f32 %v2747, %v2754
    %v2763 = vadd.f32 %v2761, %v2762
    %v2764 = vtanh.pop %v2763
    %v2765 = vmul.f32 %v2760, %v2764
    %s2766 = scalar_lea.vmem %s1, 56
    %v2767 = vld [vmem:[%s2766] sm:$0xff]
    %2769 = vset.pattern.permute.xlu0 0
    %2770 = vperm.xlu0 %2769, %v2767
    %v2771 = vpop.permute.xlu0 %2770
    %v2773 = vmul.f32 %v2765, %v2771
    %s2774 = scalar_lea.vmem [#allocation2], 56
    %2775 = vst [vmem:[%s2774] sm:$0xff] %v2773
    %v2776 = vld [vmem:[#allocation2] sm:$0xff]
    %v2777 = vld [vmem:[#allocation2 + $0x8] sm:$0xff]
    %v2778 = vld [vmem:[#allocation2 + $0x10] sm:$0xff]
    %v2779 = vld [vmem:[#allocation2 + $0x18] sm:$0xff]
    %v2780 = vld [vmem:[#allocation2 + $0x20] sm:$0xff]
    %v2781 = vld [vmem:[#allocation2 + $0x28] sm:$0xff]
    %v2782 = vld [vmem:[#allocation2 + $0x30] sm:$0xff]
    %v2783 = vld [vmem:[#allocation2 + $0x38] sm:$0xff]
    %v2784 = vld [vmem:[#allocation8] sm:$0xff]
    %v2785 = vld [vmem:[#allocation8 + $0x8] sm:$0xff]
    %v2786 = vld [vmem:[#allocation8 + $0x10] sm:$0xff]
    %v2787 = vld [vmem:[#allocation8 + $0x18] sm:$0xff]
    %v2788 = vld [vmem:[#allocation8 + $0x20] sm:$0xff]
    %v2789 = vld [vmem:[#allocation8 + $0x28] sm:$0xff]
    %v2790 = vld [vmem:[#allocation8 + $0x30] sm:$0xff]
    %v2791 = vld [vmem:[#allocation8 + $0x38] sm:$0xff]
    %v2792 = vld [vmem:[#allocation8 + $0x40] sm:$0xff]
    %v2793 = vld [vmem:[#allocation8 + $0x48] sm:$0xff]
    %v2794 = vld [vmem:[#allocation8 + $0x50] sm:$0xff]
    %v2795 = vld [vmem:[#allocation8 + $0x58] sm:$0xff]
    %v2796 = vld [vmem:[#allocation8 + $0x60] sm:$0xff]
    %v2797 = vld [vmem:[#allocation8 + $0x68] sm:$0xff]
    %v2798 = vld [vmem:[#allocation8 + $0x70] sm:$0xff]
    %v2799 = vld [vmem:[#allocation8 + $0x78] sm:$0xff]
    %v2800 = vld [vmem:[%s6] sm:$0x1]
    %v2802 = vlaneseq
    %v2803 = vshrl.u32 %v2802, 7
    %v2804 = vsub.s32 0, %v2803
    %v2805 = vrot.slane %v2800, %v2804
    %2807 = vmatprep.subr.mxu0 0.0
    %2808 = vmatpush1.msra.mxu0 %v2799
    %2809 = vmatprep.subr.mxu0 0.0
    %2810 = vmatpush1.msra.mxu0 %v2798
    %2811 = vmatprep.subr.mxu0 0.0
    %2812 = vmatpush1.msra.mxu0 %v2797
    %2813 = vmatprep.subr.mxu0 0.0
    %2814 = vmatpush1.msra.mxu0 %v2796
    %2815 = vmatprep.subr.mxu0 0.0
    %2816 = vmatpush1.msra.mxu0 %v2795
    %2817 = vmatprep.subr.mxu0 0.0
    %2818 = vmatpush1.msra.mxu0 %v2794
    %2819 = vmatprep.subr.mxu0 0.0
    %2820 = vmatpush1.msra.mxu0 %v2793
    %2821 = vmatprep.subr.mxu0 0.0
    %2822 = vmatpush1.msra.mxu0 %v2792
    %2823 = vmatprep.subr.mxu0 0.0
    %2824 = vmatpush1.msra.mxu0 %v2791
    %2825 = vmatprep.subr.mxu0 0.0
    %2826 = vmatpush1.msra.mxu0 %v2790
    %2827 = vmatprep.subr.mxu0 0.0
    %2828 = vmatpush1.msra.mxu0 %v2789
    %2829 = vmatprep.subr.mxu0 0.0
    %2830 = vmatpush1.msra.mxu0 %v2788
    %2831 = vmatprep.subr.mxu0 0.0
    %2832 = vmatpush1.msra.mxu0 %v2787
    %2833 = vmatprep.subr.mxu0 0.0
    %2834 = vmatpush1.msra.mxu0 %v2786
    %2835 = vmatprep.subr.mxu0 0.0
    %2836 = vmatpush1.msra.mxu0 %v2785
    %2837 = vmatprep.subr.mxu0 0.0
    %2838 = vmatpush1.msra.mxu0 %v2784
    %2839 = vmatprep.subr.mxu0 0.0
    %2840 = vmatpush2.msra.mxu0 0.0
    %2841 = vmatprep.subr.mxu0 0.0
    %2842 = vmatpush2.msra.mxu0 0.0
    %2843 = vmatprep.subr.mxu0 0.0
    %2844 = vmatpush2.msra.mxu0 0.0
    %2845 = vmatprep.subr.mxu0 0.0
    %2846 = vmatpush2.msra.mxu0 0.0
    %2847 = vmatprep.subr.mxu0 0.0
    %2848 = vmatpush2.msra.mxu0 0.0
    %2849 = vmatprep.subr.mxu0 0.0
    %2850 = vmatpush2.msra.mxu0 0.0
    %2851 = vmatprep.subr.mxu0 0.0
    %2852 = vmatpush2.msra.mxu0 0.0
    %2853 = vmatprep.subr.mxu0 0.0
    %2854 = vmatpush2.msra.mxu0 0.0
    %2855 = vmatprep.subr.mxu0 0.0
    %2856 = vmatpush2.msra.mxu0 0.0
    %2857 = vmatprep.subr.mxu0 0.0
    %2858 = vmatpush2.msra.mxu0 0.0
    %2859 = vmatprep.subr.mxu0 0.0
    %2860 = vmatpush2.msra.mxu0 0.0
    %2861 = vmatprep.subr.mxu0 0.0
    %2862 = vmatpush2.msra.mxu0 0.0
    %2863 = vmatprep.subr.mxu0 0.0
    %2864 = vmatpush2.msra.mxu0 0.0
    %2865 = vmatprep.subr.mxu0 0.0
    %2866 = vmatpush2.msra.mxu0 0.0
    %2867 = vmatprep.subr.mxu0 0.0
    %2868 = vmatpush2.msra.mxu0 0.0
    %2869 = vmatprep.subr.mxu0 0.0
    %2870 = vmatpush2.msra.mxu0 0.0
    %2871 = vmatprep.mubr.f32.mxu0 0.0
    %2872 = vmatmul.mubr.f32.gmra.mxu0 %v2776
    %v2873 = vpop.f32.mrf.mxu0
    %v2874 = vadd.f32 %v2805, %v2873
    %v2875 = vpop.f32.mrf.mxu0
    %2876 = vmatprep.mubr.f32.mxu0 0.0
    %2877 = vmatmul.mubr.f32.gmra.mxu0 %v2777
    %v2878 = vpop.f32.mrf.mxu0
    %v2879 = vadd.f32 %v2805, %v2878
    %v2880 = vpop.f32.mrf.mxu0
    %2881 = vmatprep.mubr.f32.mxu0 0.0
    %2882 = vmatmul.mubr.f32.gmra.mxu0 %v2778
    %v2883 = vpop.f32.mrf.mxu0
    %v2884 = vadd.f32 %v2805, %v2883
    %v2885 = vpop.f32.mrf.mxu0
    %2886 = vmatprep.mubr.f32.mxu0 0.0
    %2887 = vmatmul.mubr.f32.gmra.mxu0 %v2779
    %v2888 = vpop.f32.mrf.mxu0
    %v2889 = vadd.f32 %v2805, %v2888
    %v2890 = vpop.f32.mrf.mxu0
    %2891 = vmatprep.mubr.f32.mxu0 0.0
    %2892 = vmatmul.mubr.f32.gmra.mxu0 %v2780
    %v2893 = vpop.f32.mrf.mxu0
    %v2894 = vadd.f32 %v2805, %v2893
    %v2895 = vpop.f32.mrf.mxu0
    %2896 = vmatprep.mubr.f32.mxu0 0.0
    %2897 = vmatmul.mubr.f32.gmra.mxu0 %v2781
    %v2898 = vpop.f32.mrf.mxu0
    %v2899 = vadd.f32 %v2805, %v2898
    %v2900 = vpop.f32.mrf.mxu0
    %2901 = vmatprep.mubr.f32.mxu0 0.0
    %2902 = vmatmul.mubr.f32.gmra.mxu0 %v2782
    %v2903 = vpop.f32.mrf.mxu0
    %v2904 = vadd.f32 %v2805, %v2903
    %v2905 = vpop.f32.mrf.mxu0
    %2906 = vmatprep.mubr.f32.mxu0 0.0
    %2907 = vmatmul.mubr.f32.gmra.mxu0 %v2783
    %v2908 = vpop.f32.mrf.mxu0
    %v2909 = vadd.f32 %v2805, %v2908
    %v2910 = vpop.f32.mrf.mxu0
    %2911 = vdwg.mxu0
    %2912 = vmax.xlane.f32.xlu0 %v2874
    %v2913 = vpop.xlane.xlu0 %2912
    %2914 = vmax.xlane.f32.xlu0 %v2879
    %v2915 = vpop.xlane.xlu0 %2914
    %2916 = vmax.xlane.f32.xlu0 %v2884
    %v2917 = vpop.xlane.xlu0 %2916
    %2918 = vmax.xlane.f32.xlu0 %v2889
    %v2919 = vpop.xlane.xlu0 %2918
    %2920 = vmax.xlane.f32.xlu0 %v2894
    %v2921 = vpop.xlane.xlu0 %2920
    %2922 = vmax.xlane.f32.xlu0 %v2899
    %v2923 = vpop.xlane.xlu0 %2922
    %2924 = vmax.xlane.f32.xlu0 %v2904
    %v2925 = vpop.xlane.xlu0 %2924
    %2926 = vmax.xlane.f32.xlu0 %v2909
    %v2927 = vpop.xlane.xlu0 %2926
    %v2928 = vsub.f32 %v2874, %v2913
    %v2929 = vsub.f32 %v2879, %v2915
    %v2930 = vsub.f32 %v2884, %v2917
    %v2931 = vsub.f32 %v2889, %v2919
    %v2932 = vsub.f32 %v2894, %v2921
    %v2933 = vsub.f32 %v2899, %v2923
    %v2934 = vsub.f32 %v2904, %v2925
    %v2935 = vsub.f32 %v2909, %v2927
    %v2936 = vmul.f32 %v2928, 1.442695
    %v2937 = vpow.pop %v2936
    %v2938 = vmul.f32 %v2929, 1.442695
    %v2939 = vpow.pop %v2938
    %v2940 = vmul.f32 %v2930, 1.442695
    %v2941 = vpow.pop %v2940
    %v2942 = vmul.f32 %v2931, 1.442695
    %v2943 = vpow.pop %v2942
    %v2944 = vmul.f32 %v2932, 1.442695
    %v2945 = vpow.pop %v2944
    %v2946 = vmul.f32 %v2933, 1.442695
    %v2947 = vpow.pop %v2946
    %v2948 = vmul.f32 %v2934, 1.442695
    %v2949 = vpow.pop %v2948
    %v2950 = vmul.f32 %v2935, 1.442695
    %v2951 = vpow.pop %v2950
    %2952 = vadd.xlane.f32.xlu0 %v2937
    %v2953 = vpop.xlane.xlu0 %2952
    %2954 = vadd.xlane.f32.xlu0 %v2939
    %v2955 = vpop.xlane.xlu0 %2954
    %2956 = vadd.xlane.f32.xlu0 %v2941
    %v2957 = vpop.xlane.xlu0 %2956
    %2958 = vadd.xlane.f32.xlu0 %v2943
    %v2959 = vpop.xlane.xlu0 %2958
    %2960 = vadd.xlane.f32.xlu0 %v2945
    %v2961 = vpop.xlane.xlu0 %2960
    %2962 = vadd.xlane.f32.xlu0 %v2947
    %v2963 = vpop.xlane.xlu0 %2962
    %2964 = vadd.xlane.f32.xlu0 %v2949
    %v2965 = vpop.xlane.xlu0 %2964
    %2966 = vadd.xlane.f32.xlu0 %v2951
    %v2967 = vpop.xlane.xlu0 %2966
    %v2968 = vlog2.pop %v2953
    %v2969 = vmul.f32 %v2968, 0.6931472
    %v2970 = vlog2.pop %v2955
    %v2971 = vmul.f32 %v2970, 0.6931472
    %v2972 = vlog2.pop %v2957
    %v2973 = vmul.f32 %v2972, 0.6931472
    %v2974 = vlog2.pop %v2959
    %v2975 = vmul.f32 %v2974, 0.6931472
    %v2976 = vlog2.pop %v2961
    %v2977 = vmul.f32 %v2976, 0.6931472
    %v2978 = vlog2.pop %v2963
    %v2979 = vmul.f32 %v2978, 0.6931472
    %v2980 = vlog2.pop %v2965
    %v2981 = vmul.f32 %v2980, 0.6931472
    %v2982 = vlog2.pop %v2967
    %v2983 = vmul.f32 %v2982, 0.6931472
    %v2984 = vadd.f32 %v2913, %v2969
    %v2985 = vadd.f32 %v2915, %v2971
    %v2986 = vadd.f32 %v2917, %v2973
    %v2987 = vadd.f32 %v2919, %v2975
    %v2988 = vadd.f32 %v2921, %v2977
    %v2989 = vadd.f32 %v2923, %v2979
    %v2990 = vadd.f32 %v2925, %v2981
    %v2991 = vadd.f32 %v2927, %v2983
    %v2992 = vsub.f32 %v2874, %v2984
    %v2993 = vsub.f32 %v2879, %v2985
    %v2994 = vsub.f32 %v2884, %v2986
    %v2995 = vsub.f32 %v2889, %v2987
    %v2996 = vsub.f32 %v2894, %v2988
    %v2997 = vsub.f32 %v2899, %v2989
    %v2998 = vsub.f32 %v2904, %v2990
    %v2999 = vsub.f32 %v2909, %v2991
    %3000 = vst [vmem:[#allocation9] sm:$0xff] %v2992
    %3001 = vst [vmem:[#allocation9 + $0x8] sm:$0xff] %v2993
    %3002 = vst [vmem:[#allocation9 + $0x10] sm:$0xff] %v2994
    %3003 = vst [vmem:[#allocation9 + $0x18] sm:$0xff] %v2995
    %3004 = vst [vmem:[#allocation9 + $0x20] sm:$0xff] %v2996
    %3005 = vst [vmem:[#allocation9 + $0x28] sm:$0xff] %v2997
    %3006 = vst [vmem:[#allocation9 + $0x30] sm:$0xff] %v2998
    %3007 = vst [vmem:[#allocation9 + $0x38] sm:$0xff] %v2999
    // Predicated region
    $region42: #{tpu_custom_call.1} parent=1 // pred_check
      _
    $region43: #{tpu_custom_call.1} parent=1 // pred_check_branch
      %3009 = sbr.rel (0) target = $region45
    $region44: #{tpu_custom_call.1} parent=1 // pred_region
      %s3011 = ssub.s32 1024, 1024
      %3012 = vsyncadd [#allocation5], %s3011
      %s3013 = sshll.u32 [#allocation9], 4
      %s3014 = int_to_ptr.vmem [resolvable:$true] %s3013
      %3019 = dma.vmem_to_hbm [thread:$0]  %s3014, 1024, %s7, [#allocation5], 128, 128, 8
    $region45: #{tpu_custom_call.1} parent=1 // pred_fallthru
      _
    // Predicated region
    $region46: #{tpu_custom_call.1} parent=1 // pred_check
      _
    $region47: #{tpu_custom_call.1} parent=1 // pred_check_branch
      %3021 = sbr.rel (0) target = $region49
    $region48: #{tpu_custom_call.1} parent=1 // pred_region
      %3022 = dma.done [#allocation5], 1024
    $region49: #{tpu_custom_call.1} parent=1 // pred_fallthru
      _
    %3023 = vsyncpa [#allocation4], 1
    %3024 = vsyncpa [#allocation7], 1
    %3025 = vsyncpa [#allocation5], 1

</llo_original>
